<compile_context>
chip_gen: v5e
topology: v5e:2x2
jax: 0.10.0
libtpu: 0.0.40
codegen_flags: <defaults>
</compile_context>

<pallas_src>
import jax
import jax.numpy as jnp
from jax.experimental import pallas as pl
from jax.experimental.pallas import tpu as pltpu

NEG_SLOPE = 0.01  # torch.nn.LeakyReLU default
LANE = 128


def _leaky(v):
    return jnp.where(v >= 0, v, NEG_SLOPE * v)


def _round_up(v, m):
    return ((v + m - 1) // m) * m


# ------------------------- fused localizer kernel ---------------------------

def _pool_bias_leaky(acc, Nt, OH, OW, OCp, pool, bias):
    """MaxPool2d(pool, floor mode) + bias (hoisted out of the max) + LeakyReLU, f32."""
    PH, PW = OH // pool, OW // pool
    if OH == PH * pool and OW == PW * pool:
        rh = acc.reshape(Nt * PH, pool, OW, OCp)
    else:  # floor-mode pooling drops trailing rows/cols
        conv = acc.reshape(Nt, OH, OW, OCp)[:, :PH * pool, :PW * pool, :]
        rh = conv.reshape(Nt * PH, pool, PW * pool, OCp)
    ph = rh[:, 0]
    for t in range(1, pool):
        ph = jnp.maximum(ph, rh[:, t])                  # (Nt*PH, PW*pool, OCp)
    rw = ph.reshape(Nt * PH, PW, pool, OCp)
    pwm = rw[:, :, 0, :]
    for t in range(1, pool):
        pwm = jnp.maximum(pwm, rw[:, :, t, :])          # (Nt*PH, PW, OCp)
    pooled = pwm.reshape(Nt, PH, PW, OCp)
    return _leaky(pooled + bias)                        # max(v+b) == max(v)+b


def make_localizer_kernel(num_blocks, kernel_sizes, pool, l0_out_hw):
    """All conv blocks + fc head for one batch tile; activations stay in VMEM/vregs."""
    OH0, OW0 = l0_out_hw

    def kernel(*refs):
        xp_ref = refs[0]                                # (1, OH0*OW0, C0p) bf16 patches
        conv_refs = refs[1:1 + 2 * num_blocks]
        w1_ref, b1_ref, w2_ref, b2_ref, o_ref = refs[1 + 2 * num_blocks:]

        # ---- layer 0: K*K*C taps pre-packed into the contraction dim -> 1 matmul ----
        w0_ref, b0_ref = conv_refs[0], conv_refs[1]
        Nt, M0, C0p = xp_ref.shape
        OC0p = w0_ref.shape[-1]
        acc = jnp.dot(xp_ref[...].reshape(Nt * M0, C0p), w0_ref[...],
                      preferred_element_type=jnp.float32)   # (Nt*OH0*OW0, OC0p) f32
        act = _pool_bias_leaky(acc, Nt, OH0, OW0, OC0p, pool, b0_ref[...])

        # ---- layers >= 1: shifted-slice taps, two taps fused per 256-deep matmul ----
        for l in range(1, num_blocks):
            w_ref = conv_refs[2 * l]                    # (K*K, Cin_pad, OC_pad) bf16
            b_ref = conv_refs[2 * l + 1]                # (1, OC_pad) f32
            K = kernel_sizes[l]
            Nt, Hc, Wc, Cin = act.shape
            OCp = w_ref.shape[-1]
            OH, OW = Hc - K + 1, Wc - K + 1
            M = Nt * OH * OW
            a_b = act.astype(jnp.bfloat16)
            taps = K * K
            acc = None
            for p in range(taps // 2):
                ky0, kx0 = divmod(2 * p, K)
                ky1, kx1 = divmod(2 * p + 1, K)
                s0 = a_b[:, ky0:ky0 + OH, kx0:kx0 + OW, :].reshape(M, Cin)
                s1 = a_b[:, ky1:ky1 + OH, kx1:kx1 + OW, :].reshape(M, Cin)
                lhs = jnp.concatenate([s0, s1], axis=-1)            # (M, 2*Cin)
                w_pair = w_ref[2 * p:2 * p + 2].reshape(2 * Cin, OCp)
                d = jnp.dot(lhs, w_pair, preferred_element_type=jnp.float32)
                acc = d if acc is None else acc + d
            if taps % 2:                                # leftover odd tap
                ky, kx = divmod(taps - 1, K)
                s = a_b[:, ky:ky + OH, kx:kx + OW, :].reshape(M, Cin)
                d = jnp.dot(s, w_ref[taps - 1], preferred_element_type=jnp.float32)
                acc = d if acc is None else acc + d
            act = _pool_bias_leaky(acc, Nt, OH, OW, OCp, pool, b_ref[...])

        # ---- Flatten -> Linear -> LeakyReLU -> Linear, fc1 as ONE matmul ----
        Nt, PH, PW, Cp = act.shape
        h_in = act.reshape(Nt, PH * PW * Cp).astype(jnp.bfloat16)
        h1 = _leaky(jnp.dot(h_in, w1_ref[...], preferred_element_type=jnp.float32)
                    + b1_ref[...])                      # (Nt, H1p) f32
        theta = (jnp.dot(h1.astype(jnp.bfloat16), w2_ref[...],
                         preferred_element_type=jnp.float32) + b2_ref[...])
        o_ref[...] = theta[:, None, :]                  # (Nt, 1, OUTp)

    return kernel


def localizer_forward(params, x):
    """x: (N, C, H, W) f32 -> theta (N, *matrix_size) via one gridded pallas_call."""
    N, C, H, W = x.shape
    pool = params["pool"]
    mat_h, mat_w = params["matrix_size"]
    area = mat_h * mat_w
    convs = params["convs"]
    num_blocks = len(convs)
    kernel_sizes = [int(wc.shape[-1]) for wc, _ in convs]

    # --- layer 0: wrapper-side im2col packs all K*K taps into the contraction dim ---
    K0 = kernel_sizes[0]
    OH0, OW0 = H - K0 + 1, W - K0 + 1
    x_nhwc = jnp.transpose(x, (0, 2, 3, 1)).astype(jnp.float32)     # (N, H, W, C)
    patches = [x_nhwc[:, ky:ky + OH0, kx:kx + OW0, :]
               for ky in range(K0) for kx in range(K0)]
    C0 = K0 * K0 * C
    C0p = _round_up(C0, LANE)
    x_p = jnp.concatenate(patches, axis=-1)                          # (N, OH0, OW0, C0)
    x_p = jnp.pad(x_p, ((0, 0), (0, 0), (0, 0), (0, C0p - C0)))
    x_p = x_p.reshape(N, OH0 * OW0, C0p).astype(jnp.bfloat16)

    weight_inputs, weight_specs = [], []

    # layer-0 weight: (OC, Cin, K, K) -> (K*K*Cin, OC_pad) matching (ky, kx, c) order
    wc0, bc0 = convs[0]
    OC0 = wc0.shape[0]
    OC0p = _round_up(OC0, LANE)
    w0 = jnp.transpose(wc0, (2, 3, 1, 0)).reshape(C0, OC0)
    w0 = jnp.pad(w0, ((0, C0p - C0), (0, OC0p - OC0))).astype(jnp.bfloat16)
    b0 = jnp.pad(bc0, (0, OC0p - OC0)).reshape(1, OC0p).astype(jnp.float32)
    weight_inputs += [w0, b0]
    weight_specs += [pl.BlockSpec(w0.shape, lambda n: (0, 0)),       # resident weights
                     pl.BlockSpec(b0.shape, lambda n: (0, 0))]

    c_real, c_act = OC0, OC0p
    h_sp, w_sp = OH0 // pool, OW0 // pool
    flops = 2 * N * OH0 * OW0 * C0p * OC0p
    bytes_accessed = x_p.size * 2 + w0.size * 2 + b0.size * 4

    for (wc, bc) in convs[1:]:
        OC, Cin, K, _ = wc.shape
        OCp = _round_up(OC, LANE)
        # (OC, Cin, K, K) -> (K*K, Cin_pad, OC_pad), zero padded; bf16 for the MXU.
        wt = jnp.transpose(wc, (2, 3, 1, 0)).reshape(K * K, Cin, OC)
        wt = jnp.pad(wt, ((0, 0), (0, c_act - Cin), (0, OCp - OC))).astype(jnp.bfloat16)
        bt = jnp.pad(bc, (0, OCp - OC)).reshape(1, OCp).astype(jnp.float32)
        weight_inputs += [wt, bt]
        weight_specs += [pl.BlockSpec(wt.shape, lambda n: (0, 0, 0)),
                         pl.BlockSpec(bt.shape, lambda n: (0, 0))]
        oh, ow = h_sp - K + 1, w_sp - K + 1
        flops += 2 * N * oh * ow * (K * K * c_act) * OCp
        bytes_accessed += wt.size * 2 + bt.size * 4
        h_sp, w_sp = oh // pool, ow // pool
        c_real, c_act = OC, OCp

    # fc head, reordered from torch's (C, H, W) flatten to the kernel's (H, W, C_pad).
    w1, b1, w2, b2 = params["fc"]
    H1 = w1.shape[0]
    assert w1.shape[1] == c_real * h_sp * w_sp
    H1p = _round_up(H1, LANE)
    OUTp = _round_up(area, LANE)
    w1_r = jnp.transpose(w1.reshape(H1, c_real, h_sp, w_sp), (2, 3, 1, 0))
    w1_r = jnp.pad(w1_r, ((0, 0), (0, 0), (0, c_act - c_real), (0, H1p - H1)))
    w1_adj = w1_r.reshape(h_sp * w_sp * c_act, H1p).astype(jnp.bfloat16)
    b1_adj = jnp.pad(b1, (0, H1p - H1)).reshape(1, H1p).astype(jnp.float32)
    w2_adj = jnp.pad(w2.T, ((0, H1p - H1), (0, OUTp - area))).astype(jnp.bfloat16)
    b2_adj = jnp.pad(b2, (0, OUTp - area)).reshape(1, OUTp).astype(jnp.float32)
    fc_inputs = [w1_adj, b1_adj, w2_adj, b2_adj]
    fc_specs = [pl.BlockSpec(w1_adj.shape, lambda n: (0, 0)),
                pl.BlockSpec(b1_adj.shape, lambda n: (0, 0)),
                pl.BlockSpec(w2_adj.shape, lambda n: (0, 0)),
                pl.BlockSpec(b2_adj.shape, lambda n: (0, 0))]
    flops += 2 * N * (h_sp * w_sp * c_act * H1p + H1p * OUTp)
    bytes_accessed += (w1_adj.size * 2 + b1_adj.size * 4
                       + w2_adj.size * 2 + b2_adj.size * 4 + N * OUTp * 4)

    theta_pad = pl.pallas_call(
        make_localizer_kernel(num_blocks, tuple(kernel_sizes), pool, (OH0, OW0)),
        out_shape=jax.ShapeDtypeStruct((N, 1, OUTp), jnp.float32),
        grid=(N,),
        in_specs=[pl.BlockSpec((1, OH0 * OW0, C0p), lambda n: (n, 0, 0))]
                 + weight_specs + fc_specs,
        out_specs=pl.BlockSpec((1, 1, OUTp), lambda n: (n, 0, 0)),
        compiler_params=pltpu.CompilerParams(
            dimension_semantics=("parallel",),
            vmem_limit_bytes=32 * 1024 * 1024),
        cost_estimate=pl.CostEstimate(flops=int(flops), transcendentals=0,
                                      bytes_accessed=int(bytes_accessed)),
    )(x_p, *weight_inputs, *fc_inputs)
    return theta_pad[:, 0, :area].reshape(N, mat_h, mat_w)


# ------------------------- affine_grid + grid_sample ------------------------

def _pick_tile_p(P_pad, H_in, W_in, C):
    """Largest lane-dense output tile whose per-step f32 slabs stay v7x-safe."""
    budget = 8 * 1024 * 1024
    for t in (512, 384, 256, 128):
        if P_pad % t == 0 and (C * H_in + H_in + W_in) * t * 4 <= budget:
            return t
    return 128  # P_pad is always a multiple of 128


def make_sampler_kernel(C, H_in, W_in):
    """affine_grid(align_corners=False) + grid_sample(bilinear, zeros) for one
    (batch, output-pixel tile) grid cell, using separable row/column weights."""
    H_in_f, W_in_f = float(H_in), float(W_in)

    def kernel(theta_ref, xs_ref, ys_ref, x_ref, o_ref):
        # theta_ref: SMEM (N*6,); xs/ys: (1, tile_p) f32 normalized output coords;
        # x_ref: (1, C*H_in, W_in) bf16; o_ref: (1, C, tile_p) f32
        n = pl.program_id(0)
        base = n * 6
        t00 = theta_ref[base + 0]; t01 = theta_ref[base + 1]; t02 = theta_ref[base + 2]
        t10 = theta_ref[base + 3]; t11 = theta_ref[base + 4]; t12 = theta_ref[base + 5]

        xs = xs_ref[...]                                    # (1, tile_p)
        ys = ys_ref[...]
        tile_p = xs.shape[-1]
        gx = t00 * xs + t01 * ys + t02
        gy = t10 * xs + t11 * ys + t12
        ix = ((gx + 1.0) * W_in_f - 1.0) * 0.5              # unnormalize (align=False)
        iy = ((gy + 1.0) * H_in_f - 1.0) * 0.5
        ix0f = jnp.floor(ix); iy0f = jnp.floor(iy)
        fx = ix - ix0f;       fy = iy - iy0f
        ix0 = ix0f.astype(jnp.int32)
        iy0 = iy0f.astype(jnp.int32)

        # Separable one-hot bilinear weights via selects.  Out-of-range corners match
        # no iota row -> weight 0, reproducing grid_sample's zero padding exactly.
        col_iota = jax.lax.broadcasted_iota(jnp.int32, (W_in, tile_p), 0)
        row_iota = jax.lax.broadcasted_iota(jnp.int32, (H_in, tile_p), 0)
        cx = (jnp.where(col_iota == ix0, 1.0 - fx, 0.0)
              + jnp.where(col_iota == ix0 + 1, fx, 0.0))    # (W_in, tile_p) f32
        ry = (jnp.where(row_iota == iy0, 1.0 - fy, 0.0)
              + jnp.where(row_iota == iy0 + 1, fy, 0.0))    # (H_in, tile_p) f32

        # Column gather on the MXU, row gather as a small VPU multiply-reduce.
        tmp = jnp.dot(x_ref[0], cx.astype(jnp.bfloat16),
                      preferred_element_type=jnp.float32)   # (C*H_in, tile_p)
        tmp = tmp.reshape(C, H_in, tile_p) * ry.reshape(1, H_in, tile_p)
        o_ref[0] = jnp.sum(tmp, axis=1)                     # (C, tile_p)

    return kernel


def spatial_sample(x, theta, out_size):
    """x: (N, C, H, W); theta: (N, 2, 3). Returns (N, C, H_out, W_out) f32."""
    N, C, H_in, W_in = x.shape
    assert theta.shape[1:] == (2, 3)
    H_out, W_out = out_size
    P = H_out * W_out
    P_pad = _round_up(P, LANE)                      # lane-dense, unmasked output stores
    tile_p = _pick_tile_p(P_pad, H_in, W_in, C)
    n_pt = P_pad // tile_p

    x_rows = x.reshape(N, C * H_in, W_in).astype(jnp.bfloat16)
    theta_flat = theta.reshape(N * 6).astype(jnp.float32)   # 1-D SMEM, no 2-D padding

    # Precompute normalized output-grid coords (align_corners=False); padded pixels
    # get in-range values and are sliced off after the call.
    pix = jnp.arange(P_pad, dtype=jnp.int32)
    jj = (pix % W_out).astype(jnp.float32)
    ii = (pix // W_out).astype(jnp.float32)
    xs = ((2.0 * jj + 1.0) / float(W_out) - 1.0).reshape(1, P_pad)
    ys = ((2.0 * ii + 1.0) / float(H_out) - 1.0).reshape(1, P_pad)

    cost = pl.CostEstimate(
        flops=int(2 * N * C * H_in * W_in * P_pad),
        transcendentals=0,
        bytes_accessed=int(N * n_pt * x_rows.shape[1] * x_rows.shape[2] * 2
                           + N * C * P_pad * 4 + 2 * P_pad * 4))

    y = pl.pallas_call(
        make_sampler_kernel(C, H_in, W_in),
        out_shape=jax.ShapeDtypeStruct((N, C, P_pad), jnp.float32),
        grid=(N, n_pt),
        in_specs=[
            pl.BlockSpec(memory_space=pltpu.MemorySpace.SMEM),        # theta scalars
            pl.BlockSpec((1, tile_p), lambda n, pt: (0, pt)),         # xs
            pl.BlockSpec((1, tile_p), lambda n, pt: (0, pt)),         # ys
            pl.BlockSpec((1, C * H_in, W_in), lambda n, pt: (n, 0, 0)),  # image rows
        ],
        out_specs=pl.BlockSpec((1, C, tile_p), lambda n, pt: (n, 0, pt)),
        compiler_params=pltpu.CompilerParams(
            dimension_semantics=("parallel", "parallel"),
            vmem_limit_bytes=32 * 1024 * 1024),
        cost_estimate=cost,
    )(theta_flat, xs, ys, x_rows)
    return y[:, :, :P].reshape(N, C, H_out, W_out)


# ------------------------- parameters (deterministic, mirrors __init__) -----

def init_params(key, in_channels, in_size, kernel_size=5, out_channels_incr=6,
                scaling=2, matrix_size=(2, 3)):
    params = {"convs": [], "pool": scaling, "matrix_size": matrix_size}
    c = in_channels
    n = min(in_size)
    m = max(in_size)
    keys = iter(jax.random.split(key, 32))
    while n >= scaling + kernel_size - 1:
        oc = c + out_channels_incr
        fan_in = c * kernel_size * kernel_size
        w = jax.random.normal(next(keys), (oc, c, kernel_size, kernel_size),
                              jnp.float32) / jnp.sqrt(float(fan_in))
        b = jax.random.normal(next(keys), (oc,), jnp.float32) * 0.01
        params["convs"].append((w, b))
        n = (n - (kernel_size - 1)) // scaling
        m = (m - (kernel_size - 1)) // scaling
        c = oc
    area = matrix_size[0] * matrix_size[1]
    feat = c * n * m
    w1 = jax.random.normal(next(keys), (4 * area, feat), jnp.float32) / jnp.sqrt(float(feat))
    b1 = jax.random.normal(next(keys), (4 * area,), jnp.float32) * 0.01
    # fc[-1].weight.zero_(); fc[-1].bias = 2 * eye(*matrix_size).view(-1)
    w2 = jnp.zeros((area, 4 * area), jnp.float32)
    b2 = (2.0 * jnp.eye(matrix_size[0], matrix_size[1], dtype=jnp.float32)).reshape(-1)
    params["fc"] = (w1, b1, w2, b2)
    return params


def spatial_transformer(params, x, out_size=None):
    assert x.ndim == 4
    _, _, H, W = x.shape
    theta = localizer_forward(params, x)
    hw = out_size if out_size is not None else (H, W)
    return spatial_sample(x, theta, hw)


if __name__ == "__main__":
    key = jax.random.PRNGKey(0)
    kx, kp = jax.random.split(key)
    N, C, H, W = 2, 4, 16, 16
    x = jax.random.normal(kx, (N, C, H, W), jnp.float32)
    params = init_params(kp, C, (H, W))

    y = spatial_transformer(params, x)
    y = jax.block_until_ready(y)

    assert y.shape == (N, C, H, W), y.shape
    assert bool(jnp.all(jnp.isfinite(y)))
    print("KERNEL_OK")
</pallas_src>

<mosaic_0001>
module attributes {stable_mosaic.version = 11 : i64} {
  func.func @kernel(%arg0: i32, %arg1: memref<1x144x128xbf16, #tpu.memory_space<vmem>>, %arg2: memref<128x128xbf16, #tpu.memory_space<vmem>>, %arg3: memref<1x128xf32, #tpu.memory_space<vmem>>, %arg4: memref<25x128x128xbf16, #tpu.memory_space<vmem>>, %arg5: memref<1x128xf32, #tpu.memory_space<vmem>>, %arg6: memref<128x128xbf16, #tpu.memory_space<vmem>>, %arg7: memref<1x128xf32, #tpu.memory_space<vmem>>, %arg8: memref<128x128xbf16, #tpu.memory_space<vmem>>, %arg9: memref<1x128xf32, #tpu.memory_space<vmem>>, %arg10: memref<1x1x128xf32, #tpu.memory_space<vmem>>) attributes {dimension_semantics = [#tpu.dimension_semantics<parallel>], iteration_bounds = array<i64: 2>, scalar_prefetch = 0 : i64, scratch_operands = 0 : i64, tpu.core_type = #tpu.core_type<tc>, window_params = [{transform_indices = @transform_0, window_bounds = array<i64: 1, 144, 128>}, {pipeline_mode = #tpu.pipeline_mode<synchronous>, transform_indices = @transform_1, window_bounds = array<i64: 128, 128>}, {pipeline_mode = #tpu.pipeline_mode<synchronous>, transform_indices = @transform_2, window_bounds = array<i64: 1, 128>}, {pipeline_mode = #tpu.pipeline_mode<synchronous>, transform_indices = @transform_3, window_bounds = array<i64: 25, 128, 128>}, {pipeline_mode = #tpu.pipeline_mode<synchronous>, transform_indices = @transform_4, window_bounds = array<i64: 1, 128>}, {pipeline_mode = #tpu.pipeline_mode<synchronous>, transform_indices = @transform_5, window_bounds = array<i64: 128, 128>}, {pipeline_mode = #tpu.pipeline_mode<synchronous>, transform_indices = @transform_6, window_bounds = array<i64: 1, 128>}, {pipeline_mode = #tpu.pipeline_mode<synchronous>, transform_indices = @transform_7, window_bounds = array<i64: 128, 128>}, {pipeline_mode = #tpu.pipeline_mode<synchronous>, transform_indices = @transform_8, window_bounds = array<i64: 1, 128>}, {transform_indices = @transform_9, window_bounds = array<i64: 1, 1, 128>}]} {
    %c0 = arith.constant 0 : index
    %c0_0 = arith.constant 0 : index
    %c0_1 = arith.constant 0 : index
    %0 = vector.load %arg1[%c0, %c0_0, %c0_1] : memref<1x144x128xbf16, #tpu.memory_space<vmem>>, vector<1x144x128xbf16>
    %1 = vector.shape_cast %0 : vector<1x144x128xbf16> to vector<144x128xbf16>
    %c0_2 = arith.constant 0 : index
    %c0_3 = arith.constant 0 : index
    %2 = vector.load %arg2[%c0_2, %c0_3] : memref<128x128xbf16, #tpu.memory_space<vmem>>, vector<128x128xbf16>
    %cst = arith.constant dense<0.000000e+00> : vector<144x128xf32>
    %3 = tpu.matmul %1, %2, %cst {dimension_numbers = #tpu.dot_dimension_numbers<[1], [0], [0], [1], [0, 0, 1, 1], [], []>} : vector<144x128xbf16>, vector<128x128xbf16>, vector<144x128xf32> -> vector<144x128xf32>
    %c0_4 = arith.constant 0 : index
    %c0_5 = arith.constant 0 : index
    %4 = vector.load %arg3[%c0_4, %c0_5] : memref<1x128xf32, #tpu.memory_space<vmem>>, vector<1x128xf32>
    %5 = vector.shape_cast %3 : vector<144x128xf32> to vector<6x2x12x128xf32>
    %6 = vector.extract_strided_slice %5 {offsets = [0, 0, 0, 0], sizes = [6, 1, 12, 128], strides = [1, 1, 1, 1]} : vector<6x2x12x128xf32> to vector<6x1x12x128xf32>
    %7 = vector.shape_cast %6 : vector<6x1x12x128xf32> to vector<6x12x128xf32>
    %8 = vector.extract_strided_slice %5 {offsets = [0, 1, 0, 0], sizes = [6, 1, 12, 128], strides = [1, 1, 1, 1]} : vector<6x2x12x128xf32> to vector<6x1x12x128xf32>
    %9 = vector.shape_cast %8 : vector<6x1x12x128xf32> to vector<6x12x128xf32>
    %10 = arith.maximumf %7, %9 : vector<6x12x128xf32>
    %11 = vector.shape_cast %10 : vector<6x12x128xf32> to vector<6x6x2x128xf32>
    %12 = vector.extract_strided_slice %11 {offsets = [0, 0, 0, 0], sizes = [6, 6, 1, 128], strides = [1, 1, 1, 1]} : vector<6x6x2x128xf32> to vector<6x6x1x128xf32>
    %13 = vector.shape_cast %12 : vector<6x6x1x128xf32> to vector<6x6x128xf32>
    %14 = vector.extract_strided_slice %11 {offsets = [0, 0, 1, 0], sizes = [6, 6, 1, 128], strides = [1, 1, 1, 1]} : vector<6x6x2x128xf32> to vector<6x6x1x128xf32>
    %15 = vector.shape_cast %14 : vector<6x6x1x128xf32> to vector<6x6x128xf32>
    %16 = arith.maximumf %13, %15 : vector<6x6x128xf32>
    %17 = vector.shape_cast %16 : vector<6x6x128xf32> to vector<1x6x6x128xf32>
    %18 = vector.shape_cast %4 : vector<1x128xf32> to vector<1x1x1x128xf32>
    %19 = vector.broadcast %18 : vector<1x1x1x128xf32> to vector<1x6x6x128xf32>
    %20 = arith.addf %17, %19 : vector<1x6x6x128xf32>
    %cst_6 = arith.constant 0.000000e+00 : f32
    %21 = vector.broadcast %cst_6 : f32 to vector<1x6x6x128xf32>
    %22 = arith.cmpf oge, %20, %21 : vector<1x6x6x128xf32>
    %cst_7 = arith.constant 0.00999999977 : f32
    %23 = vector.broadcast %cst_7 : f32 to vector<1x6x6x128xf32>
    %24 = arith.mulf %23, %20 : vector<1x6x6x128xf32>
    %25 = arith.select %22, %20, %24 : vector<1x6x6x128xi1>, vector<1x6x6x128xf32>
    %26 = arith.truncf %25 : vector<1x6x6x128xf32> to vector<1x6x6x128xbf16>
    %27 = vector.extract_strided_slice %26 {offsets = [0, 0, 0, 0], sizes = [1, 2, 2, 128], strides = [1, 1, 1, 1]} : vector<1x6x6x128xbf16> to vector<1x2x2x128xbf16>
    %28 = vector.shape_cast %27 : vector<1x2x2x128xbf16> to vector<4x128xbf16>
    %29 = vector.extract_strided_slice %26 {offsets = [0, 0, 1, 0], sizes = [1, 2, 2, 128], strides = [1, 1, 1, 1]} : vector<1x6x6x128xbf16> to vector<1x2x2x128xbf16>
    %30 = vector.shape_cast %29 : vector<1x2x2x128xbf16> to vector<4x128xbf16>
    %31 = tpu.concatenate %28, %30 in 1 : vector<4x128xbf16>, vector<4x128xbf16> -> vector<4x256xbf16>
    %c0_8 = arith.constant 0 : index
    %c0_9 = arith.constant 0 : index
    %c0_10 = arith.constant 0 : index
    %32 = vector.load %arg4[%c0_8, %c0_9, %c0_10] : memref<25x128x128xbf16, #tpu.memory_space<vmem>>, vector<2x128x128xbf16>
    %33 = vector.shape_cast %32 : vector<2x128x128xbf16> to vector<256x128xbf16>
    %cst_11 = arith.constant dense<0.000000e+00> : vector<4x128xf32>
    %34 = tpu.matmul %31, %33, %cst_11 {dimension_numbers = #tpu.dot_dimension_numbers<[1], [0], [0], [1], [0, 0, 1, 1], [], []>} : vector<4x256xbf16>, vector<256x128xbf16>, vector<4x128xf32> -> vector<4x128xf32>
    %35 = vector.extract_strided_slice %26 {offsets = [0, 0, 2, 0], sizes = [1, 2, 2, 128], strides = [1, 1, 1, 1]} : vector<1x6x6x128xbf16> to vector<1x2x2x128xbf16>
    %36 = vector.shape_cast %35 : vector<1x2x2x128xbf16> to vector<4x128xbf16>
    %37 = vector.extract_strided_slice %26 {offsets = [0, 0, 3, 0], sizes = [1, 2, 2, 128], strides = [1, 1, 1, 1]} : vector<1x6x6x128xbf16> to vector<1x2x2x128xbf16>
    %38 = vector.shape_cast %37 : vector<1x2x2x128xbf16> to vector<4x128xbf16>
    %39 = tpu.concatenate %36, %38 in 1 : vector<4x128xbf16>, vector<4x128xbf16> -> vector<4x256xbf16>
    %c2 = arith.constant 2 : index
    %c0_12 = arith.constant 0 : index
    %c0_13 = arith.constant 0 : index
    %40 = vector.load %arg4[%c2, %c0_12, %c0_13] : memref<25x128x128xbf16, #tpu.memory_space<vmem>>, vector<2x128x128xbf16>
    %41 = vector.shape_cast %40 : vector<2x128x128xbf16> to vector<256x128xbf16>
    %cst_14 = arith.constant dense<0.000000e+00> : vector<4x128xf32>
    %42 = tpu.matmul %39, %41, %cst_14 {dimension_numbers = #tpu.dot_dimension_numbers<[1], [0], [0], [1], [0, 0, 1, 1], [], []>} : vector<4x256xbf16>, vector<256x128xbf16>, vector<4x128xf32> -> vector<4x128xf32>
    %43 = arith.addf %34, %42 : vector<4x128xf32>
    %44 = vector.extract_strided_slice %26 {offsets = [0, 0, 4, 0], sizes = [1, 2, 2, 128], strides = [1, 1, 1, 1]} : vector<1x6x6x128xbf16> to vector<1x2x2x128xbf16>
    %45 = vector.shape_cast %44 : vector<1x2x2x128xbf16> to vector<4x128xbf16>
    %46 = vector.extract_strided_slice %26 {offsets = [0, 1, 0, 0], sizes = [1, 2, 2, 128], strides = [1, 1, 1, 1]} : vector<1x6x6x128xbf16> to vector<1x2x2x128xbf16>
    %47 = vector.shape_cast %46 : vector<1x2x2x128xbf16> to vector<4x128xbf16>
    %48 = tpu.concatenate %45, %47 in 1 : vector<4x128xbf16>, vector<4x128xbf16> -> vector<4x256xbf16>
    %c4 = arith.constant 4 : index
    %c0_15 = arith.constant 0 : index
    %c0_16 = arith.constant 0 : index
    %49 = vector.load %arg4[%c4, %c0_15, %c0_16] : memref<25x128x128xbf16, #tpu.memory_space<vmem>>, vector<2x128x128xbf16>
    %50 = vector.shape_cast %49 : vector<2x128x128xbf16> to vector<256x128xbf16>
    %cst_17 = arith.constant dense<0.000000e+00> : vector<4x128xf32>
    %51 = tpu.matmul %48, %50, %cst_17 {dimension_numbers = #tpu.dot_dimension_numbers<[1], [0], [0], [1], [0, 0, 1, 1], [], []>} : vector<4x256xbf16>, vector<256x128xbf16>, vector<4x128xf32> -> vector<4x128xf32>
    %52 = arith.addf %43, %51 : vector<4x128xf32>
    %53 = vector.extract_strided_slice %26 {offsets = [0, 1, 1, 0], sizes = [1, 2, 2, 128], strides = [1, 1, 1, 1]} : vector<1x6x6x128xbf16> to vector<1x2x2x128xbf16>
    %54 = vector.shape_cast %53 : vector<1x2x2x128xbf16> to vector<4x128xbf16>
    %55 = vector.extract_strided_slice %26 {offsets = [0, 1, 2, 0], sizes = [1, 2, 2, 128], strides = [1, 1, 1, 1]} : vector<1x6x6x128xbf16> to vector<1x2x2x128xbf16>
    %56 = vector.shape_cast %55 : vector<1x2x2x128xbf16> to vector<4x128xbf16>
    %57 = tpu.concatenate %54, %56 in 1 : vector<4x128xbf16>, vector<4x128xbf16> -> vector<4x256xbf16>
    %c6 = arith.constant 6 : index
    %c0_18 = arith.constant 0 : index
    %c0_19 = arith.constant 0 : index
    %58 = vector.load %arg4[%c6, %c0_18, %c0_19] : memref<25x128x128xbf16, #tpu.memory_space<vmem>>, vector<2x128x128xbf16>
    %59 = vector.shape_cast %58 : vector<2x128x128xbf16> to vector<256x128xbf16>
    %cst_20 = arith.constant dense<0.000000e+00> : vector<4x128xf32>
    %60 = tpu.matmul %57, %59, %cst_20 {dimension_numbers = #tpu.dot_dimension_numbers<[1], [0], [0], [1], [0, 0, 1, 1], [], []>} : vector<4x256xbf16>, vector<256x128xbf16>, vector<4x128xf32> -> vector<4x128xf32>
    %61 = arith.addf %52, %60 : vector<4x128xf32>
    %62 = vector.extract_strided_slice %26 {offsets = [0, 1, 3, 0], sizes = [1, 2, 2, 128], strides = [1, 1, 1, 1]} : vector<1x6x6x128xbf16> to vector<1x2x2x128xbf16>
    %63 = vector.shape_cast %62 : vector<1x2x2x128xbf16> to vector<4x128xbf16>
    %64 = vector.extract_strided_slice %26 {offsets = [0, 1, 4, 0], sizes = [1, 2, 2, 128], strides = [1, 1, 1, 1]} : vector<1x6x6x128xbf16> to vector<1x2x2x128xbf16>
    %65 = vector.shape_cast %64 : vector<1x2x2x128xbf16> to vector<4x128xbf16>
    %66 = tpu.concatenate %63, %65 in 1 : vector<4x128xbf16>, vector<4x128xbf16> -> vector<4x256xbf16>
    %c8 = arith.constant 8 : index
    %c0_21 = arith.constant 0 : index
    %c0_22 = arith.constant 0 : index
    %67 = vector.load %arg4[%c8, %c0_21, %c0_22] : memref<25x128x128xbf16, #tpu.memory_space<vmem>>, vector<2x128x128xbf16>
    %68 = vector.shape_cast %67 : vector<2x128x128xbf16> to vector<256x128xbf16>
    %cst_23 = arith.constant dense<0.000000e+00> : vector<4x128xf32>
    %69 = tpu.matmul %66, %68, %cst_23 {dimension_numbers = #tpu.dot_dimension_numbers<[1], [0], [0], [1], [0, 0, 1, 1], [], []>} : vector<4x256xbf16>, vector<256x128xbf16>, vector<4x128xf32> -> vector<4x128xf32>
    %70 = arith.addf %61, %69 : vector<4x128xf32>
    %71 = vector.extract_strided_slice %26 {offsets = [0, 2, 0, 0], sizes = [1, 2, 2, 128], strides = [1, 1, 1, 1]} : vector<1x6x6x128xbf16> to vector<1x2x2x128xbf16>
    %72 = vector.shape_cast %71 : vector<1x2x2x128xbf16> to vector<4x128xbf16>
    %73 = vector.extract_strided_slice %26 {offsets = [0, 2, 1, 0], sizes = [1, 2, 2, 128], strides = [1, 1, 1, 1]} : vector<1x6x6x128xbf16> to vector<1x2x2x128xbf16>
    %74 = vector.shape_cast %73 : vector<1x2x2x128xbf16> to vector<4x128xbf16>
    %75 = tpu.concatenate %72, %74 in 1 : vector<4x128xbf16>, vector<4x128xbf16> -> vector<4x256xbf16>
    %c10 = arith.constant 10 : index
    %c0_24 = arith.constant 0 : index
    %c0_25 = arith.constant 0 : index
    %76 = vector.load %arg4[%c10, %c0_24, %c0_25] : memref<25x128x128xbf16, #tpu.memory_space<vmem>>, vector<2x128x128xbf16>
    %77 = vector.shape_cast %76 : vector<2x128x128xbf16> to vector<256x128xbf16>
    %cst_26 = arith.constant dense<0.000000e+00> : vector<4x128xf32>
    %78 = tpu.matmul %75, %77, %cst_26 {dimension_numbers = #tpu.dot_dimension_numbers<[1], [0], [0], [1], [0, 0, 1, 1], [], []>} : vector<4x256xbf16>, vector<256x128xbf16>, vector<4x128xf32> -> vector<4x128xf32>
    %79 = arith.addf %70, %78 : vector<4x128xf32>
    %80 = vector.extract_strided_slice %26 {offsets = [0, 2, 2, 0], sizes = [1, 2, 2, 128], strides = [1, 1, 1, 1]} : vector<1x6x6x128xbf16> to vector<1x2x2x128xbf16>
    %81 = vector.shape_cast %80 : vector<1x2x2x128xbf16> to vector<4x128xbf16>
    %82 = vector.extract_strided_slice %26 {offsets = [0, 2, 3, 0], sizes = [1, 2, 2, 128], strides = [1, 1, 1, 1]} : vector<1x6x6x128xbf16> to vector<1x2x2x128xbf16>
    %83 = vector.shape_cast %82 : vector<1x2x2x128xbf16> to vector<4x128xbf16>
    %84 = tpu.concatenate %81, %83 in 1 : vector<4x128xbf16>, vector<4x128xbf16> -> vector<4x256xbf16>
    %c12 = arith.constant 12 : index
    %c0_27 = arith.constant 0 : index
    %c0_28 = arith.constant 0 : index
    %85 = vector.load %arg4[%c12, %c0_27, %c0_28] : memref<25x128x128xbf16, #tpu.memory_space<vmem>>, vector<2x128x128xbf16>
    %86 = vector.shape_cast %85 : vector<2x128x128xbf16> to vector<256x128xbf16>
    %cst_29 = arith.constant dense<0.000000e+00> : vector<4x128xf32>
    %87 = tpu.matmul %84, %86, %cst_29 {dimension_numbers = #tpu.dot_dimension_numbers<[1], [0], [0], [1], [0, 0, 1, 1], [], []>} : vector<4x256xbf16>, vector<256x128xbf16>, vector<4x128xf32> -> vector<4x128xf32>
    %88 = arith.addf %79, %87 : vector<4x128xf32>
    %89 = vector.extract_strided_slice %26 {offsets = [0, 2, 4, 0], sizes = [1, 2, 2, 128], strides = [1, 1, 1, 1]} : vector<1x6x6x128xbf16> to vector<1x2x2x128xbf16>
    %90 = vector.shape_cast %89 : vector<1x2x2x128xbf16> to vector<4x128xbf16>
    %91 = vector.extract_strided_slice %26 {offsets = [0, 3, 0, 0], sizes = [1, 2, 2, 128], strides = [1, 1, 1, 1]} : vector<1x6x6x128xbf16> to vector<1x2x2x128xbf16>
    %92 = vector.shape_cast %91 : vector<1x2x2x128xbf16> to vector<4x128xbf16>
    %93 = tpu.concatenate %90, %92 in 1 : vector<4x128xbf16>, vector<4x128xbf16> -> vector<4x256xbf16>
    %c14 = arith.constant 14 : index
    %c0_30 = arith.constant 0 : index
    %c0_31 = arith.constant 0 : index
    %94 = vector.load %arg4[%c14, %c0_30, %c0_31] : memref<25x128x128xbf16, #tpu.memory_space<vmem>>, vector<2x128x128xbf16>
    %95 = vector.shape_cast %94 : vector<2x128x128xbf16> to vector<256x128xbf16>
    %cst_32 = arith.constant dense<0.000000e+00> : vector<4x128xf32>
    %96 = tpu.matmul %93, %95, %cst_32 {dimension_numbers = #tpu.dot_dimension_numbers<[1], [0], [0], [1], [0, 0, 1, 1], [], []>} : vector<4x256xbf16>, vector<256x128xbf16>, vector<4x128xf32> -> vector<4x128xf32>
    %97 = arith.addf %88, %96 : vector<4x128xf32>
    %98 = vector.extract_strided_slice %26 {offsets = [0, 3, 1, 0], sizes = [1, 2, 2, 128], strides = [1, 1, 1, 1]} : vector<1x6x6x128xbf16> to vector<1x2x2x128xbf16>
    %99 = vector.shape_cast %98 : vector<1x2x2x128xbf16> to vector<4x128xbf16>
    %100 = vector.extract_strided_slice %26 {offsets = [0, 3, 2, 0], sizes = [1, 2, 2, 128], strides = [1, 1, 1, 1]} : vector<1x6x6x128xbf16> to vector<1x2x2x128xbf16>
    %101 = vector.shape_cast %100 : vector<1x2x2x128xbf16> to vector<4x128xbf16>
    %102 = tpu.concatenate %99, %101 in 1 : vector<4x128xbf16>, vector<4x128xbf16> -> vector<4x256xbf16>
    %c16 = arith.constant 16 : index
    %c0_33 = arith.constant 0 : index
    %c0_34 = arith.constant 0 : index
    %103 = vector.load %arg4[%c16, %c0_33, %c0_34] : memref<25x128x128xbf16, #tpu.memory_space<vmem>>, vector<2x128x128xbf16>
    %104 = vector.shape_cast %103 : vector<2x128x128xbf16> to vector<256x128xbf16>
    %cst_35 = arith.constant dense<0.000000e+00> : vector<4x128xf32>
    %105 = tpu.matmul %102, %104, %cst_35 {dimension_numbers = #tpu.dot_dimension_numbers<[1], [0], [0], [1], [0, 0, 1, 1], [], []>} : vector<4x256xbf16>, vector<256x128xbf16>, vector<4x128xf32> -> vector<4x128xf32>
    %106 = arith.addf %97, %105 : vector<4x128xf32>
    %107 = vector.extract_strided_slice %26 {offsets = [0, 3, 3, 0], sizes = [1, 2, 2, 128], strides = [1, 1, 1, 1]} : vector<1x6x6x128xbf16> to vector<1x2x2x128xbf16>
    %108 = vector.shape_cast %107 : vector<1x2x2x128xbf16> to vector<4x128xbf16>
    %109 = vector.extract_strided_slice %26 {offsets = [0, 3, 4, 0], sizes = [1, 2, 2, 128], strides = [1, 1, 1, 1]} : vector<1x6x6x128xbf16> to vector<1x2x2x128xbf16>
    %110 = vector.shape_cast %109 : vector<1x2x2x128xbf16> to vector<4x128xbf16>
    %111 = tpu.concatenate %108, %110 in 1 : vector<4x128xbf16>, vector<4x128xbf16> -> vector<4x256xbf16>
    %c18 = arith.constant 18 : index
    %c0_36 = arith.constant 0 : index
    %c0_37 = arith.constant 0 : index
    %112 = vector.load %arg4[%c18, %c0_36, %c0_37] : memref<25x128x128xbf16, #tpu.memory_space<vmem>>, vector<2x128x128xbf16>
    %113 = vector.shape_cast %112 : vector<2x128x128xbf16> to vector<256x128xbf16>
    %cst_38 = arith.constant dense<0.000000e+00> : vector<4x128xf32>
    %114 = tpu.matmul %111, %113, %cst_38 {dimension_numbers = #tpu.dot_dimension_numbers<[1], [0], [0], [1], [0, 0, 1, 1], [], []>} : vector<4x256xbf16>, vector<256x128xbf16>, vector<4x128xf32> -> vector<4x128xf32>
    %115 = arith.addf %106, %114 : vector<4x128xf32>
    %116 = vector.extract_strided_slice %26 {offsets = [0, 4, 0, 0], sizes = [1, 2, 2, 128], strides = [1, 1, 1, 1]} : vector<1x6x6x128xbf16> to vector<1x2x2x128xbf16>
    %117 = vector.shape_cast %116 : vector<1x2x2x128xbf16> to vector<4x128xbf16>
    %118 = vector.extract_strided_slice %26 {offsets = [0, 4, 1, 0], sizes = [1, 2, 2, 128], strides = [1, 1, 1, 1]} : vector<1x6x6x128xbf16> to vector<1x2x2x128xbf16>
    %119 = vector.shape_cast %118 : vector<1x2x2x128xbf16> to vector<4x128xbf16>
    %120 = tpu.concatenate %117, %119 in 1 : vector<4x128xbf16>, vector<4x128xbf16> -> vector<4x256xbf16>
    %c20 = arith.constant 20 : index
    %c0_39 = arith.constant 0 : index
    %c0_40 = arith.constant 0 : index
    %121 = vector.load %arg4[%c20, %c0_39, %c0_40] : memref<25x128x128xbf16, #tpu.memory_space<vmem>>, vector<2x128x128xbf16>
    %122 = vector.shape_cast %121 : vector<2x128x128xbf16> to vector<256x128xbf16>
    %cst_41 = arith.constant dense<0.000000e+00> : vector<4x128xf32>
    %123 = tpu.matmul %120, %122, %cst_41 {dimension_numbers = #tpu.dot_dimension_numbers<[1], [0], [0], [1], [0, 0, 1, 1], [], []>} : vector<4x256xbf16>, vector<256x128xbf16>, vector<4x128xf32> -> vector<4x128xf32>
    %124 = arith.addf %115, %123 : vector<4x128xf32>
    %125 = vector.extract_strided_slice %26 {offsets = [0, 4, 2, 0], sizes = [1, 2, 2, 128], strides = [1, 1, 1, 1]} : vector<1x6x6x128xbf16> to vector<1x2x2x128xbf16>
    %126 = vector.shape_cast %125 : vector<1x2x2x128xbf16> to vector<4x128xbf16>
    %127 = vector.extract_strided_slice %26 {offsets = [0, 4, 3, 0], sizes = [1, 2, 2, 128], strides = [1, 1, 1, 1]} : vector<1x6x6x128xbf16> to vector<1x2x2x128xbf16>
    %128 = vector.shape_cast %127 : vector<1x2x2x128xbf16> to vector<4x128xbf16>
    %129 = tpu.concatenate %126, %128 in 1 : vector<4x128xbf16>, vector<4x128xbf16> -> vector<4x256xbf16>
    %c22 = arith.constant 22 : index
    %c0_42 = arith.constant 0 : index
    %c0_43 = arith.constant 0 : index
    %130 = vector.load %arg4[%c22, %c0_42, %c0_43] : memref<25x128x128xbf16, #tpu.memory_space<vmem>>, vector<2x128x128xbf16>
    %131 = vector.shape_cast %130 : vector<2x128x128xbf16> to vector<256x128xbf16>
    %cst_44 = arith.constant dense<0.000000e+00> : vector<4x128xf32>
    %132 = tpu.matmul %129, %131, %cst_44 {dimension_numbers = #tpu.dot_dimension_numbers<[1], [0], [0], [1], [0, 0, 1, 1], [], []>} : vector<4x256xbf16>, vector<256x128xbf16>, vector<4x128xf32> -> vector<4x128xf32>
    %133 = arith.addf %124, %132 : vector<4x128xf32>
    %134 = vector.extract_strided_slice %26 {offsets = [0, 4, 4, 0], sizes = [1, 2, 2, 128], strides = [1, 1, 1, 1]} : vector<1x6x6x128xbf16> to vector<1x2x2x128xbf16>
    %135 = vector.shape_cast %134 : vector<1x2x2x128xbf16> to vector<4x128xbf16>
    %c24 = arith.constant 24 : index
    %c0_45 = arith.constant 0 : index
    %c0_46 = arith.constant 0 : index
    %136 = vector.load %arg4[%c24, %c0_45, %c0_46] : memref<25x128x128xbf16, #tpu.memory_space<vmem>>, vector<1x128x128xbf16>
    %137 = vector.shape_cast %136 : vector<1x128x128xbf16> to vector<128x128xbf16>
    %cst_47 = arith.constant dense<0.000000e+00> : vector<4x128xf32>
    %138 = tpu.matmul %135, %137, %cst_47 {dimension_numbers = #tpu.dot_dimension_numbers<[1], [0], [0], [1], [0, 0, 1, 1], [], []>} : vector<4x128xbf16>, vector<128x128xbf16>, vector<4x128xf32> -> vector<4x128xf32>
    %139 = arith.addf %133, %138 : vector<4x128xf32>
    %c0_48 = arith.constant 0 : index
    %c0_49 = arith.constant 0 : index
    %140 = vector.load %arg5[%c0_48, %c0_49] : memref<1x128xf32, #tpu.memory_space<vmem>>, vector<1x128xf32>
    %141 = vector.shape_cast %139 : vector<4x128xf32> to vector<1x2x2x128xf32>
    %142 = vector.extract_strided_slice %141 {offsets = [0, 0, 0, 0], sizes = [1, 1, 2, 128], strides = [1, 1, 1, 1]} : vector<1x2x2x128xf32> to vector<1x1x2x128xf32>
    %143 = vector.shape_cast %142 : vector<1x1x2x128xf32> to vector<1x2x128xf32>
    %144 = vector.extract_strided_slice %141 {offsets = [0, 1, 0, 0], sizes = [1, 1, 2, 128], strides = [1, 1, 1, 1]} : vector<1x2x2x128xf32> to vector<1x1x2x128xf32>
    %145 = vector.shape_cast %144 : vector<1x1x2x128xf32> to vector<1x2x128xf32>
    %146 = arith.maximumf %143, %145 : vector<1x2x128xf32>
    %147 = vector.shape_cast %146 : vector<1x2x128xf32> to vector<1x1x2x128xf32>
    %148 = vector.extract_strided_slice %147 {offsets = [0, 0, 0, 0], sizes = [1, 1, 1, 128], strides = [1, 1, 1, 1]} : vector<1x1x2x128xf32> to vector<1x1x1x128xf32>
    %149 = vector.shape_cast %148 : vector<1x1x1x128xf32> to vector<1x1x128xf32>
    %150 = vector.extract_strided_slice %147 {offsets = [0, 0, 1, 0], sizes = [1, 1, 1, 128], strides = [1, 1, 1, 1]} : vector<1x1x2x128xf32> to vector<1x1x1x128xf32>
    %151 = vector.shape_cast %150 : vector<1x1x1x128xf32> to vector<1x1x128xf32>
    %152 = arith.maximumf %149, %151 : vector<1x1x128xf32>
    %153 = vector.shape_cast %152 : vector<1x1x128xf32> to vector<1x1x1x128xf32>
    %154 = vector.shape_cast %140 : vector<1x128xf32> to vector<1x1x1x128xf32>
    %155 = arith.addf %153, %154 : vector<1x1x1x128xf32>
    %cst_50 = arith.constant 0.000000e+00 : f32
    %156 = vector.broadcast %cst_50 : f32 to vector<1x1x1x128xf32>
    %157 = arith.cmpf oge, %155, %156 : vector<1x1x1x128xf32>
    %cst_51 = arith.constant 0.00999999977 : f32
    %158 = vector.broadcast %cst_51 : f32 to vector<1x1x1x128xf32>
    %159 = arith.mulf %158, %155 : vector<1x1x1x128xf32>
    %160 = arith.select %157, %155, %159 : vector<1x1x1x128xi1>, vector<1x1x1x128xf32>
    %161 = vector.shape_cast %160 : vector<1x1x1x128xf32> to vector<1x128xf32>
    %162 = arith.truncf %161 : vector<1x128xf32> to vector<1x128xbf16>
    %c0_52 = arith.constant 0 : index
    %c0_53 = arith.constant 0 : index
    %163 = vector.load %arg6[%c0_52, %c0_53] : memref<128x128xbf16, #tpu.memory_space<vmem>>, vector<128x128xbf16>
    %cst_54 = arith.constant dense<0.000000e+00> : vector<1x128xf32>
    %164 = tpu.matmul %162, %163, %cst_54 {dimension_numbers = #tpu.dot_dimension_numbers<[1], [0], [0], [1], [0, 0, 1, 1], [], []>} : vector<1x128xbf16>, vector<128x128xbf16>, vector<1x128xf32> -> vector<1x128xf32>
    %c0_55 = arith.constant 0 : index
    %c0_56 = arith.constant 0 : index
    %165 = vector.load %arg7[%c0_55, %c0_56] : memref<1x128xf32, #tpu.memory_space<vmem>>, vector<1x128xf32>
    %166 = arith.addf %164, %165 : vector<1x128xf32>
    %cst_57 = arith.constant 0.000000e+00 : f32
    %167 = vector.broadcast %cst_57 : f32 to vector<1x128xf32>
    %168 = arith.cmpf oge, %166, %167 : vector<1x128xf32>
    %cst_58 = arith.constant 0.00999999977 : f32
    %169 = vector.broadcast %cst_58 : f32 to vector<1x128xf32>
    %170 = arith.mulf %169, %166 : vector<1x128xf32>
    %171 = arith.select %168, %166, %170 : vector<1x128xi1>, vector<1x128xf32>
    %172 = arith.truncf %171 : vector<1x128xf32> to vector<1x128xbf16>
    %c0_59 = arith.constant 0 : index
    %c0_60 = arith.constant 0 : index
    %173 = vector.load %arg8[%c0_59, %c0_60] : memref<128x128xbf16, #tpu.memory_space<vmem>>, vector<128x128xbf16>
    %cst_61 = arith.constant dense<0.000000e+00> : vector<1x128xf32>
    %174 = tpu.matmul %172, %173, %cst_61 {dimension_numbers = #tpu.dot_dimension_numbers<[1], [0], [0], [1], [0, 0, 1, 1], [], []>} : vector<1x128xbf16>, vector<128x128xbf16>, vector<1x128xf32> -> vector<1x128xf32>
    %c0_62 = arith.constant 0 : index
    %c0_63 = arith.constant 0 : index
    %175 = vector.load %arg9[%c0_62, %c0_63] : memref<1x128xf32, #tpu.memory_space<vmem>>, vector<1x128xf32>
    %176 = arith.addf %174, %175 : vector<1x128xf32>
    %177 = vector.shape_cast %176 : vector<1x128xf32> to vector<1x1x128xf32>
    %c0_64 = arith.constant 0 : index
    %c0_65 = arith.constant 0 : index
    %c0_66 = arith.constant 0 : index
    %178 = vector.load %arg10[%c0_64, %c0_65, %c0_66] : memref<1x1x128xf32, #tpu.memory_space<vmem>>, vector<1x1x128xf32>
    tpu.vector_store %arg10[%c0_64, %c0_65, %c0_66], %177 {strides = array<i32>} : memref<1x1x128xf32, #tpu.memory_space<vmem>>, vector<1x1x128xf32>,
    return
  }
  func.func @transform_0(%arg0: i32) -> (i32, i32, i32) {
    %c0_i32 = arith.constant 0 : i32
    %c0_i32_0 = arith.constant 0 : i32
    %c0_i32_1 = arith.constant 0 : i32
    return %arg0, %c0_i32, %c0_i32_0 : i32, i32, i32
  }
  func.func @transform_1(%arg0: i32) -> (i32, i32) {
    %c0_i32 = arith.constant 0 : i32
    %c0_i32_0 = arith.constant 0 : i32
    %c0_i32_1 = arith.constant 0 : i32
    return %c0_i32, %c0_i32_0 : i32, i32
  }
  func.func @transform_2(%arg0: i32) -> (i32, i32) {
    %c0_i32 = arith.constant 0 : i32
    %c0_i32_0 = arith.constant 0 : i32
    %c0_i32_1 = arith.constant 0 : i32
    return %c0_i32, %c0_i32_0 : i32, i32
  }
  func.func @transform_3(%arg0: i32) -> (i32, i32, i32) {
    %c0_i32 = arith.constant 0 : i32
    %c0_i32_0 = arith.constant 0 : i32
    %c0_i32_1 = arith.constant 0 : i32
    %c0_i32_2 = arith.constant 0 : i32
    return %c0_i32, %c0_i32_0, %c0_i32_1 : i32, i32, i32
  }
  func.func @transform_4(%arg0: i32) -> (i32, i32) {
    %c0_i32 = arith.constant 0 : i32
    %c0_i32_0 = arith.constant 0 : i32
    %c0_i32_1 = arith.constant 0 : i32
    return %c0_i32, %c0_i32_0 : i32, i32
  }
  func.func @transform_5(%arg0: i32) -> (i32, i32) {
    %c0_i32 = arith.constant 0 : i32
    %c0_i32_0 = arith.constant 0 : i32
    %c0_i32_1 = arith.constant 0 : i32
    return %c0_i32, %c0_i32_0 : i32, i32
  }
  func.func @transform_6(%arg0: i32) -> (i32, i32) {
    %c0_i32 = arith.constant 0 : i32
    %c0_i32_0 = arith.constant 0 : i32
    %c0_i32_1 = arith.constant 0 : i32
    return %c0_i32, %c0_i32_0 : i32, i32
  }
  func.func @transform_7(%arg0: i32) -> (i32, i32) {
    %c0_i32 = arith.constant 0 : i32
    %c0_i32_0 = arith.constant 0 : i32
    %c0_i32_1 = arith.constant 0 : i32
    return %c0_i32, %c0_i32_0 : i32, i32
  }
  func.func @transform_8(%arg0: i32) -> (i32, i32) {
    %c0_i32 = arith.constant 0 : i32
    %c0_i32_0 = arith.constant 0 : i32
    %c0_i32_1 = arith.constant 0 : i32
    return %c0_i32, %c0_i32_0 : i32, i32
  }
  func.func @transform_9(%arg0: i32) -> (i32, i32, i32) {
    %c0_i32 = arith.constant 0 : i32
    %c0_i32_0 = arith.constant 0 : i32
    %c0_i32_1 = arith.constant 0 : i32
    return %arg0, %c0_i32, %c0_i32_0 : i32, i32, i32
  }
}

</mosaic_0001>

<llo_original>
// kernel: tpu_custom_call.1
$region0: #{tpu_custom_call.1}
  #allocation0 [shape = 'u32[]', space=smem, size = 0x4, offset = 0x4, fixed_abs, tag = 'smem constant byte address 0x4 - core index']
  #allocation1 [shape = 'u32[72,128]{1,0:T(1,128)}', space=vmem, size = 0x9000, scoped, tag = 'internal scratch']
  %s0 = inlined_call_operand.hbm [shape: bf16[2,144,128], index: 0, kind: input, shape index: {}]
  %s1 = inlined_call_operand.hbm [shape: bf16[128,128], index: 1, kind: input, shape index: {}]
  %s2 = inlined_call_operand.vmem [shape: f32[1,128], index: 2, kind: input, shape index: {}]
  %s3 = inlined_call_operand.hbm [shape: bf16[25,128,128], index: 3, kind: input, shape index: {}]
  %s4 = inlined_call_operand.vmem [shape: f32[1,128], index: 4, kind: input, shape index: {}]
  %s5 = inlined_call_operand.hbm [shape: bf16[128,128], index: 5, kind: input, shape index: {}]
  %s6 = inlined_call_operand.vmem [shape: f32[1,128], index: 6, kind: input, shape index: {}]
  %s7 = inlined_call_operand.hbm [shape: bf16[128,128], index: 7, kind: input, shape index: {}]
  %s8 = inlined_call_operand.vmem [shape: f32[1,128], index: 8, kind: input, shape index: {}]
  %s9 = inlined_call_operand.hbm [shape: f32[2,1,128], index: 9, kind: output, shape index: {}]
  %s10 = sld [smem:[#allocation0]]
  $region89: #{tpu_custom_call.1} parent=0
    _
  %s12 = ssub.s32 1, %s10
  %s13 = scalar_select 0, %s12, %s10
  $region1: #{tpu_custom_call.1} parent=0
    #allocation2 [shape = 'u8[73728]{0}', space=vmem, size = 0x12000, scoped, tag = 'input window, operand 0']
    #allocation3 [shape = 's32[2]{0}', space=sflag, size = 0x8, scoped, tag = 'scoped memory for tpu_custom_call.1']
    #allocation4 [shape = 's32[2]{0}', space=sflag, size = 0x8, scoped, tag = 'scoped memory for tpu_custom_call.1']
    #allocation5 [shape = 'u8[32768]{0}', space=vmem, size = 0x8000, scoped, tag = 'input window, operand 1, single buffered']
    #allocation6 [shape = 's32[1]{0}', space=sflag, size = 0x4, scoped, tag = 'scoped memory for tpu_custom_call.1']
    #allocation7 [shape = 'u8[819200]{0}', space=vmem, size = 0xc8000, scoped, tag = 'input window, operand 3, single buffered']
    #allocation8 [shape = 'u8[32768]{0}', space=vmem, size = 0x8000, scoped, tag = 'input window, operand 5, single buffered']
    #allocation9 [shape = 's32[1]{0}', space=sflag, size = 0x4, scoped, tag = 'scoped memory for tpu_custom_call.1']
    #allocation10 [shape = 'u8[32768]{0}', space=vmem, size = 0x8000, scoped, tag = 'input window, operand 7, single buffered']
    #allocation11 [shape = 'u8[1024]{0}', space=vmem, size = 0x400, scoped, tag = 'output window, operand 0']
    %14 = vsyncpa [#allocation3], 0
    %s15 = scalar_lea.sflag [#allocation3], 1
    %16 = vsyncpa %s15, 0
    %17 = vsyncpa [#allocation6], 0
    %18 = vsyncpa [#allocation9], 0
    %19 = vsyncpa [#allocation4], 0
    %s20 = scalar_lea.sflag [#allocation4], 1
    %21 = vsyncpa %s20, 0
    loop: start=0, step=1, limit=4
    $region2: #{tpu_custom_call.1} parent=1 // loop_pre_header
      _
    $region3: #{tpu_custom_call.1} parent=1 // loop_header
      %s23 = sphi 0, %s27
      %p24 = scmp.ge.s32.totalorder %s23, 4
      %s33 = sphi 0, %s35
      %s36 = sphi 0, %s33
      %s37 = sphi 0, %s36
      %s53 = sphi 0, %s37
      %s57 = sphi 0, %s57
      %s59 = sphi 0, %s57
      %s60 = sphi 0, %s59
      %s74 = sphi 0, %s60
      %s78 = sphi 0, %s78
      %s80 = sphi 0, %s78
      %s81 = sphi 0, %s80
      %s95 = sphi 0, %s81
      %s99 = sphi 0, %s99
      %s101 = sphi 0, %s99
      %s102 = sphi 0, %s101
      %s116 = sphi 0, %s102
      %s120 = sphi 0, %s120
      %s122 = sphi 0, %s120
      %s123 = sphi 0, %s122
      %s137 = sphi 0, %s123
      %s141 = sphi 0, %s141
      %s143 = sphi 0, %s141
      %s144 = sphi 0, %s143
      %s158 = sphi 0, %s144
      %s162 = sphi 0, %s162
      %s164 = sphi 0, %s162
      %s165 = sphi 0, %s164
      %s179 = sphi 0, %s165
      %s183 = sphi 0, %s183
      %s185 = sphi 0, %s183
      %s186 = sphi 0, %s185
      %s200 = sphi 0, %s186
      %s204 = sphi 0, %s204
      %s206 = sphi 0, %s204
      %s207 = sphi 0, %s206
      %s221 = sphi 0, %s207
      %s227 = sphi 0, %s229
      %s230 = sphi 0, %s227
      %s231 = sphi 0, %s230
      %s247 = sphi 0, %s231
    $region4: #{tpu_custom_call.1} parent=1 // loop_header_branch
      %26 = sbr.rel (%p24) target = $region8
    $region5: #{tpu_custom_call.1} parent=1 // loop_body
      %s28 = ssub.s32 %s23, 1
      %s29 = ssub.s32 %s23, 2
      %s30 = sadd.s32 %s23, 1
      %s31 = ssub.s32 %s23, %s30
      %p32 = scmp.eq.s32.totalorder %s31, 0
      %s34 = sadd.s32 %s33, 1
      %s35 = scalar_select %p32, %s33, %s34
      %p38 = pneg %p32
      %p39 = scmp.eq.s32.totalorder %s23, 1
      %p40 = por %p38, %p39
      %p41 = scmp.ne.s32.totalorder %s33, %s36
      %p42 = scmp.eq.s32.totalorder %s23, 0
      %p43 = por %p41, %p42
      %p44 = scmp.ne.s32.totalorder %s33, %s36
      %p45 = scmp.eq.s32.totalorder %s28, 1
      %p46 = por %p44, %p45
      %p47 = scmp.ne.s32.totalorder %s36, %s37
      %p48 = scmp.eq.s32.totalorder %s28, 0
      %p49 = por %p47, %p48
      %p50 = scmp.ne.s32.totalorder %s36, %s37
      %p51 = scmp.eq.s32.totalorder %s29, 1
      %p52 = por %p50, %p51
      %p54 = scmp.ne.s32.totalorder %s37, %s53
      %p55 = scmp.eq.s32.totalorder %s29, 0
      %p56 = por %p54, %p55
      %s58 = sadd.s32 %s57, 1
      %p61 = scmp.eq.s32.totalorder %s23, 1
      %p62 = scmp.ne.s32.totalorder %s57, %s59
      %p63 = scmp.eq.s32.totalorder %s23, 0
      %p64 = por %p62, %p63
      %p65 = scmp.ne.s32.totalorder %s57, %s59
      %p66 = scmp.eq.s32.totalorder %s28, 1
      %p67 = por %p65, %p66
      %p68 = scmp.ne.s32.totalorder %s59, %s60
      %p69 = scmp.eq.s32.totalorder %s28, 0
      %p70 = por %p68, %p69
      %p71 = scmp.ne.s32.totalorder %s59, %s60
      %p72 = scmp.eq.s32.totalorder %s29, 1
      %p73 = por %p71, %p72
      %p75 = scmp.ne.s32.totalorder %s60, %s74
      %p76 = scmp.eq.s32.totalorder %s29, 0
      %p77 = por %p75, %p76
      %s79 = sadd.s32 %s78, 1
      %p82 = scmp.eq.s32.totalorder %s23, 1
      %p83 = scmp.ne.s32.totalorder %s78, %s80
      %p84 = scmp.eq.s32.totalorder %s23, 0
      %p85 = por %p83, %p84
      %p86 = scmp.ne.s32.totalorder %s78, %s80
      %p87 = scmp.eq.s32.totalorder %s28, 1
      %p88 = por %p86, %p87
      %p89 = scmp.ne.s32.totalorder %s80, %s81
      %p90 = scmp.eq.s32.totalorder %s28, 0
      %p91 = por %p89, %p90
      %p92 = scmp.ne.s32.totalorder %s80, %s81
      %p93 = scmp.eq.s32.totalorder %s29, 1
      %p94 = por %p92, %p93
      %p96 = scmp.ne.s32.totalorder %s81, %s95
      %p97 = scmp.eq.s32.totalorder %s29, 0
      %p98 = por %p96, %p97
      %s100 = sadd.s32 %s99, 1
      %p103 = scmp.eq.s32.totalorder %s23, 1
      %p104 = scmp.ne.s32.totalorder %s99, %s101
      %p105 = scmp.eq.s32.totalorder %s23, 0
      %p106 = por %p104, %p105
      %p107 = scmp.ne.s32.totalorder %s99, %s101
      %p108 = scmp.eq.s32.totalorder %s28, 1
      %p109 = por %p107, %p108
      %p110 = scmp.ne.s32.totalorder %s101, %s102
      %p111 = scmp.eq.s32.totalorder %s28, 0
      %p112 = por %p110, %p111
      %p113 = scmp.ne.s32.totalorder %s101, %s102
      %p114 = scmp.eq.s32.totalorder %s29, 1
      %p115 = por %p113, %p114
      %p117 = scmp.ne.s32.totalorder %s102, %s116
      %p118 = scmp.eq.s32.totalorder %s29, 0
      %p119 = por %p117, %p118
      %s121 = sadd.s32 %s120, 1
      %p124 = scmp.eq.s32.totalorder %s23, 1
      %p125 = scmp.ne.s32.totalorder %s120, %s122
      %p126 = scmp.eq.s32.totalorder %s23, 0
      %p127 = por %p125, %p126
      %p128 = scmp.ne.s32.totalorder %s120, %s122
      %p129 = scmp.eq.s32.totalorder %s28, 1
      %p130 = por %p128, %p129
      %p131 = scmp.ne.s32.totalorder %s122, %s123
      %p132 = scmp.eq.s32.totalorder %s28, 0
      %p133 = por %p131, %p132
      %p134 = scmp.ne.s32.totalorder %s122, %s123
      %p135 = scmp.eq.s32.totalorder %s29, 1
      %p136 = por %p134, %p135
      %p138 = scmp.ne.s32.totalorder %s123, %s137
      %p139 = scmp.eq.s32.totalorder %s29, 0
      %p140 = por %p138, %p139
      %s142 = sadd.s32 %s141, 1
      %p145 = scmp.eq.s32.totalorder %s23, 1
      %p146 = scmp.ne.s32.totalorder %s141, %s143
      %p147 = scmp.eq.s32.totalorder %s23, 0
      %p148 = por %p146, %p147
      %p149 = scmp.ne.s32.totalorder %s141, %s143
      %p150 = scmp.eq.s32.totalorder %s28, 1
      %p151 = por %p149, %p150
      %p152 = scmp.ne.s32.totalorder %s143, %s144
      %p153 = scmp.eq.s32.totalorder %s28, 0
      %p154 = por %p152, %p153
      %p155 = scmp.ne.s32.totalorder %s143, %s144
      %p156 = scmp.eq.s32.totalorder %s29, 1
      %p157 = por %p155, %p156
      %p159 = scmp.ne.s32.totalorder %s144, %s158
      %p160 = scmp.eq.s32.totalorder %s29, 0
      %p161 = por %p159, %p160
      %s163 = sadd.s32 %s162, 1
      %p166 = scmp.eq.s32.totalorder %s23, 1
      %p167 = scmp.ne.s32.totalorder %s162, %s164
      %p168 = scmp.eq.s32.totalorder %s23, 0
      %p169 = por %p167, %p168
      %p170 = scmp.ne.s32.totalorder %s162, %s164
      %p171 = scmp.eq.s32.totalorder %s28, 1
      %p172 = por %p170, %p171
      %p173 = scmp.ne.s32.totalorder %s164, %s165
      %p174 = scmp.eq.s32.totalorder %s28, 0
      %p175 = por %p173, %p174
      %p176 = scmp.ne.s32.totalorder %s164, %s165
      %p177 = scmp.eq.s32.totalorder %s29, 1
      %p178 = por %p176, %p177
      %p180 = scmp.ne.s32.totalorder %s165, %s179
      %p181 = scmp.eq.s32.totalorder %s29, 0
      %p182 = por %p180, %p181
      %s184 = sadd.s32 %s183, 1
      %p187 = scmp.eq.s32.totalorder %s23, 1
      %p188 = scmp.ne.s32.totalorder %s183, %s185
      %p189 = scmp.eq.s32.totalorder %s23, 0
      %p190 = por %p188, %p189
      %p191 = scmp.ne.s32.totalorder %s183, %s185
      %p192 = scmp.eq.s32.totalorder %s28, 1
      %p193 = por %p191, %p192
      %p194 = scmp.ne.s32.totalorder %s185, %s186
      %p195 = scmp.eq.s32.totalorder %s28, 0
      %p196 = por %p194, %p195
      %p197 = scmp.ne.s32.totalorder %s185, %s186
      %p198 = scmp.eq.s32.totalorder %s29, 1
      %p199 = por %p197, %p198
      %p201 = scmp.ne.s32.totalorder %s186, %s200
      %p202 = scmp.eq.s32.totalorder %s29, 0
      %p203 = por %p201, %p202
      %s205 = sadd.s32 %s204, 1
      %p208 = scmp.eq.s32.totalorder %s23, 1
      %p209 = scmp.ne.s32.totalorder %s204, %s206
      %p210 = scmp.eq.s32.totalorder %s23, 0
      %p211 = por %p209, %p210
      %p212 = scmp.ne.s32.totalorder %s204, %s206
      %p213 = scmp.eq.s32.totalorder %s28, 1
      %p214 = por %p212, %p213
      %p215 = scmp.ne.s32.totalorder %s206, %s207
      %p216 = scmp.eq.s32.totalorder %s28, 0
      %p217 = por %p215, %p216
      %p218 = scmp.ne.s32.totalorder %s206, %s207
      %p219 = scmp.eq.s32.totalorder %s29, 1
      %p220 = por %p218, %p219
      %p222 = scmp.ne.s32.totalorder %s207, %s221
      %p223 = scmp.eq.s32.totalorder %s29, 0
      %p224 = por %p222, %p223
      %s225 = ssub.s32 %s23, %s30
      %p226 = scmp.eq.s32.totalorder %s225, 0
      %s228 = sadd.s32 %s227, 1
      %s229 = scalar_select %p226, %s227, %s228
      %p232 = pneg %p226
      %p233 = scmp.eq.s32.totalorder %s23, 1
      %p234 = por %p232, %p233
      %p235 = scmp.ne.s32.totalorder %s227, %s230
      %p236 = scmp.eq.s32.totalorder %s23, 0
      %p237 = por %p235, %p236
      %p238 = scmp.ne.s32.totalorder %s227, %s230
      %p239 = scmp.eq.s32.totalorder %s28, 1
      %p240 = por %p238, %p239
      %p241 = scmp.ne.s32.totalorder %s230, %s231
      %p242 = scmp.eq.s32.totalorder %s28, 0
      %p243 = por %p241, %p242
      %p244 = scmp.ne.s32.totalorder %s230, %s231
      %p245 = scmp.eq.s32.totalorder %s29, 1
      %p246 = por %p244, %p245
      %p248 = scmp.ne.s32.totalorder %s231, %s247
      %p249 = scmp.eq.s32.totalorder %s29, 0
      %p250 = por %p248, %p249
      %p251 = scmp.le.s32.totalorder 1, %s23
      %p252 = scmp.lt.s32.totalorder %s23, 3
      %p253 = pnand %p251, %p252
      %p254 = pneg %p253
      // Predicated region
      $region9: #{tpu_custom_call.1} parent=5 // pred_check
        _
      $region10: #{tpu_custom_call.1} parent=5 // pred_check_branch
        %256 = sbr.rel (%p253) target = $region12
      $region11: #{tpu_custom_call.1} parent=5 // pred_region
        %s257 = ssub.s32 %s23, 1
        // Predicated region
        $region13: #{tpu_custom_call.1} parent=11 // pred_check
          %p258 = pneg %p70
        $region14: #{tpu_custom_call.1} parent=11 // pred_check_branch
          %260 = sbr.rel (%p258) target = $region16
        $region15: #{tpu_custom_call.1} parent=11 // pred_region
          %262 = vsyncadd [#allocation6], 0
          %s263 = sshll.u32 %s1, 4
          %s264 = int_to_ptr.hbm [resolvable:$true] %s263
          %s265 = sshll.u32 [#allocation5], 4
          %s266 = int_to_ptr.vmem [resolvable:$true] %s265
          %271 = dma.hbm_to_vmem [thread:$0]  %s264, 1024, %s266, [#allocation6], 64, 64, 4
        $region16: #{tpu_custom_call.1} parent=11 // pred_fallthru
          _
        // Predicated region
        $region17: #{tpu_custom_call.1} parent=11 // pred_check
          %p272 = pneg %p91
        $region18: #{tpu_custom_call.1} parent=11 // pred_check_branch
          %274 = sbr.rel (%p272) target = $region20
        $region19: #{tpu_custom_call.1} parent=11 // pred_region
          _
        $region20: #{tpu_custom_call.1} parent=11 // pred_fallthru
          _
        // Predicated region
        $region21: #{tpu_custom_call.1} parent=11 // pred_check
          %p275 = pneg %p112
        $region22: #{tpu_custom_call.1} parent=11 // pred_check_branch
          %277 = sbr.rel (%p275) target = $region24
        $region23: #{tpu_custom_call.1} parent=11 // pred_region
          %279 = vsyncadd [#allocation6], 0
          %s280 = sshll.u32 %s3, 4
          %s281 = int_to_ptr.hbm [resolvable:$true] %s280
          %s282 = sshll.u32 [#allocation7], 4
          %s283 = int_to_ptr.vmem [resolvable:$true] %s282
          %288 = dma.hbm_to_vmem [thread:$0]  %s281, 25600, %s283, [#allocation6], 64, 64, 4
        $region24: #{tpu_custom_call.1} parent=11 // pred_fallthru
          _
        // Predicated region
        $region25: #{tpu_custom_call.1} parent=11 // pred_check
          %p289 = pneg %p133
        $region26: #{tpu_custom_call.1} parent=11 // pred_check_branch
          %291 = sbr.rel (%p289) target = $region28
        $region27: #{tpu_custom_call.1} parent=11 // pred_region
          _
        $region28: #{tpu_custom_call.1} parent=11 // pred_fallthru
          _
        // Predicated region
        $region29: #{tpu_custom_call.1} parent=11 // pred_check
          %p292 = pneg %p154
        $region30: #{tpu_custom_call.1} parent=11 // pred_check_branch
          %294 = sbr.rel (%p292) target = $region32
        $region31: #{tpu_custom_call.1} parent=11 // pred_region
          %296 = vsyncadd [#allocation9], 0
          %s297 = sshll.u32 %s5, 4
          %s298 = int_to_ptr.hbm [resolvable:$true] %s297
          %s299 = sshll.u32 [#allocation8], 4
          %s300 = int_to_ptr.vmem [resolvable:$true] %s299
          %305 = dma.hbm_to_vmem [thread:$0]  %s298, 1024, %s300, [#allocation9], 64, 64, 4
        $region32: #{tpu_custom_call.1} parent=11 // pred_fallthru
          _
        // Predicated region
        $region33: #{tpu_custom_call.1} parent=11 // pred_check
          %p306 = pneg %p175
        $region34: #{tpu_custom_call.1} parent=11 // pred_check_branch
          %308 = sbr.rel (%p306) target = $region36
        $region35: #{tpu_custom_call.1} parent=11 // pred_region
          _
        $region36: #{tpu_custom_call.1} parent=11 // pred_fallthru
          _
        // Predicated region
        $region37: #{tpu_custom_call.1} parent=11 // pred_check
          %p309 = pneg %p196
        $region38: #{tpu_custom_call.1} parent=11 // pred_check_branch
          %311 = sbr.rel (%p309) target = $region40
        $region39: #{tpu_custom_call.1} parent=11 // pred_region
          %313 = vsyncadd [#allocation9], 0
          %s314 = sshll.u32 %s7, 4
          %s315 = int_to_ptr.hbm [resolvable:$true] %s314
          %s316 = sshll.u32 [#allocation10], 4
          %s317 = int_to_ptr.vmem [resolvable:$true] %s316
          %322 = dma.hbm_to_vmem [thread:$0]  %s315, 1024, %s317, [#allocation9], 64, 64, 4
        $region40: #{tpu_custom_call.1} parent=11 // pred_fallthru
          _
        // Predicated region
        $region41: #{tpu_custom_call.1} parent=11 // pred_check
          %p323 = pneg %p217
        $region42: #{tpu_custom_call.1} parent=11 // pred_check_branch
          %325 = sbr.rel (%p323) target = $region44
        $region43: #{tpu_custom_call.1} parent=11 // pred_region
          _
        $region44: #{tpu_custom_call.1} parent=11 // pred_fallthru
          _
      $region12: #{tpu_custom_call.1} parent=5 // pred_fallthru
        _
      %p326 = scmp.lt.s32.totalorder %s23, 2
      // Predicated region
      $region45: #{tpu_custom_call.1} parent=5 // pred_check
        %p327 = pneg %p326
      $region46: #{tpu_custom_call.1} parent=5 // pred_check_branch
        %329 = sbr.rel (%p327) target = $region48
      $region47: #{tpu_custom_call.1} parent=5 // pred_region
        // Predicated region
        $region49: #{tpu_custom_call.1} parent=47 // pred_check
          %p330 = pneg %p43
        $region50: #{tpu_custom_call.1} parent=47 // pred_check_branch
          %332 = sbr.rel (%p330) target = $region52
        $region51: #{tpu_custom_call.1} parent=47 // pred_region
          %s333 = sand.u32 %s33, 1
          %s334 = scalar_lea.sflag [#allocation3], %s333
          %s335 = sand.u32 %s33, 1
          %s336 = smul.addr %s335, 72
          %s337 = scalar_lea.vmem [#allocation2], %s336
          %339 = vsyncadd %s334, 0
          %s340 = smul.addr %s23, 18
          %s341 = smul.addr %s340, 4
          %s342 = scalar_lea.hbm %s0, %s341
          %s343 = sshll.u32 %s342, 4
          %s344 = int_to_ptr.hbm [resolvable:$true] %s343
          %s345 = sshll.u32 %s337, 4
          %s346 = int_to_ptr.vmem [resolvable:$true] %s345
          %351 = dma.hbm_to_vmem [thread:$0]  %s344, 1152, %s346, %s334, 64, 64, 4
        $region52: #{tpu_custom_call.1} parent=47 // pred_fallthru
          _
      $region48: #{tpu_custom_call.1} parent=5 // pred_fallthru
        _
      %p352 = scmp.le.s32.totalorder 1, %s23
      %p353 = scmp.lt.s32.totalorder %s23, 3
      %p354 = pnand %p352, %p353
      %p355 = pneg %p354
      // Predicated region
      $region53: #{tpu_custom_call.1} parent=5 // pred_check
        _
      $region54: #{tpu_custom_call.1} parent=5 // pred_check_branch
        %357 = sbr.rel (%p354) target = $region56
      $region55: #{tpu_custom_call.1} parent=5 // pred_region
        %s358 = ssub.s32 %s23, 1
        %s359 = sand.u32 %s36, 1
        %s360 = scalar_lea.sflag [#allocation3], %s359
        %s361 = sand.u32 %s36, 1
        %s362 = smul.addr %s361, 72
        %s363 = scalar_lea.vmem [#allocation2], %s362
        // Predicated region
        $region57: #{tpu_custom_call.1} parent=55 // pred_check
          %p364 = pneg %p49
        $region58: #{tpu_custom_call.1} parent=55 // pred_check_branch
          %366 = sbr.rel (%p364) target = $region60
        $region59: #{tpu_custom_call.1} parent=55 // pred_region
          %368 = dma.done %s360, 1152
        $region60: #{tpu_custom_call.1} parent=55 // pred_fallthru
          _
        // Predicated region
        $region61: #{tpu_custom_call.1} parent=55 // pred_check
          %p369 = pneg %p70
        $region62: #{tpu_custom_call.1} parent=55 // pred_check_branch
          %371 = sbr.rel (%p369) target = $region64
        $region63: #{tpu_custom_call.1} parent=55 // pred_region
          %373 = dma.done [#allocation6], 1024
        $region64: #{tpu_custom_call.1} parent=55 // pred_fallthru
          _
        // Predicated region
        $region65: #{tpu_custom_call.1} parent=55 // pred_check
          %p374 = pneg %p112
        $region66: #{tpu_custom_call.1} parent=55 // pred_check_branch
          %376 = sbr.rel (%p374) target = $region68
        $region67: #{tpu_custom_call.1} parent=55 // pred_region
          %378 = dma.done [#allocation6], 25600
        $region68: #{tpu_custom_call.1} parent=55 // pred_fallthru
          _
        // Predicated region
        $region69: #{tpu_custom_call.1} parent=55 // pred_check
          %p379 = pneg %p154
        $region70: #{tpu_custom_call.1} parent=55 // pred_check_branch
          %381 = sbr.rel (%p379) target = $region72
        $region71: #{tpu_custom_call.1} parent=55 // pred_region
          %383 = dma.done [#allocation9], 1024
        $region72: #{tpu_custom_call.1} parent=55 // pred_fallthru
          _
        // Predicated region
        $region73: #{tpu_custom_call.1} parent=55 // pred_check
          %p384 = pneg %p196
        $region74: #{tpu_custom_call.1} parent=55 // pred_check_branch
          %386 = sbr.rel (%p384) target = $region76
        $region75: #{tpu_custom_call.1} parent=55 // pred_region
          %388 = dma.done [#allocation9], 1024
        $region76: #{tpu_custom_call.1} parent=55 // pred_fallthru
          _
        %s389 = sand.u32 %s36, 1
        %s390 = scalar_lea.sflag [#allocation3], %s389
        %s391 = sand.u32 %s36, 1
        %s392 = smul.addr %s391, 72
        %s393 = scalar_lea.vmem [#allocation2], %s392
        %p394 = pneg %p49
        %p395 = pneg %p46
        %p396 = pneg %p70
        %p397 = pneg %p67
        %p398 = pneg %p91
        %p399 = pneg %p88
        %p400 = pneg %p112
        %p401 = pneg %p109
        %p402 = pneg %p133
        %p403 = pneg %p130
        %p404 = pneg %p154
        %p405 = pneg %p151
        %p406 = pneg %p175
        %p407 = pneg %p172
        %p408 = pneg %p196
        %p409 = pneg %p193
        %p410 = pneg %p217
        %p411 = pneg %p214
        %p412 = pneg %p243
        %p413 = pneg %p240
        %s414 = sand.u32 %s230, 1
        %s415 = scalar_lea.sflag [#allocation4], %s414
        %s416 = sand.u32 %s230, 1
        %s417 = scalar_lea.vmem [#allocation11], %s416
        %v418 = vld [vmem:[%s363] sm:$0xf]
        %v419 = vld [vmem:[%s363 + $0x4] sm:$0xf]
        %v420 = vld [vmem:[%s363 + $0x8] sm:$0xf]
        %v421 = vld [vmem:[%s363 + $0xc] sm:$0xf]
        %v422 = vld [vmem:[%s363 + $0x10] sm:$0xf]
        %v423 = vld [vmem:[%s363 + $0x14] sm:$0xf]
        %v424 = vld [vmem:[%s363 + $0x18] sm:$0xf]
        %v425 = vld [vmem:[%s363 + $0x1c] sm:$0xf]
        %v426 = vld [vmem:[%s363 + $0x20] sm:$0xf]
        %v427 = vld [vmem:[%s363 + $0x24] sm:$0xf]
        %v428 = vld [vmem:[%s363 + $0x28] sm:$0xf]
        %v429 = vld [vmem:[%s363 + $0x2c] sm:$0xf]
        %v430 = vld [vmem:[%s363 + $0x30] sm:$0xf]
        %v431 = vld [vmem:[%s363 + $0x34] sm:$0xf]
        %v432 = vld [vmem:[%s363 + $0x38] sm:$0xf]
        %v433 = vld [vmem:[%s363 + $0x3c] sm:$0xf]
        %v434 = vld [vmem:[%s363 + $0x40] sm:$0xf]
        %v435 = vld [vmem:[%s363 + $0x44] sm:$0xf]
        %v436 = vld [vmem:[#allocation5] sm:$0xf]
        %v437 = vld [vmem:[#allocation5 + $0x4] sm:$0xf]
        %v438 = vld [vmem:[#allocation5 + $0x8] sm:$0xf]
        %v439 = vld [vmem:[#allocation5 + $0xc] sm:$0xf]
        %v440 = vld [vmem:[#allocation5 + $0x10] sm:$0xf]
        %v441 = vld [vmem:[#allocation5 + $0x14] sm:$0xf]
        %v442 = vld [vmem:[#allocation5 + $0x18] sm:$0xf]
        %v443 = vld [vmem:[#allocation5 + $0x1c] sm:$0xf]
        %v444 = vld [vmem:[#allocation5 + $0x20] sm:$0xf]
        %v445 = vld [vmem:[#allocation5 + $0x24] sm:$0xf]
        %v446 = vld [vmem:[#allocation5 + $0x28] sm:$0xf]
        %v447 = vld [vmem:[#allocation5 + $0x2c] sm:$0xf]
        %v448 = vld [vmem:[#allocation5 + $0x30] sm:$0xf]
        %v449 = vld [vmem:[#allocation5 + $0x34] sm:$0xf]
        %v450 = vld [vmem:[#allocation5 + $0x38] sm:$0xf]
        %v451 = vld [vmem:[#allocation5 + $0x3c] sm:$0xf]
        %v470 = vunpack.c.l.b16 %v418
        %v471 = vunpack.c.l.b16 %v419
        %v472 = vunpack.c.l.b16 %v420
        %v473 = vunpack.c.l.b16 %v421
        %v474 = vunpack.c.l.b16 %v422
        %v475 = vunpack.c.l.b16 %v423
        %v476 = vunpack.c.l.b16 %v424
        %v477 = vunpack.c.l.b16 %v425
        %v478 = vunpack.c.l.b16 %v426
        %v479 = vunpack.c.l.b16 %v427
        %v480 = vunpack.c.l.b16 %v428
        %v481 = vunpack.c.l.b16 %v429
        %v482 = vunpack.c.l.b16 %v430
        %v483 = vunpack.c.l.b16 %v431
        %v484 = vunpack.c.l.b16 %v432
        %v485 = vunpack.c.l.b16 %v433
        %v486 = vunpack.c.l.b16 %v434
        %v487 = vunpack.c.l.b16 %v435
        %v488 = vpack.c.b16 %v471, %v470
        %v489 = vpack.c.b16 %v473, %v472
        %v490 = vpack.c.b16 %v475, %v474
        %v491 = vpack.c.b16 %v477, %v476
        %v492 = vpack.c.b16 %v479, %v478
        %v493 = vpack.c.b16 %v481, %v480
        %v494 = vpack.c.b16 %v483, %v482
        %v495 = vpack.c.b16 %v485, %v484
        %v496 = vpack.c.b16 %v487, %v486
        %v522 = vunpack.c.l.b16 %v436
        %v523 = vunpack.c.l.b16 %v437
        %v524 = vunpack.c.l.b16 %v438
        %v525 = vunpack.c.l.b16 %v439
        %v526 = vunpack.c.l.b16 %v440
        %v527 = vunpack.c.l.b16 %v441
        %v528 = vunpack.c.l.b16 %v442
        %v529 = vunpack.c.l.b16 %v443
        %v530 = vunpack.c.l.b16 %v444
        %v531 = vunpack.c.l.b16 %v445
        %v532 = vunpack.c.l.b16 %v446
        %v533 = vunpack.c.l.b16 %v447
        %v534 = vunpack.c.l.b16 %v448
        %v535 = vunpack.c.l.b16 %v449
        %v536 = vunpack.c.l.b16 %v450
        %v537 = vunpack.c.l.b16 %v451
        %v538 = vpack.c.b16 %v523, %v522
        %v539 = vpack.c.b16 %v525, %v524
        %v540 = vpack.c.b16 %v527, %v526
        %v541 = vpack.c.b16 %v529, %v528
        %v542 = vpack.c.b16 %v531, %v530
        %v543 = vpack.c.b16 %v533, %v532
        %v544 = vpack.c.b16 %v535, %v534
        %v545 = vpack.c.b16 %v537, %v536
        %554 = vmatpush.bf16.msra.mxu0 %v545
        %555 = vmatpush.bf16.msra.mxu0 %v544
        %556 = vmatpush.bf16.msra.mxu0 %v543
        %557 = vmatpush.bf16.msra.mxu0 %v542
        %558 = vmatpush.bf16.msra.mxu0 %v541
        %559 = vmatpush.bf16.msra.mxu0 %v540
        %560 = vmatpush.bf16.msra.mxu0 %v539
        %561 = vmatpush.bf16.msra.mxu0 %v538
        %562 = vmatmul.bf16.gmra.mxu0 %v488
        %v563 = vpop.f32.mrf.mxu0
        %v564 = vadd.f32 0.0, %v563
        %v565 = vpop.f32.mrf.mxu0
        %v566 = vadd.f32 0.0, %v565
        %567 = vmatmul.bf16.gmra.mxu0 %v489
        %v568 = vpop.f32.mrf.mxu0
        %v569 = vadd.f32 0.0, %v568
        %v570 = vpop.f32.mrf.mxu0
        %v571 = vadd.f32 0.0, %v570
        %572 = vmatmul.bf16.gmra.mxu0 %v490
        %v573 = vpop.f32.mrf.mxu0
        %v574 = vadd.f32 0.0, %v573
        %v575 = vpop.f32.mrf.mxu0
        %v576 = vadd.f32 0.0, %v575
        %577 = vmatmul.bf16.gmra.mxu0 %v491
        %v578 = vpop.f32.mrf.mxu0
        %v579 = vadd.f32 0.0, %v578
        %v580 = vpop.f32.mrf.mxu0
        %v581 = vadd.f32 0.0, %v580
        %582 = vmatmul.bf16.gmra.mxu0 %v492
        %v583 = vpop.f32.mrf.mxu0
        %v584 = vadd.f32 0.0, %v583
        %v585 = vpop.f32.mrf.mxu0
        %v586 = vadd.f32 0.0, %v585
        %587 = vmatmul.bf16.gmra.mxu0 %v493
        %v588 = vpop.f32.mrf.mxu0
        %v589 = vadd.f32 0.0, %v588
        %v590 = vpop.f32.mrf.mxu0
        %v591 = vadd.f32 0.0, %v590
        %592 = vmatmul.bf16.gmra.mxu0 %v494
        %v593 = vpop.f32.mrf.mxu0
        %v594 = vadd.f32 0.0, %v593
        %v595 = vpop.f32.mrf.mxu0
        %v596 = vadd.f32 0.0, %v595
        %597 = vmatmul.bf16.gmra.mxu0 %v495
        %v598 = vpop.f32.mrf.mxu0
        %v599 = vadd.f32 0.0, %v598
        %v600 = vpop.f32.mrf.mxu0
        %v601 = vadd.f32 0.0, %v600
        %602 = vmatmul.bf16.gmra.mxu0 %v496
        %v603 = vpop.f32.mrf.mxu0
        %v604 = vadd.f32 0.0, %v603
        %v605 = vpop.f32.mrf.mxu0
        %v606 = vadd.f32 0.0, %v605
        %607 = vdwg.mxu0
        %v608 = vld [vmem:[%s2] sm:$0x1]
        %v627 = vrot.slane %v564, 4
        %v628 = vrot.slane %v566, 4
        %v629 = vrot.slane %v569, 4
        %v630 = vrot.slane %v571, 4
        %v631 = vrot.slane %v574, 4
        %v632 = vrot.slane %v576, 4
        %v633 = vrot.slane %v579, 4
        %v634 = vrot.slane %v581, 4
        %v635 = vrot.slane %v584, 4
        %v636 = vrot.slane %v586, 4
        %v637 = vrot.slane %v589, 4
        %v638 = vrot.slane %v591, 4
        %v639 = vrot.slane %v594, 4
        %v640 = vrot.slane %v596, 4
        %v641 = vrot.slane %v599, 4
        %v642 = vrot.slane %v601, 4
        %v643 = vrot.slane %v604, 4
        %v644 = vrot.slane %v606, 4
        %v663 = vmax.f32 %v564, %v628
        %v664 = vmax.f32 %v627, %v569
        %v665 = vmax.f32 %v566, %v629
        %v666 = vmax.f32 %v571, %v631
        %v667 = vmax.f32 %v630, %v576
        %v668 = vmax.f32 %v574, %v632
        %v669 = vmax.f32 %v579, %v634
        %v670 = vmax.f32 %v633, %v584
        %v671 = vmax.f32 %v581, %v635
        %v672 = vmax.f32 %v586, %v637
        %v673 = vmax.f32 %v636, %v591
        %v674 = vmax.f32 %v589, %v638
        %v675 = vmax.f32 %v594, %v640
        %v676 = vmax.f32 %v639, %v599
        %v677 = vmax.f32 %v596, %v641
        %v678 = vmax.f32 %v601, %v643
        %v679 = vmax.f32 %v642, %v606
        %v680 = vmax.f32 %v604, %v644
        %v699 = vrot.slane %v663, 2
        %v700 = vrot.slane %v664, 2
        %v701 = vrot.slane %v665, 2
        %v702 = vrot.slane %v666, 2
        %v703 = vrot.slane %v667, 2
        %v704 = vrot.slane %v668, 2
        %v705 = vrot.slane %v669, 2
        %v706 = vrot.slane %v670, 2
        %v707 = vrot.slane %v671, 2
        %v708 = vrot.slane %v672, 2
        %v709 = vrot.slane %v673, 2
        %v710 = vrot.slane %v674, 2
        %v711 = vrot.slane %v675, 2
        %v712 = vrot.slane %v676, 2
        %v713 = vrot.slane %v677, 2
        %v714 = vrot.slane %v678, 2
        %v715 = vrot.slane %v679, 2
        %v716 = vrot.slane %v680, 2
        %vm717 = vcmask 1041408
        %v718 = vsel %vm717, %v663, %v699
        %vm719 = vcmask 1043458
        %v720 = vsel %vm719, %v663, %v699
        %v721 = vrot.slane %v720, 2
        %v722 = vsel %vm717, %v664, %v700
        %v723 = vsel %vm719, %v664, %v700
        %v724 = vrot.slane %v723, 2
        %v725 = vsel %vm717, %v665, %v701
        %v726 = vsel %vm719, %v665, %v701
        %v727 = vrot.slane %v726, 2
        %v728 = vsel %vm717, %v666, %v702
        %v729 = vsel %vm719, %v666, %v702
        %v730 = vrot.slane %v729, 2
        %v731 = vsel %vm717, %v667, %v703
        %v732 = vsel %vm719, %v667, %v703
        %v733 = vrot.slane %v732, 2
        %v734 = vsel %vm717, %v668, %v704
        %v735 = vsel %vm719, %v668, %v704
        %v736 = vrot.slane %v735, 2
        %v737 = vsel %vm717, %v669, %v705
        %v738 = vsel %vm719, %v669, %v705
        %v739 = vrot.slane %v738, 2
        %v740 = vsel %vm717, %v670, %v706
        %v741 = vsel %vm719, %v670, %v706
        %v742 = vrot.slane %v741, 2
        %v743 = vsel %vm717, %v671, %v707
        %v744 = vsel %vm719, %v671, %v707
        %v745 = vrot.slane %v744, 2
        %v746 = vsel %vm717, %v672, %v708
        %v747 = vsel %vm719, %v672, %v708
        %v748 = vrot.slane %v747, 2
        %v749 = vsel %vm717, %v673, %v709
        %v750 = vsel %vm719, %v673, %v709
        %v751 = vrot.slane %v750, 2
        %v752 = vsel %vm717, %v674, %v710
        %v753 = vsel %vm719, %v674, %v710
        %v754 = vrot.slane %v753, 2
        %v755 = vsel %vm717, %v675, %v711
        %v756 = vsel %vm719, %v675, %v711
        %v757 = vrot.slane %v756, 2
        %v758 = vsel %vm717, %v676, %v712
        %v759 = vsel %vm719, %v676, %v712
        %v760 = vrot.slane %v759, 2
        %v761 = vsel %vm717, %v677, %v713
        %v762 = vsel %vm719, %v677, %v713
        %v763 = vrot.slane %v762, 2
        %v764 = vsel %vm717, %v678, %v714
        %v765 = vsel %vm719, %v678, %v714
        %v766 = vrot.slane %v765, 2
        %v767 = vsel %vm717, %v679, %v715
        %v768 = vsel %vm719, %v679, %v715
        %v769 = vrot.slane %v768, 2
        %v770 = vsel %vm717, %v680, %v716
        %v771 = vsel %vm719, %v680, %v716
        %v772 = vrot.slane %v771, 2
        %v809 = vrot.slane %v718, 7
        %v810 = vrot.slane %v809, 2
        %v811 = vrot.slane %v721, 7
        %v812 = vrot.slane %v811, 2
        %v813 = vrot.slane %v722, 7
        %v814 = vrot.slane %v813, 2
        %v815 = vrot.slane %v724, 7
        %v816 = vrot.slane %v815, 2
        %v817 = vrot.slane %v725, 7
        %v818 = vrot.slane %v817, 2
        %v819 = vrot.slane %v727, 7
        %v820 = vrot.slane %v819, 2
        %v821 = vrot.slane %v728, 7
        %v822 = vrot.slane %v821, 2
        %v823 = vrot.slane %v730, 7
        %v824 = vrot.slane %v823, 2
        %v825 = vrot.slane %v731, 7
        %v826 = vrot.slane %v825, 2
        %v827 = vrot.slane %v733, 7
        %v828 = vrot.slane %v827, 2
        %v829 = vrot.slane %v734, 7
        %v830 = vrot.slane %v829, 2
        %v831 = vrot.slane %v736, 7
        %v832 = vrot.slane %v831, 2
        %v833 = vrot.slane %v737, 7
        %v834 = vrot.slane %v833, 2
        %v835 = vrot.slane %v739, 7
        %v836 = vrot.slane %v835, 2
        %v837 = vrot.slane %v740, 7
        %v838 = vrot.slane %v837, 2
        %v839 = vrot.slane %v742, 7
        %v840 = vrot.slane %v839, 2
        %v841 = vrot.slane %v743, 7
        %v842 = vrot.slane %v841, 2
        %v843 = vrot.slane %v745, 7
        %v844 = vrot.slane %v843, 2
        %v845 = vrot.slane %v746, 7
        %v846 = vrot.slane %v845, 2
        %v847 = vrot.slane %v748, 7
        %v848 = vrot.slane %v847, 2
        %v849 = vrot.slane %v749, 7
        %v850 = vrot.slane %v849, 2
        %v851 = vrot.slane %v751, 7
        %v852 = vrot.slane %v851, 2
        %v853 = vrot.slane %v752, 7
        %v854 = vrot.slane %v853, 2
        %v855 = vrot.slane %v754, 7
        %v856 = vrot.slane %v855, 2
        %v857 = vrot.slane %v755, 7
        %v858 = vrot.slane %v857, 2
        %v859 = vrot.slane %v757, 7
        %v860 = vrot.slane %v859, 2
        %v861 = vrot.slane %v758, 7
        %v862 = vrot.slane %v861, 2
        %v863 = vrot.slane %v760, 7
        %v864 = vrot.slane %v863, 2
        %v865 = vrot.slane %v761, 7
        %v866 = vrot.slane %v865, 2
        %v867 = vrot.slane %v763, 7
        %v868 = vrot.slane %v867, 2
        %v869 = vrot.slane %v764, 7
        %v870 = vrot.slane %v869, 2
        %v871 = vrot.slane %v766, 7
        %v872 = vrot.slane %v871, 2
        %v873 = vrot.slane %v767, 7
        %v874 = vrot.slane %v873, 2
        %v875 = vrot.slane %v769, 7
        %v876 = vrot.slane %v875, 2
        %v877 = vrot.slane %v770, 7
        %v878 = vrot.slane %v877, 2
        %v879 = vrot.slane %v772, 7
        %v880 = vrot.slane %v879, 2
        %v917 = vmax.f32 %v718, %v810
        %v918 = vmax.f32 %v721, %v812
        %v919 = vmax.f32 %v722, %v814
        %v920 = vmax.f32 %v724, %v816
        %v921 = vmax.f32 %v725, %v818
        %v922 = vmax.f32 %v727, %v820
        %v923 = vmax.f32 %v728, %v822
        %v924 = vmax.f32 %v730, %v824
        %v925 = vmax.f32 %v731, %v826
        %v926 = vmax.f32 %v733, %v828
        %v927 = vmax.f32 %v734, %v830
        %v928 = vmax.f32 %v736, %v832
        %v929 = vmax.f32 %v737, %v834
        %v930 = vmax.f32 %v739, %v836
        %v931 = vmax.f32 %v740, %v838
        %v932 = vmax.f32 %v742, %v840
        %v933 = vmax.f32 %v743, %v842
        %v934 = vmax.f32 %v745, %v844
        %v935 = vmax.f32 %v746, %v846
        %v936 = vmax.f32 %v748, %v848
        %v937 = vmax.f32 %v749, %v850
        %v938 = vmax.f32 %v751, %v852
        %v939 = vmax.f32 %v752, %v854
        %v940 = vmax.f32 %v754, %v856
        %v941 = vmax.f32 %v755, %v858
        %v942 = vmax.f32 %v757, %v860
        %v943 = vmax.f32 %v758, %v862
        %v944 = vmax.f32 %v760, %v864
        %v945 = vmax.f32 %v761, %v866
        %v946 = vmax.f32 %v763, %v868
        %v947 = vmax.f32 %v764, %v870
        %v948 = vmax.f32 %v766, %v872
        %v949 = vmax.f32 %v767, %v874
        %v950 = vmax.f32 %v769, %v876
        %v951 = vmax.f32 %v770, %v878
        %v952 = vmax.f32 %v772, %v880
        %v954 = vperm.slane %v608, 0
        %v955 = vrot.slane %v954, 2
        %v956 = vrot.slane %v954, 4
        %v957 = vrot.slane %v954, 1
        %v958 = vrot.slane %v955, 1
        %v959 = vrot.slane %v956, 1
        %v966 = vadd.f32 %v917, %v954
        %v967 = vadd.f32 %v918, %v957
        %v968 = vadd.f32 %v919, %v955
        %v969 = vadd.f32 %v920, %v958
        %v970 = vadd.f32 %v921, %v956
        %v971 = vadd.f32 %v922, %v959
        %v972 = vadd.f32 %v923, %v954
        %v973 = vadd.f32 %v924, %v957
        %v974 = vadd.f32 %v925, %v955
        %v975 = vadd.f32 %v926, %v958
        %v976 = vadd.f32 %v927, %v956
        %v977 = vadd.f32 %v928, %v959
        %v978 = vadd.f32 %v929, %v954
        %v979 = vadd.f32 %v930, %v957
        %v980 = vadd.f32 %v931, %v955
        %v981 = vadd.f32 %v932, %v958
        %v982 = vadd.f32 %v933, %v956
        %v983 = vadd.f32 %v934, %v959
        %v984 = vadd.f32 %v935, %v954
        %v985 = vadd.f32 %v936, %v957
        %v986 = vadd.f32 %v937, %v955
        %v987 = vadd.f32 %v938, %v958
        %v988 = vadd.f32 %v939, %v956
        %v989 = vadd.f32 %v940, %v959
        %v990 = vadd.f32 %v941, %v954
        %v991 = vadd.f32 %v942, %v957
        %v992 = vadd.f32 %v943, %v955
        %v993 = vadd.f32 %v944, %v958
        %v994 = vadd.f32 %v945, %v956
        %v995 = vadd.f32 %v946, %v959
        %v996 = vadd.f32 %v947, %v954
        %v997 = vadd.f32 %v948, %v957
        %v998 = vadd.f32 %v949, %v955
        %v999 = vadd.f32 %v950, %v958
        %v1000 = vadd.f32 %v951, %v956
        %v1001 = vadd.f32 %v952, %v959
        %vm1002 = vcmp.ge.f32.partialorder %v966, 0.0
        %vm1003 = vcmp.ge.f32.partialorder %v967, 0.0
        %vm1004 = vcmp.ge.f32.partialorder %v968, 0.0
        %vm1005 = vcmp.ge.f32.partialorder %v969, 0.0
        %vm1006 = vcmp.ge.f32.partialorder %v970, 0.0
        %vm1007 = vcmp.ge.f32.partialorder %v971, 0.0
        %vm1008 = vcmp.ge.f32.partialorder %v972, 0.0
        %vm1009 = vcmp.ge.f32.partialorder %v973, 0.0
        %vm1010 = vcmp.ge.f32.partialorder %v974, 0.0
        %vm1011 = vcmp.ge.f32.partialorder %v975, 0.0
        %vm1012 = vcmp.ge.f32.partialorder %v976, 0.0
        %vm1013 = vcmp.ge.f32.partialorder %v977, 0.0
        %vm1014 = vcmp.ge.f32.partialorder %v978, 0.0
        %vm1015 = vcmp.ge.f32.partialorder %v979, 0.0
        %vm1016 = vcmp.ge.f32.partialorder %v980, 0.0
        %vm1017 = vcmp.ge.f32.partialorder %v981, 0.0
        %vm1018 = vcmp.ge.f32.partialorder %v982, 0.0
        %vm1019 = vcmp.ge.f32.partialorder %v983, 0.0
        %vm1020 = vcmp.ge.f32.partialorder %v984, 0.0
        %vm1021 = vcmp.ge.f32.partialorder %v985, 0.0
        %vm1022 = vcmp.ge.f32.partialorder %v986, 0.0
        %vm1023 = vcmp.ge.f32.partialorder %v987, 0.0
        %vm1024 = vcmp.ge.f32.partialorder %v988, 0.0
        %vm1025 = vcmp.ge.f32.partialorder %v989, 0.0
        %vm1026 = vcmp.ge.f32.partialorder %v990, 0.0
        %vm1027 = vcmp.ge.f32.partialorder %v991, 0.0
        %vm1028 = vcmp.ge.f32.partialorder %v992, 0.0
        %vm1029 = vcmp.ge.f32.partialorder %v993, 0.0
        %vm1030 = vcmp.ge.f32.partialorder %v994, 0.0
        %vm1031 = vcmp.ge.f32.partialorder %v995, 0.0
        %vm1032 = vcmp.ge.f32.partialorder %v996, 0.0
        %vm1033 = vcmp.ge.f32.partialorder %v997, 0.0
        %vm1034 = vcmp.ge.f32.partialorder %v998, 0.0
        %vm1035 = vcmp.ge.f32.partialorder %v999, 0.0
        %vm1036 = vcmp.ge.f32.partialorder %v1000, 0.0
        %vm1037 = vcmp.ge.f32.partialorder %v1001, 0.0
        %v1038 = vmul.f32 %v966, 0.01
        %v1039 = vmul.f32 %v967, 0.01
        %v1040 = vmul.f32 %v968, 0.01
        %v1041 = vmul.f32 %v969, 0.01
        %v1042 = vmul.f32 %v970, 0.01
        %v1043 = vmul.f32 %v971, 0.01
        %v1044 = vmul.f32 %v972, 0.01
        %v1045 = vmul.f32 %v973, 0.01
        %v1046 = vmul.f32 %v974, 0.01
        %v1047 = vmul.f32 %v975, 0.01
        %v1048 = vmul.f32 %v976, 0.01
        %v1049 = vmul.f32 %v977, 0.01
        %v1050 = vmul.f32 %v978, 0.01
        %v1051 = vmul.f32 %v979, 0.01
        %v1052 = vmul.f32 %v980, 0.01
        %v1053 = vmul.f32 %v981, 0.01
        %v1054 = vmul.f32 %v982, 0.01
        %v1055 = vmul.f32 %v983, 0.01
        %v1056 = vmul.f32 %v984, 0.01
        %v1057 = vmul.f32 %v985, 0.01
        %v1058 = vmul.f32 %v986, 0.01
        %v1059 = vmul.f32 %v987, 0.01
        %v1060 = vmul.f32 %v988, 0.01
        %v1061 = vmul.f32 %v989, 0.01
        %v1062 = vmul.f32 %v990, 0.01
        %v1063 = vmul.f32 %v991, 0.01
        %v1064 = vmul.f32 %v992, 0.01
        %v1065 = vmul.f32 %v993, 0.01
        %v1066 = vmul.f32 %v994, 0.01
        %v1067 = vmul.f32 %v995, 0.01
        %v1068 = vmul.f32 %v996, 0.01
        %v1069 = vmul.f32 %v997, 0.01
        %v1070 = vmul.f32 %v998, 0.01
        %v1071 = vmul.f32 %v999, 0.01
        %v1072 = vmul.f32 %v1000, 0.01
        %v1073 = vmul.f32 %v1001, 0.01
        %v1074 = vsel %vm1002, %v966, %v1038
        %v1075 = vsel %vm1003, %v967, %v1039
        %v1076 = vsel %vm1004, %v968, %v1040
        %v1077 = vsel %vm1005, %v969, %v1041
        %v1078 = vsel %vm1006, %v970, %v1042
        %v1079 = vsel %vm1007, %v971, %v1043
        %v1080 = vsel %vm1008, %v972, %v1044
        %v1081 = vsel %vm1009, %v973, %v1045
        %v1082 = vsel %vm1010, %v974, %v1046
        %v1083 = vsel %vm1011, %v975, %v1047
        %v1084 = vsel %vm1012, %v976, %v1048
        %v1085 = vsel %vm1013, %v977, %v1049
        %v1086 = vsel %vm1014, %v978, %v1050
        %v1087 = vsel %vm1015, %v979, %v1051
        %v1088 = vsel %vm1016, %v980, %v1052
        %v1089 = vsel %vm1017, %v981, %v1053
        %v1090 = vsel %vm1018, %v982, %v1054
        %v1091 = vsel %vm1019, %v983, %v1055
        %v1092 = vsel %vm1020, %v984, %v1056
        %v1093 = vsel %vm1021, %v985, %v1057
        %v1094 = vsel %vm1022, %v986, %v1058
        %v1095 = vsel %vm1023, %v987, %v1059
        %v1096 = vsel %vm1024, %v988, %v1060
        %v1097 = vsel %vm1025, %v989, %v1061
        %v1098 = vsel %vm1026, %v990, %v1062
        %v1099 = vsel %vm1027, %v991, %v1063
        %v1100 = vsel %vm1028, %v992, %v1064
        %v1101 = vsel %vm1029, %v993, %v1065
        %v1102 = vsel %vm1030, %v994, %v1066
        %v1103 = vsel %vm1031, %v995, %v1067
        %v1104 = vsel %vm1032, %v996, %v1068
        %v1105 = vsel %vm1033, %v997, %v1069
        %v1106 = vsel %vm1034, %v998, %v1070
        %v1107 = vsel %vm1035, %v999, %v1071
        %v1108 = vsel %vm1036, %v1000, %v1072
        %v1109 = vsel %vm1037, %v1001, %v1073
        %v1110 = vpack.c.bf16 %v1074, %v1074
        %v1111 = vpack.c.bf16 %v1075, %v1075
        %v1112 = vpack.c.bf16 %v1076, %v1076
        %v1113 = vpack.c.bf16 %v1077, %v1077
        %v1114 = vpack.c.bf16 %v1078, %v1078
        %v1115 = vpack.c.bf16 %v1079, %v1079
        %v1116 = vpack.c.bf16 %v1080, %v1080
        %v1117 = vpack.c.bf16 %v1081, %v1081
        %v1118 = vpack.c.bf16 %v1082, %v1082
        %v1119 = vpack.c.bf16 %v1083, %v1083
        %v1120 = vpack.c.bf16 %v1084, %v1084
        %v1121 = vpack.c.bf16 %v1085, %v1085
        %v1122 = vpack.c.bf16 %v1086, %v1086
        %v1123 = vpack.c.bf16 %v1087, %v1087
        %v1124 = vpack.c.bf16 %v1088, %v1088
        %v1125 = vpack.c.bf16 %v1089, %v1089
        %v1126 = vpack.c.bf16 %v1090, %v1090
        %v1127 = vpack.c.bf16 %v1091, %v1091
        %v1128 = vpack.c.bf16 %v1092, %v1092
        %v1129 = vpack.c.bf16 %v1093, %v1093
        %v1130 = vpack.c.bf16 %v1094, %v1094
        %v1131 = vpack.c.bf16 %v1095, %v1095
        %v1132 = vpack.c.bf16 %v1096, %v1096
        %v1133 = vpack.c.bf16 %v1097, %v1097
        %v1134 = vpack.c.bf16 %v1098, %v1098
        %v1135 = vpack.c.bf16 %v1099, %v1099
        %v1136 = vpack.c.bf16 %v1100, %v1100
        %v1137 = vpack.c.bf16 %v1101, %v1101
        %v1138 = vpack.c.bf16 %v1102, %v1102
        %v1139 = vpack.c.bf16 %v1103, %v1103
        %v1140 = vpack.c.bf16 %v1104, %v1104
        %v1141 = vpack.c.bf16 %v1105, %v1105
        %v1142 = vpack.c.bf16 %v1106, %v1106
        %v1143 = vpack.c.bf16 %v1107, %v1107
        %v1144 = vpack.c.bf16 %v1108, %v1108
        %v1145 = vpack.c.bf16 %v1109, %v1109
        %v1150 = vunpack.c.l.b16 %v1110
        %v1151 = vunpack.c.l.b16 %v1111
        %v1152 = vunpack.c.l.b16 %v1116
        %v1153 = vunpack.c.l.b16 %v1117
        %v1154 = vpack.c.b16 %v1150, %v1150
        %v1155 = vpack.c.b16 %v1151, %v1151
        %v1156 = vpack.c.b16 %v1152, %v1152
        %v1157 = vpack.c.b16 %v1153, %v1153
        %v1158 = vunpack.c.l.b16 %v1154
        %v1159 = vunpack.c.l.b16 %v1155
        %v1160 = vunpack.c.l.b16 %v1156
        %v1161 = vunpack.c.l.b16 %v1157
        %v1162 = vrot.slane %v1159, 7
        %vm1163 = vcmask 1041409
        %v1164 = vsel %vm1163, %v1162, %v1158
        %v1165 = vrot.slane %v1160, 6
        %vm1166 = vcmask 1042434
        %v1167 = vsel %vm1166, %v1165, %v1164
        %v1168 = vrot.slane %v1161, 5
        %vm1169 = vcmask 1043459
        %v1170 = vsel %vm1169, %v1168, %v1167
        %v1171 = vpack.c.b16 %v1170, %v1170
        %v1175 = vunpack.c.l.b16 %v1112
        %v1176 = vunpack.c.l.b16 %v1118
        %v1177 = vpack.c.b16 %v1175, %v1175
        %v1178 = vpack.c.b16 %v1176, %v1176
        %v1179 = vunpack.c.l.b16 %v1177
        %v1180 = vunpack.c.l.b16 %v1178
        %v1181 = vrot.slane %v1179, 7
        %v1182 = vsel %vm1163, %v1181, %v1159
        %v1183 = vrot.slane %v1161, 6
        %v1184 = vsel %vm1166, %v1183, %v1182
        %v1185 = vrot.slane %v1180, 5
        %v1186 = vsel %vm1169, %v1185, %v1184
        %v1187 = vpack.c.b16 %v1186, %v1186
        %v1189 = vld [vmem:[#allocation7] sm:$0xf]
        %v1190 = vld [vmem:[#allocation7 + $0x4] sm:$0xf]
        %v1191 = vld [vmem:[#allocation7 + $0x8] sm:$0xf]
        %v1192 = vld [vmem:[#allocation7 + $0xc] sm:$0xf]
        %v1193 = vld [vmem:[#allocation7 + $0x10] sm:$0xf]
        %v1194 = vld [vmem:[#allocation7 + $0x14] sm:$0xf]
        %v1195 = vld [vmem:[#allocation7 + $0x18] sm:$0xf]
        %v1196 = vld [vmem:[#allocation7 + $0x1c] sm:$0xf]
        %v1197 = vld [vmem:[#allocation7 + $0x20] sm:$0xf]
        %v1198 = vld [vmem:[#allocation7 + $0x24] sm:$0xf]
        %v1199 = vld [vmem:[#allocation7 + $0x28] sm:$0xf]
        %v1200 = vld [vmem:[#allocation7 + $0x2c] sm:$0xf]
        %v1201 = vld [vmem:[#allocation7 + $0x30] sm:$0xf]
        %v1202 = vld [vmem:[#allocation7 + $0x34] sm:$0xf]
        %v1203 = vld [vmem:[#allocation7 + $0x38] sm:$0xf]
        %v1204 = vld [vmem:[#allocation7 + $0x3c] sm:$0xf]
        %v1205 = vld [vmem:[#allocation7 + $0x40] sm:$0xf]
        %v1206 = vld [vmem:[#allocation7 + $0x44] sm:$0xf]
        %v1207 = vld [vmem:[#allocation7 + $0x48] sm:$0xf]
        %v1208 = vld [vmem:[#allocation7 + $0x4c] sm:$0xf]
        %v1209 = vld [vmem:[#allocation7 + $0x50] sm:$0xf]
        %v1210 = vld [vmem:[#allocation7 + $0x54] sm:$0xf]
        %v1211 = vld [vmem:[#allocation7 + $0x58] sm:$0xf]
        %v1212 = vld [vmem:[#allocation7 + $0x5c] sm:$0xf]
        %v1213 = vld [vmem:[#allocation7 + $0x60] sm:$0xf]
        %v1214 = vld [vmem:[#allocation7 + $0x64] sm:$0xf]
        %v1215 = vld [vmem:[#allocation7 + $0x68] sm:$0xf]
        %v1216 = vld [vmem:[#allocation7 + $0x6c] sm:$0xf]
        %v1217 = vld [vmem:[#allocation7 + $0x70] sm:$0xf]
        %v1218 = vld [vmem:[#allocation7 + $0x74] sm:$0xf]
        %v1219 = vld [vmem:[#allocation7 + $0x78] sm:$0xf]
        %v1220 = vld [vmem:[#allocation7 + $0x7c] sm:$0xf]
        %v1223 = vunpack.c.l.b16 %v1113
        %v1224 = vunpack.c.l.b16 %v1119
        %v1225 = vpack.c.b16 %v1223, %v1223
        %v1226 = vpack.c.b16 %v1224, %v1224
        %v1227 = vunpack.c.l.b16 %v1225
        %v1228 = vunpack.c.l.b16 %v1226
        %v1229 = vrot.slane %v1227, 7
        %v1230 = vsel %vm1163, %v1229, %v1179
        %v1231 = vrot.slane %v1180, 6
        %v1232 = vsel %vm1166, %v1231, %v1230
        %v1233 = vrot.slane %v1228, 5
        %v1234 = vsel %vm1169, %v1233, %v1232
        %v1235 = vpack.c.b16 %v1234, %v1234
        %v1239 = vunpack.c.l.b16 %v1114
        %v1240 = vunpack.c.l.b16 %v1120
        %v1241 = vpack.c.b16 %v1239, %v1239
        %v1242 = vpack.c.b16 %v1240, %v1240
        %v1243 = vunpack.c.l.b16 %v1241
        %v1244 = vunpack.c.l.b16 %v1242
        %v1245 = vrot.slane %v1243, 7
        %v1246 = vsel %vm1163, %v1245, %v1227
        %v1247 = vrot.slane %v1228, 6
        %v1248 = vsel %vm1166, %v1247, %v1246
        %v1249 = vrot.slane %v1244, 5
        %v1250 = vsel %vm1169, %v1249, %v1248
        %v1251 = vpack.c.b16 %v1250, %v1250
        %s1253 = scalar_lea.vmem [#allocation7], 128
        %v1254 = vld [vmem:[%s1253] sm:$0xf]
        %v1255 = vld [vmem:[%s1253 + $0x4] sm:$0xf]
        %v1256 = vld [vmem:[%s1253 + $0x8] sm:$0xf]
        %v1257 = vld [vmem:[%s1253 + $0xc] sm:$0xf]
        %v1258 = vld [vmem:[%s1253 + $0x10] sm:$0xf]
        %v1259 = vld [vmem:[%s1253 + $0x14] sm:$0xf]
        %v1260 = vld [vmem:[%s1253 + $0x18] sm:$0xf]
        %v1261 = vld [vmem:[%s1253 + $0x1c] sm:$0xf]
        %v1262 = vld [vmem:[%s1253 + $0x20] sm:$0xf]
        %v1263 = vld [vmem:[%s1253 + $0x24] sm:$0xf]
        %v1264 = vld [vmem:[%s1253 + $0x28] sm:$0xf]
        %v1265 = vld [vmem:[%s1253 + $0x2c] sm:$0xf]
        %v1266 = vld [vmem:[%s1253 + $0x30] sm:$0xf]
        %v1267 = vld [vmem:[%s1253 + $0x34] sm:$0xf]
        %v1268 = vld [vmem:[%s1253 + $0x38] sm:$0xf]
        %v1269 = vld [vmem:[%s1253 + $0x3c] sm:$0xf]
        %v1270 = vld [vmem:[%s1253 + $0x40] sm:$0xf]
        %v1271 = vld [vmem:[%s1253 + $0x44] sm:$0xf]
        %v1272 = vld [vmem:[%s1253 + $0x48] sm:$0xf]
        %v1273 = vld [vmem:[%s1253 + $0x4c] sm:$0xf]
        %v1274 = vld [vmem:[%s1253 + $0x50] sm:$0xf]
        %v1275 = vld [vmem:[%s1253 + $0x54] sm:$0xf]
        %v1276 = vld [vmem:[%s1253 + $0x58] sm:$0xf]
        %v1277 = vld [vmem:[%s1253 + $0x5c] sm:$0xf]
        %v1278 = vld [vmem:[%s1253 + $0x60] sm:$0xf]
        %v1279 = vld [vmem:[%s1253 + $0x64] sm:$0xf]
        %v1280 = vld [vmem:[%s1253 + $0x68] sm:$0xf]
        %v1281 = vld [vmem:[%s1253 + $0x6c] sm:$0xf]
        %v1282 = vld [vmem:[%s1253 + $0x70] sm:$0xf]
        %v1283 = vld [vmem:[%s1253 + $0x74] sm:$0xf]
        %v1284 = vld [vmem:[%s1253 + $0x78] sm:$0xf]
        %v1285 = vld [vmem:[%s1253 + $0x7c] sm:$0xf]
        %v1318 = vunpack.c.l.b16 %v1254
        %v1319 = vunpack.c.l.b16 %v1255
        %v1320 = vunpack.c.l.b16 %v1256
        %v1321 = vunpack.c.l.b16 %v1257
        %v1322 = vunpack.c.l.b16 %v1258
        %v1323 = vunpack.c.l.b16 %v1259
        %v1324 = vunpack.c.l.b16 %v1260
        %v1325 = vunpack.c.l.b16 %v1261
        %v1326 = vunpack.c.l.b16 %v1262
        %v1327 = vunpack.c.l.b16 %v1263
        %v1328 = vunpack.c.l.b16 %v1264
        %v1329 = vunpack.c.l.b16 %v1265
        %v1330 = vunpack.c.l.b16 %v1266
        %v1331 = vunpack.c.l.b16 %v1267
        %v1332 = vunpack.c.l.b16 %v1268
        %v1333 = vunpack.c.l.b16 %v1269
        %v1334 = vunpack.c.l.b16 %v1270
        %v1335 = vunpack.c.l.b16 %v1271
        %v1336 = vunpack.c.l.b16 %v1272
        %v1337 = vunpack.c.l.b16 %v1273
        %v1338 = vunpack.c.l.b16 %v1274
        %v1339 = vunpack.c.l.b16 %v1275
        %v1340 = vunpack.c.l.b16 %v1276
        %v1341 = vunpack.c.l.b16 %v1277
        %v1342 = vunpack.c.l.b16 %v1278
        %v1343 = vunpack.c.l.b16 %v1279
        %v1344 = vunpack.c.l.b16 %v1280
        %v1345 = vunpack.c.l.b16 %v1281
        %v1346 = vunpack.c.l.b16 %v1282
        %v1347 = vunpack.c.l.b16 %v1283
        %v1348 = vunpack.c.l.b16 %v1284
        %v1349 = vunpack.c.l.b16 %v1285
        %v1350 = vpack.c.b16 %v1319, %v1318
        %v1351 = vpack.c.b16 %v1321, %v1320
        %v1352 = vpack.c.b16 %v1323, %v1322
        %v1353 = vpack.c.b16 %v1325, %v1324
        %v1354 = vpack.c.b16 %v1327, %v1326
        %v1355 = vpack.c.b16 %v1329, %v1328
        %v1356 = vpack.c.b16 %v1331, %v1330
        %v1357 = vpack.c.b16 %v1333, %v1332
        %v1358 = vpack.c.b16 %v1335, %v1334
        %v1359 = vpack.c.b16 %v1337, %v1336
        %v1360 = vpack.c.b16 %v1339, %v1338
        %v1361 = vpack.c.b16 %v1341, %v1340
        %v1362 = vpack.c.b16 %v1343, %v1342
        %v1363 = vpack.c.b16 %v1345, %v1344
        %v1364 = vpack.c.b16 %v1347, %v1346
        %v1365 = vpack.c.b16 %v1349, %v1348
        %1382 = vmatpush.bf16.msra.mxu0 %v1357
        %1383 = vmatpush.bf16.msra.mxu0 %v1356
        %1384 = vmatpush.bf16.msra.mxu0 %v1355
        %1385 = vmatpush.bf16.msra.mxu0 %v1354
        %1386 = vmatpush.bf16.msra.mxu0 %v1353
        %1387 = vmatpush.bf16.msra.mxu0 %v1352
        %1388 = vmatpush.bf16.msra.mxu0 %v1351
        %1389 = vmatpush.bf16.msra.mxu0 %v1350
        %1390 = vmatmul.bf16.gmra.mxu0 %v1235
        %v1391 = vpop.f32.mrf.mxu0
        %v1392 = vadd.f32 0.0, %v1391
        %v1393 = vpop.f32.mrf.mxu0
        %1394 = vdwg.mxu0
        %1395 = vmatpush.bf16.msra.mxu0 %v1365
        %1396 = vmatpush.bf16.msra.mxu0 %v1364
        %1397 = vmatpush.bf16.msra.mxu0 %v1363
        %1398 = vmatpush.bf16.msra.mxu0 %v1362
        %1399 = vmatpush.bf16.msra.mxu0 %v1361
        %1400 = vmatpush.bf16.msra.mxu0 %v1360
        %1401 = vmatpush.bf16.msra.mxu0 %v1359
        %1402 = vmatpush.bf16.msra.mxu0 %v1358
        %1403 = vmatmul.bf16.gmra.mxu0 %v1251
        %v1404 = vpop.f32.mrf.mxu0
        %v1405 = vadd.f32 %v1392, %v1404
        %v1406 = vpop.f32.mrf.mxu0
        %1407 = vdwg.mxu0
        %v1440 = vunpack.c.l.b16 %v1189
        %v1441 = vunpack.c.l.b16 %v1190
        %v1442 = vunpack.c.l.b16 %v1191
        %v1443 = vunpack.c.l.b16 %v1192
        %v1444 = vunpack.c.l.b16 %v1193
        %v1445 = vunpack.c.l.b16 %v1194
        %v1446 = vunpack.c.l.b16 %v1195
        %v1447 = vunpack.c.l.b16 %v1196
        %v1448 = vunpack.c.l.b16 %v1197
        %v1449 = vunpack.c.l.b16 %v1198
        %v1450 = vunpack.c.l.b16 %v1199
        %v1451 = vunpack.c.l.b16 %v1200
        %v1452 = vunpack.c.l.b16 %v1201
        %v1453 = vunpack.c.l.b16 %v1202
        %v1454 = vunpack.c.l.b16 %v1203
        %v1455 = vunpack.c.l.b16 %v1204
        %v1456 = vunpack.c.l.b16 %v1205
        %v1457 = vunpack.c.l.b16 %v1206
        %v1458 = vunpack.c.l.b16 %v1207
        %v1459 = vunpack.c.l.b16 %v1208
        %v1460 = vunpack.c.l.b16 %v1209
        %v1461 = vunpack.c.l.b16 %v1210
        %v1462 = vunpack.c.l.b16 %v1211
        %v1463 = vunpack.c.l.b16 %v1212
        %v1464 = vunpack.c.l.b16 %v1213
        %v1465 = vunpack.c.l.b16 %v1214
        %v1466 = vunpack.c.l.b16 %v1215
        %v1467 = vunpack.c.l.b16 %v1216
        %v1468 = vunpack.c.l.b16 %v1217
        %v1469 = vunpack.c.l.b16 %v1218
        %v1470 = vunpack.c.l.b16 %v1219
        %v1471 = vunpack.c.l.b16 %v1220
        %v1472 = vpack.c.b16 %v1441, %v1440
        %v1473 = vpack.c.b16 %v1443, %v1442
        %v1474 = vpack.c.b16 %v1445, %v1444
        %v1475 = vpack.c.b16 %v1447, %v1446
        %v1476 = vpack.c.b16 %v1449, %v1448
        %v1477 = vpack.c.b16 %v1451, %v1450
        %v1478 = vpack.c.b16 %v1453, %v1452
        %v1479 = vpack.c.b16 %v1455, %v1454
        %v1480 = vpack.c.b16 %v1457, %v1456
        %v1481 = vpack.c.b16 %v1459, %v1458
        %v1482 = vpack.c.b16 %v1461, %v1460
        %v1483 = vpack.c.b16 %v1463, %v1462
        %v1484 = vpack.c.b16 %v1465, %v1464
        %v1485 = vpack.c.b16 %v1467, %v1466
        %v1486 = vpack.c.b16 %v1469, %v1468
        %v1487 = vpack.c.b16 %v1471, %v1470
        %1504 = vmatpush.bf16.msra.mxu0 %v1479
        %1505 = vmatpush.bf16.msra.mxu0 %v1478
        %1506 = vmatpush.bf16.msra.mxu0 %v1477
        %1507 = vmatpush.bf16.msra.mxu0 %v1476
        %1508 = vmatpush.bf16.msra.mxu0 %v1475
        %1509 = vmatpush.bf16.msra.mxu0 %v1474
        %1510 = vmatpush.bf16.msra.mxu0 %v1473
        %1511 = vmatpush.bf16.msra.mxu0 %v1472
        %1512 = vmatmul.bf16.gmra.mxu0 %v1171
        %v1513 = vpop.f32.mrf.mxu0
        %v1514 = vadd.f32 %v1405, %v1513
        %v1515 = vpop.f32.mrf.mxu0
        %1516 = vdwg.mxu0
        %1517 = vmatpush.bf16.msra.mxu0 %v1487
        %1518 = vmatpush.bf16.msra.mxu0 %v1486
        %1519 = vmatpush.bf16.msra.mxu0 %v1485
        %1520 = vmatpush.bf16.msra.mxu0 %v1484
        %1521 = vmatpush.bf16.msra.mxu0 %v1483
        %1522 = vmatpush.bf16.msra.mxu0 %v1482
        %1523 = vmatpush.bf16.msra.mxu0 %v1481
        %1524 = vmatpush.bf16.msra.mxu0 %v1480
        %1525 = vmatmul.bf16.gmra.mxu0 %v1187
        %v1526 = vpop.f32.mrf.mxu0
        %v1527 = vadd.f32 %v1514, %v1526
        %v1528 = vpop.f32.mrf.mxu0
        %1529 = vdwg.mxu0
        %v1532 = vunpack.c.l.b16 %v1115
        %v1533 = vunpack.c.l.b16 %v1121
        %v1534 = vpack.c.b16 %v1532, %v1532
        %v1535 = vpack.c.b16 %v1533, %v1533
        %v1536 = vunpack.c.l.b16 %v1534
        %v1537 = vunpack.c.l.b16 %v1535
        %v1538 = vrot.slane %v1536, 7
        %v1539 = vsel %vm1163, %v1538, %v1243
        %v1540 = vrot.slane %v1244, 6
        %v1541 = vsel %vm1166, %v1540, %v1539
        %v1542 = vrot.slane %v1537, 5
        %v1543 = vsel %vm1169, %v1542, %v1541
        %v1544 = vpack.c.b16 %v1543, %v1543
        %v1548 = vunpack.c.l.b16 %v1122
        %v1549 = vunpack.c.l.b16 %v1123
        %v1550 = vpack.c.b16 %v1548, %v1548
        %v1551 = vpack.c.b16 %v1549, %v1549
        %v1552 = vunpack.c.l.b16 %v1550
        %v1553 = vunpack.c.l.b16 %v1551
        %v1554 = vrot.slane %v1161, 7
        %v1555 = vsel %vm1163, %v1554, %v1160
        %v1556 = vrot.slane %v1552, 6
        %v1557 = vsel %vm1166, %v1556, %v1555
        %v1558 = vrot.slane %v1553, 5
        %v1559 = vsel %vm1169, %v1558, %v1557
        %v1560 = vpack.c.b16 %v1559, %v1559
        %s1562 = scalar_lea.vmem [#allocation7], 256
        %v1563 = vld [vmem:[%s1562] sm:$0xf]
        %v1564 = vld [vmem:[%s1562 + $0x4] sm:$0xf]
        %v1565 = vld [vmem:[%s1562 + $0x8] sm:$0xf]
        %v1566 = vld [vmem:[%s1562 + $0xc] sm:$0xf]
        %v1567 = vld [vmem:[%s1562 + $0x10] sm:$0xf]
        %v1568 = vld [vmem:[%s1562 + $0x14] sm:$0xf]
        %v1569 = vld [vmem:[%s1562 + $0x18] sm:$0xf]
        %v1570 = vld [vmem:[%s1562 + $0x1c] sm:$0xf]
        %v1571 = vld [vmem:[%s1562 + $0x20] sm:$0xf]
        %v1572 = vld [vmem:[%s1562 + $0x24] sm:$0xf]
        %v1573 = vld [vmem:[%s1562 + $0x28] sm:$0xf]
        %v1574 = vld [vmem:[%s1562 + $0x2c] sm:$0xf]
        %v1575 = vld [vmem:[%s1562 + $0x30] sm:$0xf]
        %v1576 = vld [vmem:[%s1562 + $0x34] sm:$0xf]
        %v1577 = vld [vmem:[%s1562 + $0x38] sm:$0xf]
        %v1578 = vld [vmem:[%s1562 + $0x3c] sm:$0xf]
        %v1579 = vld [vmem:[%s1562 + $0x40] sm:$0xf]
        %v1580 = vld [vmem:[%s1562 + $0x44] sm:$0xf]
        %v1581 = vld [vmem:[%s1562 + $0x48] sm:$0xf]
        %v1582 = vld [vmem:[%s1562 + $0x4c] sm:$0xf]
        %v1583 = vld [vmem:[%s1562 + $0x50] sm:$0xf]
        %v1584 = vld [vmem:[%s1562 + $0x54] sm:$0xf]
        %v1585 = vld [vmem:[%s1562 + $0x58] sm:$0xf]
        %v1586 = vld [vmem:[%s1562 + $0x5c] sm:$0xf]
        %v1587 = vld [vmem:[%s1562 + $0x60] sm:$0xf]
        %v1588 = vld [vmem:[%s1562 + $0x64] sm:$0xf]
        %v1589 = vld [vmem:[%s1562 + $0x68] sm:$0xf]
        %v1590 = vld [vmem:[%s1562 + $0x6c] sm:$0xf]
        %v1591 = vld [vmem:[%s1562 + $0x70] sm:$0xf]
        %v1592 = vld [vmem:[%s1562 + $0x74] sm:$0xf]
        %v1593 = vld [vmem:[%s1562 + $0x78] sm:$0xf]
        %v1594 = vld [vmem:[%s1562 + $0x7c] sm:$0xf]
        %v1627 = vunpack.c.l.b16 %v1563
        %v1628 = vunpack.c.l.b16 %v1564
        %v1629 = vunpack.c.l.b16 %v1565
        %v1630 = vunpack.c.l.b16 %v1566
        %v1631 = vunpack.c.l.b16 %v1567
        %v1632 = vunpack.c.l.b16 %v1568
        %v1633 = vunpack.c.l.b16 %v1569
        %v1634 = vunpack.c.l.b16 %v1570
        %v1635 = vunpack.c.l.b16 %v1571
        %v1636 = vunpack.c.l.b16 %v1572
        %v1637 = vunpack.c.l.b16 %v1573
        %v1638 = vunpack.c.l.b16 %v1574
        %v1639 = vunpack.c.l.b16 %v1575
        %v1640 = vunpack.c.l.b16 %v1576
        %v1641 = vunpack.c.l.b16 %v1577
        %v1642 = vunpack.c.l.b16 %v1578
        %v1643 = vunpack.c.l.b16 %v1579
        %v1644 = vunpack.c.l.b16 %v1580
        %v1645 = vunpack.c.l.b16 %v1581
        %v1646 = vunpack.c.l.b16 %v1582
        %v1647 = vunpack.c.l.b16 %v1583
        %v1648 = vunpack.c.l.b16 %v1584
        %v1649 = vunpack.c.l.b16 %v1585
        %v1650 = vunpack.c.l.b16 %v1586
        %v1651 = vunpack.c.l.b16 %v1587
        %v1652 = vunpack.c.l.b16 %v1588
        %v1653 = vunpack.c.l.b16 %v1589
        %v1654 = vunpack.c.l.b16 %v1590
        %v1655 = vunpack.c.l.b16 %v1591
        %v1656 = vunpack.c.l.b16 %v1592
        %v1657 = vunpack.c.l.b16 %v1593
        %v1658 = vunpack.c.l.b16 %v1594
        %v1659 = vpack.c.b16 %v1628, %v1627
        %v1660 = vpack.c.b16 %v1630, %v1629
        %v1661 = vpack.c.b16 %v1632, %v1631
        %v1662 = vpack.c.b16 %v1634, %v1633
        %v1663 = vpack.c.b16 %v1636, %v1635
        %v1664 = vpack.c.b16 %v1638, %v1637
        %v1665 = vpack.c.b16 %v1640, %v1639
        %v1666 = vpack.c.b16 %v1642, %v1641
        %v1667 = vpack.c.b16 %v1644, %v1643
        %v1668 = vpack.c.b16 %v1646, %v1645
        %v1669 = vpack.c.b16 %v1648, %v1647
        %v1670 = vpack.c.b16 %v1650, %v1649
        %v1671 = vpack.c.b16 %v1652, %v1651
        %v1672 = vpack.c.b16 %v1654, %v1653
        %v1673 = vpack.c.b16 %v1656, %v1655
        %v1674 = vpack.c.b16 %v1658, %v1657
        %1691 = vmatpush.bf16.msra.mxu0 %v1666
        %1692 = vmatpush.bf16.msra.mxu0 %v1665
        %1693 = vmatpush.bf16.msra.mxu0 %v1664
        %1694 = vmatpush.bf16.msra.mxu0 %v1663
        %1695 = vmatpush.bf16.msra.mxu0 %v1662
        %1696 = vmatpush.bf16.msra.mxu0 %v1661
        %1697 = vmatpush.bf16.msra.mxu0 %v1660
        %1698 = vmatpush.bf16.msra.mxu0 %v1659
        %1699 = vmatmul.bf16.gmra.mxu0 %v1544
        %v1700 = vpop.f32.mrf.mxu0
        %v1701 = vadd.f32 0.0, %v1700
        %v1702 = vpop.f32.mrf.mxu0
        %1703 = vdwg.mxu0
        %1704 = vmatpush.bf16.msra.mxu0 %v1674
        %1705 = vmatpush.bf16.msra.mxu0 %v1673
        %1706 = vmatpush.bf16.msra.mxu0 %v1672
        %1707 = vmatpush.bf16.msra.mxu0 %v1671
        %1708 = vmatpush.bf16.msra.mxu0 %v1670
        %1709 = vmatpush.bf16.msra.mxu0 %v1669
        %1710 = vmatpush.bf16.msra.mxu0 %v1668
        %1711 = vmatpush.bf16.msra.mxu0 %v1667
        %1712 = vmatmul.bf16.gmra.mxu0 %v1560
        %v1713 = vpop.f32.mrf.mxu0
        %v1714 = vadd.f32 %v1701, %v1713
        %v1715 = vpop.f32.mrf.mxu0
        %1716 = vdwg.mxu0
        %v1717 = vadd.f32 %v1527, %v1714
        %v1719 = vunpack.c.l.b16 %v1124
        %v1720 = vpack.c.b16 %v1719, %v1719
        %v1721 = vunpack.c.l.b16 %v1720
        %v1722 = vrot.slane %v1180, 7
        %v1723 = vsel %vm1163, %v1722, %v1161
        %v1724 = vrot.slane %v1553, 6
        %v1725 = vsel %vm1166, %v1724, %v1723
        %v1726 = vrot.slane %v1721, 5
        %v1727 = vsel %vm1169, %v1726, %v1725
        %v1728 = vpack.c.b16 %v1727, %v1727
        %v1731 = vunpack.c.l.b16 %v1125
        %v1732 = vpack.c.b16 %v1731, %v1731
        %v1733 = vunpack.c.l.b16 %v1732
        %v1734 = vrot.slane %v1228, 7
        %v1735 = vsel %vm1163, %v1734, %v1180
        %v1736 = vrot.slane %v1721, 6
        %v1737 = vsel %vm1166, %v1736, %v1735
        %v1738 = vrot.slane %v1733, 5
        %v1739 = vsel %vm1169, %v1738, %v1737
        %v1740 = vpack.c.b16 %v1739, %v1739
        %s1742 = scalar_lea.vmem [#allocation7], 384
        %v1743 = vld [vmem:[%s1742] sm:$0xf]
        %v1744 = vld [vmem:[%s1742 + $0x4] sm:$0xf]
        %v1745 = vld [vmem:[%s1742 + $0x8] sm:$0xf]
        %v1746 = vld [vmem:[%s1742 + $0xc] sm:$0xf]
        %v1747 = vld [vmem:[%s1742 + $0x10] sm:$0xf]
        %v1748 = vld [vmem:[%s1742 + $0x14] sm:$0xf]
        %v1749 = vld [vmem:[%s1742 + $0x18] sm:$0xf]
        %v1750 = vld [vmem:[%s1742 + $0x1c] sm:$0xf]
        %v1751 = vld [vmem:[%s1742 + $0x20] sm:$0xf]
        %v1752 = vld [vmem:[%s1742 + $0x24] sm:$0xf]
        %v1753 = vld [vmem:[%s1742 + $0x28] sm:$0xf]
        %v1754 = vld [vmem:[%s1742 + $0x2c] sm:$0xf]
        %v1755 = vld [vmem:[%s1742 + $0x30] sm:$0xf]
        %v1756 = vld [vmem:[%s1742 + $0x34] sm:$0xf]
        %v1757 = vld [vmem:[%s1742 + $0x38] sm:$0xf]
        %v1758 = vld [vmem:[%s1742 + $0x3c] sm:$0xf]
        %v1759 = vld [vmem:[%s1742 + $0x40] sm:$0xf]
        %v1760 = vld [vmem:[%s1742 + $0x44] sm:$0xf]
        %v1761 = vld [vmem:[%s1742 + $0x48] sm:$0xf]
        %v1762 = vld [vmem:[%s1742 + $0x4c] sm:$0xf]
        %v1763 = vld [vmem:[%s1742 + $0x50] sm:$0xf]
        %v1764 = vld [vmem:[%s1742 + $0x54] sm:$0xf]
        %v1765 = vld [vmem:[%s1742 + $0x58] sm:$0xf]
        %v1766 = vld [vmem:[%s1742 + $0x5c] sm:$0xf]
        %v1767 = vld [vmem:[%s1742 + $0x60] sm:$0xf]
        %v1768 = vld [vmem:[%s1742 + $0x64] sm:$0xf]
        %v1769 = vld [vmem:[%s1742 + $0x68] sm:$0xf]
        %v1770 = vld [vmem:[%s1742 + $0x6c] sm:$0xf]
        %v1771 = vld [vmem:[%s1742 + $0x70] sm:$0xf]
        %v1772 = vld [vmem:[%s1742 + $0x74] sm:$0xf]
        %v1773 = vld [vmem:[%s1742 + $0x78] sm:$0xf]
        %v1774 = vld [vmem:[%s1742 + $0x7c] sm:$0xf]
        %v1807 = vunpack.c.l.b16 %v1743
        %v1808 = vunpack.c.l.b16 %v1744
        %v1809 = vunpack.c.l.b16 %v1745
        %v1810 = vunpack.c.l.b16 %v1746
        %v1811 = vunpack.c.l.b16 %v1747
        %v1812 = vunpack.c.l.b16 %v1748
        %v1813 = vunpack.c.l.b16 %v1749
        %v1814 = vunpack.c.l.b16 %v1750
        %v1815 = vunpack.c.l.b16 %v1751
        %v1816 = vunpack.c.l.b16 %v1752
        %v1817 = vunpack.c.l.b16 %v1753
        %v1818 = vunpack.c.l.b16 %v1754
        %v1819 = vunpack.c.l.b16 %v1755
        %v1820 = vunpack.c.l.b16 %v1756
        %v1821 = vunpack.c.l.b16 %v1757
        %v1822 = vunpack.c.l.b16 %v1758
        %v1823 = vunpack.c.l.b16 %v1759
        %v1824 = vunpack.c.l.b16 %v1760
        %v1825 = vunpack.c.l.b16 %v1761
        %v1826 = vunpack.c.l.b16 %v1762
        %v1827 = vunpack.c.l.b16 %v1763
        %v1828 = vunpack.c.l.b16 %v1764
        %v1829 = vunpack.c.l.b16 %v1765
        %v1830 = vunpack.c.l.b16 %v1766
        %v1831 = vunpack.c.l.b16 %v1767
        %v1832 = vunpack.c.l.b16 %v1768
        %v1833 = vunpack.c.l.b16 %v1769
        %v1834 = vunpack.c.l.b16 %v1770
        %v1835 = vunpack.c.l.b16 %v1771
        %v1836 = vunpack.c.l.b16 %v1772
        %v1837 = vunpack.c.l.b16 %v1773
        %v1838 = vunpack.c.l.b16 %v1774
        %v1839 = vpack.c.b16 %v1808, %v1807
        %v1840 = vpack.c.b16 %v1810, %v1809
        %v1841 = vpack.c.b16 %v1812, %v1811
        %v1842 = vpack.c.b16 %v1814, %v1813
        %v1843 = vpack.c.b16 %v1816, %v1815
        %v1844 = vpack.c.b16 %v1818, %v1817
        %v1845 = vpack.c.b16 %v1820, %v1819
        %v1846 = vpack.c.b16 %v1822, %v1821
        %v1847 = vpack.c.b16 %v1824, %v1823
        %v1848 = vpack.c.b16 %v1826, %v1825
        %v1849 = vpack.c.b16 %v1828, %v1827
        %v1850 = vpack.c.b16 %v1830, %v1829
        %v1851 = vpack.c.b16 %v1832, %v1831
        %v1852 = vpack.c.b16 %v1834, %v1833
        %v1853 = vpack.c.b16 %v1836, %v1835
        %v1854 = vpack.c.b16 %v1838, %v1837
        %1871 = vmatpush.bf16.msra.mxu0 %v1846
        %1872 = vmatpush.bf16.msra.mxu0 %v1845
        %1873 = vmatpush.bf16.msra.mxu0 %v1844
        %1874 = vmatpush.bf16.msra.mxu0 %v1843
        %1875 = vmatpush.bf16.msra.mxu0 %v1842
        %1876 = vmatpush.bf16.msra.mxu0 %v1841
        %1877 = vmatpush.bf16.msra.mxu0 %v1840
        %1878 = vmatpush.bf16.msra.mxu0 %v1839
        %1879 = vmatmul.bf16.gmra.mxu0 %v1728
        %v1880 = vpop.f32.mrf.mxu0
        %v1881 = vadd.f32 0.0, %v1880
        %v1882 = vpop.f32.mrf.mxu0
        %1883 = vdwg.mxu0
        %1884 = vmatpush.bf16.msra.mxu0 %v1854
        %1885 = vmatpush.bf16.msra.mxu0 %v1853
        %1886 = vmatpush.bf16.msra.mxu0 %v1852
        %1887 = vmatpush.bf16.msra.mxu0 %v1851
        %1888 = vmatpush.bf16.msra.mxu0 %v1850
        %1889 = vmatpush.bf16.msra.mxu0 %v1849
        %1890 = vmatpush.bf16.msra.mxu0 %v1848
        %1891 = vmatpush.bf16.msra.mxu0 %v1847
        %1892 = vmatmul.bf16.gmra.mxu0 %v1740
        %v1893 = vpop.f32.mrf.mxu0
        %v1894 = vadd.f32 %v1881, %v1893
        %v1895 = vpop.f32.mrf.mxu0
        %1896 = vdwg.mxu0
        %v1897 = vadd.f32 %v1717, %v1894
        %v1899 = vunpack.c.l.b16 %v1126
        %v1900 = vpack.c.b16 %v1899, %v1899
        %v1901 = vunpack.c.l.b16 %v1900
        %v1902 = vrot.slane %v1244, 7
        %v1903 = vsel %vm1163, %v1902, %v1228
        %v1904 = vrot.slane %v1733, 6
        %v1905 = vsel %vm1166, %v1904, %v1903
        %v1906 = vrot.slane %v1901, 5
        %v1907 = vsel %vm1169, %v1906, %v1905
        %v1908 = vpack.c.b16 %v1907, %v1907
        %v1911 = vunpack.c.l.b16 %v1127
        %v1912 = vpack.c.b16 %v1911, %v1911
        %v1913 = vunpack.c.l.b16 %v1912
        %v1914 = vrot.slane %v1537, 7
        %v1915 = vsel %vm1163, %v1914, %v1244
        %v1916 = vrot.slane %v1901, 6
        %v1917 = vsel %vm1166, %v1916, %v1915
        %v1918 = vrot.slane %v1913, 5
        %v1919 = vsel %vm1169, %v1918, %v1917
        %v1920 = vpack.c.b16 %v1919, %v1919
        %s1922 = scalar_lea.vmem [#allocation7], 512
        %v1923 = vld [vmem:[%s1922] sm:$0xf]
        %v1924 = vld [vmem:[%s1922 + $0x4] sm:$0xf]
        %v1925 = vld [vmem:[%s1922 + $0x8] sm:$0xf]
        %v1926 = vld [vmem:[%s1922 + $0xc] sm:$0xf]
        %v1927 = vld [vmem:[%s1922 + $0x10] sm:$0xf]
        %v1928 = vld [vmem:[%s1922 + $0x14] sm:$0xf]
        %v1929 = vld [vmem:[%s1922 + $0x18] sm:$0xf]
        %v1930 = vld [vmem:[%s1922 + $0x1c] sm:$0xf]
        %v1931 = vld [vmem:[%s1922 + $0x20] sm:$0xf]
        %v1932 = vld [vmem:[%s1922 + $0x24] sm:$0xf]
        %v1933 = vld [vmem:[%s1922 + $0x28] sm:$0xf]
        %v1934 = vld [vmem:[%s1922 + $0x2c] sm:$0xf]
        %v1935 = vld [vmem:[%s1922 + $0x30] sm:$0xf]
        %v1936 = vld [vmem:[%s1922 + $0x34] sm:$0xf]
        %v1937 = vld [vmem:[%s1922 + $0x38] sm:$0xf]
        %v1938 = vld [vmem:[%s1922 + $0x3c] sm:$0xf]
        %v1939 = vld [vmem:[%s1922 + $0x40] sm:$0xf]
        %v1940 = vld [vmem:[%s1922 + $0x44] sm:$0xf]
        %v1941 = vld [vmem:[%s1922 + $0x48] sm:$0xf]
        %v1942 = vld [vmem:[%s1922 + $0x4c] sm:$0xf]
        %v1943 = vld [vmem:[%s1922 + $0x50] sm:$0xf]
        %v1944 = vld [vmem:[%s1922 + $0x54] sm:$0xf]
        %v1945 = vld [vmem:[%s1922 + $0x58] sm:$0xf]
        %v1946 = vld [vmem:[%s1922 + $0x5c] sm:$0xf]
        %v1947 = vld [vmem:[%s1922 + $0x60] sm:$0xf]
        %v1948 = vld [vmem:[%s1922 + $0x64] sm:$0xf]
        %v1949 = vld [vmem:[%s1922 + $0x68] sm:$0xf]
        %v1950 = vld [vmem:[%s1922 + $0x6c] sm:$0xf]
        %v1951 = vld [vmem:[%s1922 + $0x70] sm:$0xf]
        %v1952 = vld [vmem:[%s1922 + $0x74] sm:$0xf]
        %v1953 = vld [vmem:[%s1922 + $0x78] sm:$0xf]
        %v1954 = vld [vmem:[%s1922 + $0x7c] sm:$0xf]
        %v1987 = vunpack.c.l.b16 %v1923
        %v1988 = vunpack.c.l.b16 %v1924
        %v1989 = vunpack.c.l.b16 %v1925
        %v1990 = vunpack.c.l.b16 %v1926
        %v1991 = vunpack.c.l.b16 %v1927
        %v1992 = vunpack.c.l.b16 %v1928
        %v1993 = vunpack.c.l.b16 %v1929
        %v1994 = vunpack.c.l.b16 %v1930
        %v1995 = vunpack.c.l.b16 %v1931
        %v1996 = vunpack.c.l.b16 %v1932
        %v1997 = vunpack.c.l.b16 %v1933
        %v1998 = vunpack.c.l.b16 %v1934
        %v1999 = vunpack.c.l.b16 %v1935
        %v2000 = vunpack.c.l.b16 %v1936
        %v2001 = vunpack.c.l.b16 %v1937
        %v2002 = vunpack.c.l.b16 %v1938
        %v2003 = vunpack.c.l.b16 %v1939
        %v2004 = vunpack.c.l.b16 %v1940
        %v2005 = vunpack.c.l.b16 %v1941
        %v2006 = vunpack.c.l.b16 %v1942
        %v2007 = vunpack.c.l.b16 %v1943
        %v2008 = vunpack.c.l.b16 %v1944
        %v2009 = vunpack.c.l.b16 %v1945
        %v2010 = vunpack.c.l.b16 %v1946
        %v2011 = vunpack.c.l.b16 %v1947
        %v2012 = vunpack.c.l.b16 %v1948
        %v2013 = vunpack.c.l.b16 %v1949
        %v2014 = vunpack.c.l.b16 %v1950
        %v2015 = vunpack.c.l.b16 %v1951
        %v2016 = vunpack.c.l.b16 %v1952
        %v2017 = vunpack.c.l.b16 %v1953
        %v2018 = vunpack.c.l.b16 %v1954
        %v2019 = vpack.c.b16 %v1988, %v1987
        %v2020 = vpack.c.b16 %v1990, %v1989
        %v2021 = vpack.c.b16 %v1992, %v1991
        %v2022 = vpack.c.b16 %v1994, %v1993
        %v2023 = vpack.c.b16 %v1996, %v1995
        %v2024 = vpack.c.b16 %v1998, %v1997
        %v2025 = vpack.c.b16 %v2000, %v1999
        %v2026 = vpack.c.b16 %v2002, %v2001
        %v2027 = vpack.c.b16 %v2004, %v2003
        %v2028 = vpack.c.b16 %v2006, %v2005
        %v2029 = vpack.c.b16 %v2008, %v2007
        %v2030 = vpack.c.b16 %v2010, %v2009
        %v2031 = vpack.c.b16 %v2012, %v2011
        %v2032 = vpack.c.b16 %v2014, %v2013
        %v2033 = vpack.c.b16 %v2016, %v2015
        %v2034 = vpack.c.b16 %v2018, %v2017
        %2051 = vmatpush.bf16.msra.mxu0 %v2026
        %2052 = vmatpush.bf16.msra.mxu0 %v2025
        %2053 = vmatpush.bf16.msra.mxu0 %v2024
        %2054 = vmatpush.bf16.msra.mxu0 %v2023
        %2055 = vmatpush.bf16.msra.mxu0 %v2022
        %2056 = vmatpush.bf16.msra.mxu0 %v2021
        %2057 = vmatpush.bf16.msra.mxu0 %v2020
        %2058 = vmatpush.bf16.msra.mxu0 %v2019
        %2059 = vmatmul.bf16.gmra.mxu0 %v1908
        %v2060 = vpop.f32.mrf.mxu0
        %v2061 = vadd.f32 0.0, %v2060
        %v2062 = vpop.f32.mrf.mxu0
        %2063 = vdwg.mxu0
        %2064 = vmatpush.bf16.msra.mxu0 %v2034
        %2065 = vmatpush.bf16.msra.mxu0 %v2033
        %2066 = vmatpush.bf16.msra.mxu0 %v2032
        %2067 = vmatpush.bf16.msra.mxu0 %v2031
        %2068 = vmatpush.bf16.msra.mxu0 %v2030
        %2069 = vmatpush.bf16.msra.mxu0 %v2029
        %2070 = vmatpush.bf16.msra.mxu0 %v2028
        %2071 = vmatpush.bf16.msra.mxu0 %v2027
        %2072 = vmatmul.bf16.gmra.mxu0 %v1920
        %v2073 = vpop.f32.mrf.mxu0
        %v2074 = vadd.f32 %v2061, %v2073
        %v2075 = vpop.f32.mrf.mxu0
        %2076 = vdwg.mxu0
        %v2077 = vadd.f32 %v1897, %v2074
        %v2080 = vunpack.c.l.b16 %v1128
        %v2081 = vunpack.c.l.b16 %v1129
        %v2082 = vpack.c.b16 %v2080, %v2080
        %v2083 = vpack.c.b16 %v2081, %v2081
        %v2084 = vunpack.c.l.b16 %v2082
        %v2085 = vunpack.c.l.b16 %v2083
        %v2086 = vrot.slane %v1553, 7
        %v2087 = vsel %vm1163, %v2086, %v1552
        %v2088 = vrot.slane %v2084, 6
        %v2089 = vsel %vm1166, %v2088, %v2087
        %v2090 = vrot.slane %v2085, 5
        %v2091 = vsel %vm1169, %v2090, %v2089
        %v2092 = vpack.c.b16 %v2091, %v2091
        %v2095 = vunpack.c.l.b16 %v1130
        %v2096 = vpack.c.b16 %v2095, %v2095
        %v2097 = vunpack.c.l.b16 %v2096
        %v2098 = vrot.slane %v1721, 7
        %v2099 = vsel %vm1163, %v2098, %v1553
        %v2100 = vrot.slane %v2085, 6
        %v2101 = vsel %vm1166, %v2100, %v2099
        %v2102 = vrot.slane %v2097, 5
        %v2103 = vsel %vm1169, %v2102, %v2101
        %v2104 = vpack.c.b16 %v2103, %v2103
        %s2106 = scalar_lea.vmem [#allocation7], 640
        %v2107 = vld [vmem:[%s2106] sm:$0xf]
        %v2108 = vld [vmem:[%s2106 + $0x4] sm:$0xf]
        %v2109 = vld [vmem:[%s2106 + $0x8] sm:$0xf]
        %v2110 = vld [vmem:[%s2106 + $0xc] sm:$0xf]
        %v2111 = vld [vmem:[%s2106 + $0x10] sm:$0xf]
        %v2112 = vld [vmem:[%s2106 + $0x14] sm:$0xf]
        %v2113 = vld [vmem:[%s2106 + $0x18] sm:$0xf]
        %v2114 = vld [vmem:[%s2106 + $0x1c] sm:$0xf]
        %v2115 = vld [vmem:[%s2106 + $0x20] sm:$0xf]
        %v2116 = vld [vmem:[%s2106 + $0x24] sm:$0xf]
        %v2117 = vld [vmem:[%s2106 + $0x28] sm:$0xf]
        %v2118 = vld [vmem:[%s2106 + $0x2c] sm:$0xf]
        %v2119 = vld [vmem:[%s2106 + $0x30] sm:$0xf]
        %v2120 = vld [vmem:[%s2106 + $0x34] sm:$0xf]
        %v2121 = vld [vmem:[%s2106 + $0x38] sm:$0xf]
        %v2122 = vld [vmem:[%s2106 + $0x3c] sm:$0xf]
        %v2123 = vld [vmem:[%s2106 + $0x40] sm:$0xf]
        %v2124 = vld [vmem:[%s2106 + $0x44] sm:$0xf]
        %v2125 = vld [vmem:[%s2106 + $0x48] sm:$0xf]
        %v2126 = vld [vmem:[%s2106 + $0x4c] sm:$0xf]
        %v2127 = vld [vmem:[%s2106 + $0x50] sm:$0xf]
        %v2128 = vld [vmem:[%s2106 + $0x54] sm:$0xf]
        %v2129 = vld [vmem:[%s2106 + $0x58] sm:$0xf]
        %v2130 = vld [vmem:[%s2106 + $0x5c] sm:$0xf]
        %v2131 = vld [vmem:[%s2106 + $0x60] sm:$0xf]
        %v2132 = vld [vmem:[%s2106 + $0x64] sm:$0xf]
        %v2133 = vld [vmem:[%s2106 + $0x68] sm:$0xf]
        %v2134 = vld [vmem:[%s2106 + $0x6c] sm:$0xf]
        %v2135 = vld [vmem:[%s2106 + $0x70] sm:$0xf]
        %v2136 = vld [vmem:[%s2106 + $0x74] sm:$0xf]
        %v2137 = vld [vmem:[%s2106 + $0x78] sm:$0xf]
        %v2138 = vld [vmem:[%s2106 + $0x7c] sm:$0xf]
        %v2171 = vunpack.c.l.b16 %v2107
        %v2172 = vunpack.c.l.b16 %v2108
        %v2173 = vunpack.c.l.b16 %v2109
        %v2174 = vunpack.c.l.b16 %v2110
        %v2175 = vunpack.c.l.b16 %v2111
        %v2176 = vunpack.c.l.b16 %v2112
        %v2177 = vunpack.c.l.b16 %v2113
        %v2178 = vunpack.c.l.b16 %v2114
        %v2179 = vunpack.c.l.b16 %v2115
        %v2180 = vunpack.c.l.b16 %v2116
        %v2181 = vunpack.c.l.b16 %v2117
        %v2182 = vunpack.c.l.b16 %v2118
        %v2183 = vunpack.c.l.b16 %v2119
        %v2184 = vunpack.c.l.b16 %v2120
        %v2185 = vunpack.c.l.b16 %v2121
        %v2186 = vunpack.c.l.b16 %v2122
        %v2187 = vunpack.c.l.b16 %v2123
        %v2188 = vunpack.c.l.b16 %v2124
        %v2189 = vunpack.c.l.b16 %v2125
        %v2190 = vunpack.c.l.b16 %v2126
        %v2191 = vunpack.c.l.b16 %v2127
        %v2192 = vunpack.c.l.b16 %v2128
        %v2193 = vunpack.c.l.b16 %v2129
        %v2194 = vunpack.c.l.b16 %v2130
        %v2195 = vunpack.c.l.b16 %v2131
        %v2196 = vunpack.c.l.b16 %v2132
        %v2197 = vunpack.c.l.b16 %v2133
        %v2198 = vunpack.c.l.b16 %v2134
        %v2199 = vunpack.c.l.b16 %v2135
        %v2200 = vunpack.c.l.b16 %v2136
        %v2201 = vunpack.c.l.b16 %v2137
        %v2202 = vunpack.c.l.b16 %v2138
        %v2203 = vpack.c.b16 %v2172, %v2171
        %v2204 = vpack.c.b16 %v2174, %v2173
        %v2205 = vpack.c.b16 %v2176, %v2175
        %v2206 = vpack.c.b16 %v2178, %v2177
        %v2207 = vpack.c.b16 %v2180, %v2179
        %v2208 = vpack.c.b16 %v2182, %v2181
        %v2209 = vpack.c.b16 %v2184, %v2183
        %v2210 = vpack.c.b16 %v2186, %v2185
        %v2211 = vpack.c.b16 %v2188, %v2187
        %v2212 = vpack.c.b16 %v2190, %v2189
        %v2213 = vpack.c.b16 %v2192, %v2191
        %v2214 = vpack.c.b16 %v2194, %v2193
        %v2215 = vpack.c.b16 %v2196, %v2195
        %v2216 = vpack.c.b16 %v2198, %v2197
        %v2217 = vpack.c.b16 %v2200, %v2199
        %v2218 = vpack.c.b16 %v2202, %v2201
        %2235 = vmatpush.bf16.msra.mxu0 %v2210
        %2236 = vmatpush.bf16.msra.mxu0 %v2209
        %2237 = vmatpush.bf16.msra.mxu0 %v2208
        %2238 = vmatpush.bf16.msra.mxu0 %v2207
        %2239 = vmatpush.bf16.msra.mxu0 %v2206
        %2240 = vmatpush.bf16.msra.mxu0 %v2205
        %2241 = vmatpush.bf16.msra.mxu0 %v2204
        %2242 = vmatpush.bf16.msra.mxu0 %v2203
        %2243 = vmatmul.bf16.gmra.mxu0 %v2092
        %v2244 = vpop.f32.mrf.mxu0
        %v2245 = vadd.f32 0.0, %v2244
        %v2246 = vpop.f32.mrf.mxu0
        %2247 = vdwg.mxu0
        %2248 = vmatpush.bf16.msra.mxu0 %v2218
        %2249 = vmatpush.bf16.msra.mxu0 %v2217
        %2250 = vmatpush.bf16.msra.mxu0 %v2216
        %2251 = vmatpush.bf16.msra.mxu0 %v2215
        %2252 = vmatpush.bf16.msra.mxu0 %v2214
        %2253 = vmatpush.bf16.msra.mxu0 %v2213
        %2254 = vmatpush.bf16.msra.mxu0 %v2212
        %2255 = vmatpush.bf16.msra.mxu0 %v2211
        %2256 = vmatmul.bf16.gmra.mxu0 %v2104
        %v2257 = vpop.f32.mrf.mxu0
        %v2258 = vadd.f32 %v2245, %v2257
        %v2259 = vpop.f32.mrf.mxu0
        %2260 = vdwg.mxu0
        %v2261 = vadd.f32 %v2077, %v2258
        %v2263 = vunpack.c.l.b16 %v1131
        %v2264 = vpack.c.b16 %v2263, %v2263
        %v2265 = vunpack.c.l.b16 %v2264
        %v2266 = vrot.slane %v1733, 7
        %v2267 = vsel %vm1163, %v2266, %v1721
        %v2268 = vrot.slane %v2097, 6
        %v2269 = vsel %vm1166, %v2268, %v2267
        %v2270 = vrot.slane %v2265, 5
        %v2271 = vsel %vm1169, %v2270, %v2269
        %v2272 = vpack.c.b16 %v2271, %v2271
        %v2275 = vunpack.c.l.b16 %v1132
        %v2276 = vpack.c.b16 %v2275, %v2275
        %v2277 = vunpack.c.l.b16 %v2276
        %v2278 = vrot.slane %v1901, 7
        %v2279 = vsel %vm1163, %v2278, %v1733
        %v2280 = vrot.slane %v2265, 6
        %v2281 = vsel %vm1166, %v2280, %v2279
        %v2282 = vrot.slane %v2277, 5
        %v2283 = vsel %vm1169, %v2282, %v2281
        %v2284 = vpack.c.b16 %v2283, %v2283
        %s2286 = scalar_lea.vmem [#allocation7], 768
        %v2287 = vld [vmem:[%s2286] sm:$0xf]
        %v2288 = vld [vmem:[%s2286 + $0x4] sm:$0xf]
        %v2289 = vld [vmem:[%s2286 + $0x8] sm:$0xf]
        %v2290 = vld [vmem:[%s2286 + $0xc] sm:$0xf]
        %v2291 = vld [vmem:[%s2286 + $0x10] sm:$0xf]
        %v2292 = vld [vmem:[%s2286 + $0x14] sm:$0xf]
        %v2293 = vld [vmem:[%s2286 + $0x18] sm:$0xf]
        %v2294 = vld [vmem:[%s2286 + $0x1c] sm:$0xf]
        %v2295 = vld [vmem:[%s2286 + $0x20] sm:$0xf]
        %v2296 = vld [vmem:[%s2286 + $0x24] sm:$0xf]
        %v2297 = vld [vmem:[%s2286 + $0x28] sm:$0xf]
        %v2298 = vld [vmem:[%s2286 + $0x2c] sm:$0xf]
        %v2299 = vld [vmem:[%s2286 + $0x30] sm:$0xf]
        %v2300 = vld [vmem:[%s2286 + $0x34] sm:$0xf]
        %v2301 = vld [vmem:[%s2286 + $0x38] sm:$0xf]
        %v2302 = vld [vmem:[%s2286 + $0x3c] sm:$0xf]
        %v2303 = vld [vmem:[%s2286 + $0x40] sm:$0xf]
        %v2304 = vld [vmem:[%s2286 + $0x44] sm:$0xf]
        %v2305 = vld [vmem:[%s2286 + $0x48] sm:$0xf]
        %v2306 = vld [vmem:[%s2286 + $0x4c] sm:$0xf]
        %v2307 = vld [vmem:[%s2286 + $0x50] sm:$0xf]
        %v2308 = vld [vmem:[%s2286 + $0x54] sm:$0xf]
        %v2309 = vld [vmem:[%s2286 + $0x58] sm:$0xf]
        %v2310 = vld [vmem:[%s2286 + $0x5c] sm:$0xf]
        %v2311 = vld [vmem:[%s2286 + $0x60] sm:$0xf]
        %v2312 = vld [vmem:[%s2286 + $0x64] sm:$0xf]
        %v2313 = vld [vmem:[%s2286 + $0x68] sm:$0xf]
        %v2314 = vld [vmem:[%s2286 + $0x6c] sm:$0xf]
        %v2315 = vld [vmem:[%s2286 + $0x70] sm:$0xf]
        %v2316 = vld [vmem:[%s2286 + $0x74] sm:$0xf]
        %v2317 = vld [vmem:[%s2286 + $0x78] sm:$0xf]
        %v2318 = vld [vmem:[%s2286 + $0x7c] sm:$0xf]
        %v2351 = vunpack.c.l.b16 %v2287
        %v2352 = vunpack.c.l.b16 %v2288
        %v2353 = vunpack.c.l.b16 %v2289
        %v2354 = vunpack.c.l.b16 %v2290
        %v2355 = vunpack.c.l.b16 %v2291
        %v2356 = vunpack.c.l.b16 %v2292
        %v2357 = vunpack.c.l.b16 %v2293
        %v2358 = vunpack.c.l.b16 %v2294
        %v2359 = vunpack.c.l.b16 %v2295
        %v2360 = vunpack.c.l.b16 %v2296
        %v2361 = vunpack.c.l.b16 %v2297
        %v2362 = vunpack.c.l.b16 %v2298
        %v2363 = vunpack.c.l.b16 %v2299
        %v2364 = vunpack.c.l.b16 %v2300
        %v2365 = vunpack.c.l.b16 %v2301
        %v2366 = vunpack.c.l.b16 %v2302
        %v2367 = vunpack.c.l.b16 %v2303
        %v2368 = vunpack.c.l.b16 %v2304
        %v2369 = vunpack.c.l.b16 %v2305
        %v2370 = vunpack.c.l.b16 %v2306
        %v2371 = vunpack.c.l.b16 %v2307
        %v2372 = vunpack.c.l.b16 %v2308
        %v2373 = vunpack.c.l.b16 %v2309
        %v2374 = vunpack.c.l.b16 %v2310
        %v2375 = vunpack.c.l.b16 %v2311
        %v2376 = vunpack.c.l.b16 %v2312
        %v2377 = vunpack.c.l.b16 %v2313
        %v2378 = vunpack.c.l.b16 %v2314
        %v2379 = vunpack.c.l.b16 %v2315
        %v2380 = vunpack.c.l.b16 %v2316
        %v2381 = vunpack.c.l.b16 %v2317
        %v2382 = vunpack.c.l.b16 %v2318
        %v2383 = vpack.c.b16 %v2352, %v2351
        %v2384 = vpack.c.b16 %v2354, %v2353
        %v2385 = vpack.c.b16 %v2356, %v2355
        %v2386 = vpack.c.b16 %v2358, %v2357
        %v2387 = vpack.c.b16 %v2360, %v2359
        %v2388 = vpack.c.b16 %v2362, %v2361
        %v2389 = vpack.c.b16 %v2364, %v2363
        %v2390 = vpack.c.b16 %v2366, %v2365
        %v2391 = vpack.c.b16 %v2368, %v2367
        %v2392 = vpack.c.b16 %v2370, %v2369
        %v2393 = vpack.c.b16 %v2372, %v2371
        %v2394 = vpack.c.b16 %v2374, %v2373
        %v2395 = vpack.c.b16 %v2376, %v2375
        %v2396 = vpack.c.b16 %v2378, %v2377
        %v2397 = vpack.c.b16 %v2380, %v2379
        %v2398 = vpack.c.b16 %v2382, %v2381
        %2415 = vmatpush.bf16.msra.mxu0 %v2390
        %2416 = vmatpush.bf16.msra.mxu0 %v2389
        %2417 = vmatpush.bf16.msra.mxu0 %v2388
        %2418 = vmatpush.bf16.msra.mxu0 %v2387
        %2419 = vmatpush.bf16.msra.mxu0 %v2386
        %2420 = vmatpush.bf16.msra.mxu0 %v2385
        %2421 = vmatpush.bf16.msra.mxu0 %v2384
        %2422 = vmatpush.bf16.msra.mxu0 %v2383
        %2423 = vmatmul.bf16.gmra.mxu0 %v2272
        %v2424 = vpop.f32.mrf.mxu0
        %v2425 = vadd.f32 0.0, %v2424
        %v2426 = vpop.f32.mrf.mxu0
        %2427 = vdwg.mxu0
        %2428 = vmatpush.bf16.msra.mxu0 %v2398
        %2429 = vmatpush.bf16.msra.mxu0 %v2397
        %2430 = vmatpush.bf16.msra.mxu0 %v2396
        %2431 = vmatpush.bf16.msra.mxu0 %v2395
        %2432 = vmatpush.bf16.msra.mxu0 %v2394
        %2433 = vmatpush.bf16.msra.mxu0 %v2393
        %2434 = vmatpush.bf16.msra.mxu0 %v2392
        %2435 = vmatpush.bf16.msra.mxu0 %v2391
        %2436 = vmatmul.bf16.gmra.mxu0 %v2284
        %v2437 = vpop.f32.mrf.mxu0
        %v2438 = vadd.f32 %v2425, %v2437
        %v2439 = vpop.f32.mrf.mxu0
        %2440 = vdwg.mxu0
        %v2441 = vadd.f32 %v2261, %v2438
        %v2443 = vunpack.c.l.b16 %v1133
        %v2444 = vpack.c.b16 %v2443, %v2443
        %v2445 = vunpack.c.l.b16 %v2444
        %v2446 = vrot.slane %v1913, 7
        %v2447 = vsel %vm1163, %v2446, %v1901
        %v2448 = vrot.slane %v2277, 6
        %v2449 = vsel %vm1166, %v2448, %v2447
        %v2450 = vrot.slane %v2445, 5
        %v2451 = vsel %vm1169, %v2450, %v2449
        %v2452 = vpack.c.b16 %v2451, %v2451
        %v2456 = vunpack.c.l.b16 %v1134
        %v2457 = vunpack.c.l.b16 %v1135
        %v2458 = vpack.c.b16 %v2456, %v2456
        %v2459 = vpack.c.b16 %v2457, %v2457
        %v2460 = vunpack.c.l.b16 %v2458
        %v2461 = vunpack.c.l.b16 %v2459
        %v2462 = vrot.slane %v2085, 7
        %v2463 = vsel %vm1163, %v2462, %v2084
        %v2464 = vrot.slane %v2460, 6
        %v2465 = vsel %vm1166, %v2464, %v2463
        %v2466 = vrot.slane %v2461, 5
        %v2467 = vsel %vm1169, %v2466, %v2465
        %v2468 = vpack.c.b16 %v2467, %v2467
        %s2470 = scalar_lea.vmem [#allocation7], 896
        %v2471 = vld [vmem:[%s2470] sm:$0xf]
        %v2472 = vld [vmem:[%s2470 + $0x4] sm:$0xf]
        %v2473 = vld [vmem:[%s2470 + $0x8] sm:$0xf]
        %v2474 = vld [vmem:[%s2470 + $0xc] sm:$0xf]
        %v2475 = vld [vmem:[%s2470 + $0x10] sm:$0xf]
        %v2476 = vld [vmem:[%s2470 + $0x14] sm:$0xf]
        %v2477 = vld [vmem:[%s2470 + $0x18] sm:$0xf]
        %v2478 = vld [vmem:[%s2470 + $0x1c] sm:$0xf]
        %v2479 = vld [vmem:[%s2470 + $0x20] sm:$0xf]
        %v2480 = vld [vmem:[%s2470 + $0x24] sm:$0xf]
        %v2481 = vld [vmem:[%s2470 + $0x28] sm:$0xf]
        %v2482 = vld [vmem:[%s2470 + $0x2c] sm:$0xf]
        %v2483 = vld [vmem:[%s2470 + $0x30] sm:$0xf]
        %v2484 = vld [vmem:[%s2470 + $0x34] sm:$0xf]
        %v2485 = vld [vmem:[%s2470 + $0x38] sm:$0xf]
        %v2486 = vld [vmem:[%s2470 + $0x3c] sm:$0xf]
        %v2487 = vld [vmem:[%s2470 + $0x40] sm:$0xf]
        %v2488 = vld [vmem:[%s2470 + $0x44] sm:$0xf]
        %v2489 = vld [vmem:[%s2470 + $0x48] sm:$0xf]
        %v2490 = vld [vmem:[%s2470 + $0x4c] sm:$0xf]
        %v2491 = vld [vmem:[%s2470 + $0x50] sm:$0xf]
        %v2492 = vld [vmem:[%s2470 + $0x54] sm:$0xf]
        %v2493 = vld [vmem:[%s2470 + $0x58] sm:$0xf]
        %v2494 = vld [vmem:[%s2470 + $0x5c] sm:$0xf]
        %v2495 = vld [vmem:[%s2470 + $0x60] sm:$0xf]
        %v2496 = vld [vmem:[%s2470 + $0x64] sm:$0xf]
        %v2497 = vld [vmem:[%s2470 + $0x68] sm:$0xf]
        %v2498 = vld [vmem:[%s2470 + $0x6c] sm:$0xf]
        %v2499 = vld [vmem:[%s2470 + $0x70] sm:$0xf]
        %v2500 = vld [vmem:[%s2470 + $0x74] sm:$0xf]
        %v2501 = vld [vmem:[%s2470 + $0x78] sm:$0xf]
        %v2502 = vld [vmem:[%s2470 + $0x7c] sm:$0xf]
        %v2535 = vunpack.c.l.b16 %v2471
        %v2536 = vunpack.c.l.b16 %v2472
        %v2537 = vunpack.c.l.b16 %v2473
        %v2538 = vunpack.c.l.b16 %v2474
        %v2539 = vunpack.c.l.b16 %v2475
        %v2540 = vunpack.c.l.b16 %v2476
        %v2541 = vunpack.c.l.b16 %v2477
        %v2542 = vunpack.c.l.b16 %v2478
        %v2543 = vunpack.c.l.b16 %v2479
        %v2544 = vunpack.c.l.b16 %v2480
        %v2545 = vunpack.c.l.b16 %v2481
        %v2546 = vunpack.c.l.b16 %v2482
        %v2547 = vunpack.c.l.b16 %v2483
        %v2548 = vunpack.c.l.b16 %v2484
        %v2549 = vunpack.c.l.b16 %v2485
        %v2550 = vunpack.c.l.b16 %v2486
        %v2551 = vunpack.c.l.b16 %v2487
        %v2552 = vunpack.c.l.b16 %v2488
        %v2553 = vunpack.c.l.b16 %v2489
        %v2554 = vunpack.c.l.b16 %v2490
        %v2555 = vunpack.c.l.b16 %v2491
        %v2556 = vunpack.c.l.b16 %v2492
        %v2557 = vunpack.c.l.b16 %v2493
        %v2558 = vunpack.c.l.b16 %v2494
        %v2559 = vunpack.c.l.b16 %v2495
        %v2560 = vunpack.c.l.b16 %v2496
        %v2561 = vunpack.c.l.b16 %v2497
        %v2562 = vunpack.c.l.b16 %v2498
        %v2563 = vunpack.c.l.b16 %v2499
        %v2564 = vunpack.c.l.b16 %v2500
        %v2565 = vunpack.c.l.b16 %v2501
        %v2566 = vunpack.c.l.b16 %v2502
        %v2567 = vpack.c.b16 %v2536, %v2535
        %v2568 = vpack.c.b16 %v2538, %v2537
        %v2569 = vpack.c.b16 %v2540, %v2539
        %v2570 = vpack.c.b16 %v2542, %v2541
        %v2571 = vpack.c.b16 %v2544, %v2543
        %v2572 = vpack.c.b16 %v2546, %v2545
        %v2573 = vpack.c.b16 %v2548, %v2547
        %v2574 = vpack.c.b16 %v2550, %v2549
        %v2575 = vpack.c.b16 %v2552, %v2551
        %v2576 = vpack.c.b16 %v2554, %v2553
        %v2577 = vpack.c.b16 %v2556, %v2555
        %v2578 = vpack.c.b16 %v2558, %v2557
        %v2579 = vpack.c.b16 %v2560, %v2559
        %v2580 = vpack.c.b16 %v2562, %v2561
        %v2581 = vpack.c.b16 %v2564, %v2563
        %v2582 = vpack.c.b16 %v2566, %v2565
        %2599 = vmatpush.bf16.msra.mxu0 %v2574
        %2600 = vmatpush.bf16.msra.mxu0 %v2573
        %2601 = vmatpush.bf16.msra.mxu0 %v2572
        %2602 = vmatpush.bf16.msra.mxu0 %v2571
        %2603 = vmatpush.bf16.msra.mxu0 %v2570
        %2604 = vmatpush.bf16.msra.mxu0 %v2569
        %2605 = vmatpush.bf16.msra.mxu0 %v2568
        %2606 = vmatpush.bf16.msra.mxu0 %v2567
        %2607 = vmatmul.bf16.gmra.mxu0 %v2452
        %v2608 = vpop.f32.mrf.mxu0
        %v2609 = vadd.f32 0.0, %v2608
        %v2610 = vpop.f32.mrf.mxu0
        %2611 = vdwg.mxu0
        %2612 = vmatpush.bf16.msra.mxu0 %v2582
        %2613 = vmatpush.bf16.msra.mxu0 %v2581
        %2614 = vmatpush.bf16.msra.mxu0 %v2580
        %2615 = vmatpush.bf16.msra.mxu0 %v2579
        %2616 = vmatpush.bf16.msra.mxu0 %v2578
        %2617 = vmatpush.bf16.msra.mxu0 %v2577
        %2618 = vmatpush.bf16.msra.mxu0 %v2576
        %2619 = vmatpush.bf16.msra.mxu0 %v2575
        %2620 = vmatmul.bf16.gmra.mxu0 %v2468
        %v2621 = vpop.f32.mrf.mxu0
        %v2622 = vadd.f32 %v2609, %v2621
        %v2623 = vpop.f32.mrf.mxu0
        %2624 = vdwg.mxu0
        %v2625 = vadd.f32 %v2441, %v2622
        %v2627 = vunpack.c.l.b16 %v1136
        %v2628 = vpack.c.b16 %v2627, %v2627
        %v2629 = vunpack.c.l.b16 %v2628
        %v2630 = vrot.slane %v2097, 7
        %v2631 = vsel %vm1163, %v2630, %v2085
        %v2632 = vrot.slane %v2461, 6
        %v2633 = vsel %vm1166, %v2632, %v2631
        %v2634 = vrot.slane %v2629, 5
        %v2635 = vsel %vm1169, %v2634, %v2633
        %v2636 = vpack.c.b16 %v2635, %v2635
        %v2639 = vunpack.c.l.b16 %v1137
        %v2640 = vpack.c.b16 %v2639, %v2639
        %v2641 = vunpack.c.l.b16 %v2640
        %v2642 = vrot.slane %v2265, 7
        %v2643 = vsel %vm1163, %v2642, %v2097
        %v2644 = vrot.slane %v2629, 6
        %v2645 = vsel %vm1166, %v2644, %v2643
        %v2646 = vrot.slane %v2641, 5
        %v2647 = vsel %vm1169, %v2646, %v2645
        %v2648 = vpack.c.b16 %v2647, %v2647
        %s2650 = scalar_lea.vmem [#allocation7], 1024
        %v2651 = vld [vmem:[%s2650] sm:$0xf]
        %v2652 = vld [vmem:[%s2650 + $0x4] sm:$0xf]
        %v2653 = vld [vmem:[%s2650 + $0x8] sm:$0xf]
        %v2654 = vld [vmem:[%s2650 + $0xc] sm:$0xf]
        %v2655 = vld [vmem:[%s2650 + $0x10] sm:$0xf]
        %v2656 = vld [vmem:[%s2650 + $0x14] sm:$0xf]
        %v2657 = vld [vmem:[%s2650 + $0x18] sm:$0xf]
        %v2658 = vld [vmem:[%s2650 + $0x1c] sm:$0xf]
        %v2659 = vld [vmem:[%s2650 + $0x20] sm:$0xf]
        %v2660 = vld [vmem:[%s2650 + $0x24] sm:$0xf]
        %v2661 = vld [vmem:[%s2650 + $0x28] sm:$0xf]
        %v2662 = vld [vmem:[%s2650 + $0x2c] sm:$0xf]
        %v2663 = vld [vmem:[%s2650 + $0x30] sm:$0xf]
        %v2664 = vld [vmem:[%s2650 + $0x34] sm:$0xf]
        %v2665 = vld [vmem:[%s2650 + $0x38] sm:$0xf]
        %v2666 = vld [vmem:[%s2650 + $0x3c] sm:$0xf]
        %v2667 = vld [vmem:[%s2650 + $0x40] sm:$0xf]
        %v2668 = vld [vmem:[%s2650 + $0x44] sm:$0xf]
        %v2669 = vld [vmem:[%s2650 + $0x48] sm:$0xf]
        %v2670 = vld [vmem:[%s2650 + $0x4c] sm:$0xf]
        %v2671 = vld [vmem:[%s2650 + $0x50] sm:$0xf]
        %v2672 = vld [vmem:[%s2650 + $0x54] sm:$0xf]
        %v2673 = vld [vmem:[%s2650 + $0x58] sm:$0xf]
        %v2674 = vld [vmem:[%s2650 + $0x5c] sm:$0xf]
        %v2675 = vld [vmem:[%s2650 + $0x60] sm:$0xf]
        %v2676 = vld [vmem:[%s2650 + $0x64] sm:$0xf]
        %v2677 = vld [vmem:[%s2650 + $0x68] sm:$0xf]
        %v2678 = vld [vmem:[%s2650 + $0x6c] sm:$0xf]
        %v2679 = vld [vmem:[%s2650 + $0x70] sm:$0xf]
        %v2680 = vld [vmem:[%s2650 + $0x74] sm:$0xf]
        %v2681 = vld [vmem:[%s2650 + $0x78] sm:$0xf]
        %v2682 = vld [vmem:[%s2650 + $0x7c] sm:$0xf]
        %v2715 = vunpack.c.l.b16 %v2651
        %v2716 = vunpack.c.l.b16 %v2652
        %v2717 = vunpack.c.l.b16 %v2653
        %v2718 = vunpack.c.l.b16 %v2654
        %v2719 = vunpack.c.l.b16 %v2655
        %v2720 = vunpack.c.l.b16 %v2656
        %v2721 = vunpack.c.l.b16 %v2657
        %v2722 = vunpack.c.l.b16 %v2658
        %v2723 = vunpack.c.l.b16 %v2659
        %v2724 = vunpack.c.l.b16 %v2660
        %v2725 = vunpack.c.l.b16 %v2661
        %v2726 = vunpack.c.l.b16 %v2662
        %v2727 = vunpack.c.l.b16 %v2663
        %v2728 = vunpack.c.l.b16 %v2664
        %v2729 = vunpack.c.l.b16 %v2665
        %v2730 = vunpack.c.l.b16 %v2666
        %v2731 = vunpack.c.l.b16 %v2667
        %v2732 = vunpack.c.l.b16 %v2668
        %v2733 = vunpack.c.l.b16 %v2669
        %v2734 = vunpack.c.l.b16 %v2670
        %v2735 = vunpack.c.l.b16 %v2671
        %v2736 = vunpack.c.l.b16 %v2672
        %v2737 = vunpack.c.l.b16 %v2673
        %v2738 = vunpack.c.l.b16 %v2674
        %v2739 = vunpack.c.l.b16 %v2675
        %v2740 = vunpack.c.l.b16 %v2676
        %v2741 = vunpack.c.l.b16 %v2677
        %v2742 = vunpack.c.l.b16 %v2678
        %v2743 = vunpack.c.l.b16 %v2679
        %v2744 = vunpack.c.l.b16 %v2680
        %v2745 = vunpack.c.l.b16 %v2681
        %v2746 = vunpack.c.l.b16 %v2682
        %v2747 = vpack.c.b16 %v2716, %v2715
        %v2748 = vpack.c.b16 %v2718, %v2717
        %v2749 = vpack.c.b16 %v2720, %v2719
        %v2750 = vpack.c.b16 %v2722, %v2721
        %v2751 = vpack.c.b16 %v2724, %v2723
        %v2752 = vpack.c.b16 %v2726, %v2725
        %v2753 = vpack.c.b16 %v2728, %v2727
        %v2754 = vpack.c.b16 %v2730, %v2729
        %v2755 = vpack.c.b16 %v2732, %v2731
        %v2756 = vpack.c.b16 %v2734, %v2733
        %v2757 = vpack.c.b16 %v2736, %v2735
        %v2758 = vpack.c.b16 %v2738, %v2737
        %v2759 = vpack.c.b16 %v2740, %v2739
        %v2760 = vpack.c.b16 %v2742, %v2741
        %v2761 = vpack.c.b16 %v2744, %v2743
        %v2762 = vpack.c.b16 %v2746, %v2745
        %2779 = vmatpush.bf16.msra.mxu0 %v2754
        %2780 = vmatpush.bf16.msra.mxu0 %v2753
        %2781 = vmatpush.bf16.msra.mxu0 %v2752
        %2782 = vmatpush.bf16.msra.mxu0 %v2751
        %2783 = vmatpush.bf16.msra.mxu0 %v2750
        %2784 = vmatpush.bf16.msra.mxu0 %v2749
        %2785 = vmatpush.bf16.msra.mxu0 %v2748
        %2786 = vmatpush.bf16.msra.mxu0 %v2747
        %2787 = vmatmul.bf16.gmra.mxu0 %v2636
        %v2788 = vpop.f32.mrf.mxu0
        %v2789 = vadd.f32 0.0, %v2788
        %v2790 = vpop.f32.mrf.mxu0
        %2791 = vdwg.mxu0
        %2792 = vmatpush.bf16.msra.mxu0 %v2762
        %2793 = vmatpush.bf16.msra.mxu0 %v2761
        %2794 = vmatpush.bf16.msra.mxu0 %v2760
        %2795 = vmatpush.bf16.msra.mxu0 %v2759
        %2796 = vmatpush.bf16.msra.mxu0 %v2758
        %2797 = vmatpush.bf16.msra.mxu0 %v2757
        %2798 = vmatpush.bf16.msra.mxu0 %v2756
        %2799 = vmatpush.bf16.msra.mxu0 %v2755
        %2800 = vmatmul.bf16.gmra.mxu0 %v2648
        %v2801 = vpop.f32.mrf.mxu0
        %v2802 = vadd.f32 %v2789, %v2801
        %v2803 = vpop.f32.mrf.mxu0
        %2804 = vdwg.mxu0
        %v2805 = vadd.f32 %v2625, %v2802
        %v2807 = vunpack.c.l.b16 %v1138
        %v2808 = vpack.c.b16 %v2807, %v2807
        %v2809 = vunpack.c.l.b16 %v2808
        %v2810 = vrot.slane %v2277, 7
        %v2811 = vsel %vm1163, %v2810, %v2265
        %v2812 = vrot.slane %v2641, 6
        %v2813 = vsel %vm1166, %v2812, %v2811
        %v2814 = vrot.slane %v2809, 5
        %v2815 = vsel %vm1169, %v2814, %v2813
        %v2816 = vpack.c.b16 %v2815, %v2815
        %v2819 = vunpack.c.l.b16 %v1139
        %v2820 = vpack.c.b16 %v2819, %v2819
        %v2821 = vunpack.c.l.b16 %v2820
        %v2822 = vrot.slane %v2445, 7
        %v2823 = vsel %vm1163, %v2822, %v2277
        %v2824 = vrot.slane %v2809, 6
        %v2825 = vsel %vm1166, %v2824, %v2823
        %v2826 = vrot.slane %v2821, 5
        %v2827 = vsel %vm1169, %v2826, %v2825
        %v2828 = vpack.c.b16 %v2827, %v2827
        %s2830 = scalar_lea.vmem [#allocation7], 1152
        %v2831 = vld [vmem:[%s2830] sm:$0xf]
        %v2832 = vld [vmem:[%s2830 + $0x4] sm:$0xf]
        %v2833 = vld [vmem:[%s2830 + $0x8] sm:$0xf]
        %v2834 = vld [vmem:[%s2830 + $0xc] sm:$0xf]
        %v2835 = vld [vmem:[%s2830 + $0x10] sm:$0xf]
        %v2836 = vld [vmem:[%s2830 + $0x14] sm:$0xf]
        %v2837 = vld [vmem:[%s2830 + $0x18] sm:$0xf]
        %v2838 = vld [vmem:[%s2830 + $0x1c] sm:$0xf]
        %v2839 = vld [vmem:[%s2830 + $0x20] sm:$0xf]
        %v2840 = vld [vmem:[%s2830 + $0x24] sm:$0xf]
        %v2841 = vld [vmem:[%s2830 + $0x28] sm:$0xf]
        %v2842 = vld [vmem:[%s2830 + $0x2c] sm:$0xf]
        %v2843 = vld [vmem:[%s2830 + $0x30] sm:$0xf]
        %v2844 = vld [vmem:[%s2830 + $0x34] sm:$0xf]
        %v2845 = vld [vmem:[%s2830 + $0x38] sm:$0xf]
        %v2846 = vld [vmem:[%s2830 + $0x3c] sm:$0xf]
        %v2847 = vld [vmem:[%s2830 + $0x40] sm:$0xf]
        %v2848 = vld [vmem:[%s2830 + $0x44] sm:$0xf]
        %v2849 = vld [vmem:[%s2830 + $0x48] sm:$0xf]
        %v2850 = vld [vmem:[%s2830 + $0x4c] sm:$0xf]
        %v2851 = vld [vmem:[%s2830 + $0x50] sm:$0xf]
        %v2852 = vld [vmem:[%s2830 + $0x54] sm:$0xf]
        %v2853 = vld [vmem:[%s2830 + $0x58] sm:$0xf]
        %v2854 = vld [vmem:[%s2830 + $0x5c] sm:$0xf]
        %v2855 = vld [vmem:[%s2830 + $0x60] sm:$0xf]
        %v2856 = vld [vmem:[%s2830 + $0x64] sm:$0xf]
        %v2857 = vld [vmem:[%s2830 + $0x68] sm:$0xf]
        %v2858 = vld [vmem:[%s2830 + $0x6c] sm:$0xf]
        %v2859 = vld [vmem:[%s2830 + $0x70] sm:$0xf]
        %v2860 = vld [vmem:[%s2830 + $0x74] sm:$0xf]
        %v2861 = vld [vmem:[%s2830 + $0x78] sm:$0xf]
        %v2862 = vld [vmem:[%s2830 + $0x7c] sm:$0xf]
        %v2895 = vunpack.c.l.b16 %v2831
        %v2896 = vunpack.c.l.b16 %v2832
        %v2897 = vunpack.c.l.b16 %v2833
        %v2898 = vunpack.c.l.b16 %v2834
        %v2899 = vunpack.c.l.b16 %v2835
        %v2900 = vunpack.c.l.b16 %v2836
        %v2901 = vunpack.c.l.b16 %v2837
        %v2902 = vunpack.c.l.b16 %v2838
        %v2903 = vunpack.c.l.b16 %v2839
        %v2904 = vunpack.c.l.b16 %v2840
        %v2905 = vunpack.c.l.b16 %v2841
        %v2906 = vunpack.c.l.b16 %v2842
        %v2907 = vunpack.c.l.b16 %v2843
        %v2908 = vunpack.c.l.b16 %v2844
        %v2909 = vunpack.c.l.b16 %v2845
        %v2910 = vunpack.c.l.b16 %v2846
        %v2911 = vunpack.c.l.b16 %v2847
        %v2912 = vunpack.c.l.b16 %v2848
        %v2913 = vunpack.c.l.b16 %v2849
        %v2914 = vunpack.c.l.b16 %v2850
        %v2915 = vunpack.c.l.b16 %v2851
        %v2916 = vunpack.c.l.b16 %v2852
        %v2917 = vunpack.c.l.b16 %v2853
        %v2918 = vunpack.c.l.b16 %v2854
        %v2919 = vunpack.c.l.b16 %v2855
        %v2920 = vunpack.c.l.b16 %v2856
        %v2921 = vunpack.c.l.b16 %v2857
        %v2922 = vunpack.c.l.b16 %v2858
        %v2923 = vunpack.c.l.b16 %v2859
        %v2924 = vunpack.c.l.b16 %v2860
        %v2925 = vunpack.c.l.b16 %v2861
        %v2926 = vunpack.c.l.b16 %v2862
        %v2927 = vpack.c.b16 %v2896, %v2895
        %v2928 = vpack.c.b16 %v2898, %v2897
        %v2929 = vpack.c.b16 %v2900, %v2899
        %v2930 = vpack.c.b16 %v2902, %v2901
        %v2931 = vpack.c.b16 %v2904, %v2903
        %v2932 = vpack.c.b16 %v2906, %v2905
        %v2933 = vpack.c.b16 %v2908, %v2907
        %v2934 = vpack.c.b16 %v2910, %v2909
        %v2935 = vpack.c.b16 %v2912, %v2911
        %v2936 = vpack.c.b16 %v2914, %v2913
        %v2937 = vpack.c.b16 %v2916, %v2915
        %v2938 = vpack.c.b16 %v2918, %v2917
        %v2939 = vpack.c.b16 %v2920, %v2919
        %v2940 = vpack.c.b16 %v2922, %v2921
        %v2941 = vpack.c.b16 %v2924, %v2923
        %v2942 = vpack.c.b16 %v2926, %v2925
        %2959 = vmatpush.bf16.msra.mxu0 %v2934
        %2960 = vmatpush.bf16.msra.mxu0 %v2933
        %2961 = vmatpush.bf16.msra.mxu0 %v2932
        %2962 = vmatpush.bf16.msra.mxu0 %v2931
        %2963 = vmatpush.bf16.msra.mxu0 %v2930
        %2964 = vmatpush.bf16.msra.mxu0 %v2929
        %2965 = vmatpush.bf16.msra.mxu0 %v2928
        %2966 = vmatpush.bf16.msra.mxu0 %v2927
        %2967 = vmatmul.bf16.gmra.mxu0 %v2816
        %v2968 = vpop.f32.mrf.mxu0
        %v2969 = vadd.f32 0.0, %v2968
        %v2970 = vpop.f32.mrf.mxu0
        %2971 = vdwg.mxu0
        %2972 = vmatpush.bf16.msra.mxu0 %v2942
        %2973 = vmatpush.bf16.msra.mxu0 %v2941
        %2974 = vmatpush.bf16.msra.mxu0 %v2940
        %2975 = vmatpush.bf16.msra.mxu0 %v2939
        %2976 = vmatpush.bf16.msra.mxu0 %v2938
        %2977 = vmatpush.bf16.msra.mxu0 %v2937
        %2978 = vmatpush.bf16.msra.mxu0 %v2936
        %2979 = vmatpush.bf16.msra.mxu0 %v2935
        %2980 = vmatmul.bf16.gmra.mxu0 %v2828
        %v2981 = vpop.f32.mrf.mxu0
        %v2982 = vadd.f32 %v2969, %v2981
        %v2983 = vpop.f32.mrf.mxu0
        %2984 = vdwg.mxu0
        %v2985 = vadd.f32 %v2805, %v2982
        %v2988 = vunpack.c.l.b16 %v1140
        %v2989 = vunpack.c.l.b16 %v1141
        %v2990 = vpack.c.b16 %v2988, %v2988
        %v2991 = vpack.c.b16 %v2989, %v2989
        %v2992 = vunpack.c.l.b16 %v2990
        %v2993 = vunpack.c.l.b16 %v2991
        %v2994 = vrot.slane %v2461, 7
        %v2995 = vsel %vm1163, %v2994, %v2460
        %v2996 = vrot.slane %v2992, 6
        %v2997 = vsel %vm1166, %v2996, %v2995
        %v2998 = vrot.slane %v2993, 5
        %v2999 = vsel %vm1169, %v2998, %v2997
        %v3000 = vpack.c.b16 %v2999, %v2999
        %v3003 = vunpack.c.l.b16 %v1142
        %v3004 = vpack.c.b16 %v3003, %v3003
        %v3005 = vunpack.c.l.b16 %v3004
        %v3006 = vrot.slane %v2629, 7
        %v3007 = vsel %vm1163, %v3006, %v2461
        %v3008 = vrot.slane %v2993, 6
        %v3009 = vsel %vm1166, %v3008, %v3007
        %v3010 = vrot.slane %v3005, 5
        %v3011 = vsel %vm1169, %v3010, %v3009
        %v3012 = vpack.c.b16 %v3011, %v3011
        %s3014 = scalar_lea.vmem [#allocation7], 1280
        %v3015 = vld [vmem:[%s3014] sm:$0xf]
        %v3016 = vld [vmem:[%s3014 + $0x4] sm:$0xf]
        %v3017 = vld [vmem:[%s3014 + $0x8] sm:$0xf]
        %v3018 = vld [vmem:[%s3014 + $0xc] sm:$0xf]
        %v3019 = vld [vmem:[%s3014 + $0x10] sm:$0xf]
        %v3020 = vld [vmem:[%s3014 + $0x14] sm:$0xf]
        %v3021 = vld [vmem:[%s3014 + $0x18] sm:$0xf]
        %v3022 = vld [vmem:[%s3014 + $0x1c] sm:$0xf]
        %v3023 = vld [vmem:[%s3014 + $0x20] sm:$0xf]
        %v3024 = vld [vmem:[%s3014 + $0x24] sm:$0xf]
        %v3025 = vld [vmem:[%s3014 + $0x28] sm:$0xf]
        %v3026 = vld [vmem:[%s3014 + $0x2c] sm:$0xf]
        %v3027 = vld [vmem:[%s3014 + $0x30] sm:$0xf]
        %v3028 = vld [vmem:[%s3014 + $0x34] sm:$0xf]
        %v3029 = vld [vmem:[%s3014 + $0x38] sm:$0xf]
        %v3030 = vld [vmem:[%s3014 + $0x3c] sm:$0xf]
        %v3031 = vld [vmem:[%s3014 + $0x40] sm:$0xf]
        %v3032 = vld [vmem:[%s3014 + $0x44] sm:$0xf]
        %v3033 = vld [vmem:[%s3014 + $0x48] sm:$0xf]
        %v3034 = vld [vmem:[%s3014 + $0x4c] sm:$0xf]
        %v3035 = vld [vmem:[%s3014 + $0x50] sm:$0xf]
        %v3036 = vld [vmem:[%s3014 + $0x54] sm:$0xf]
        %v3037 = vld [vmem:[%s3014 + $0x58] sm:$0xf]
        %v3038 = vld [vmem:[%s3014 + $0x5c] sm:$0xf]
        %v3039 = vld [vmem:[%s3014 + $0x60] sm:$0xf]
        %v3040 = vld [vmem:[%s3014 + $0x64] sm:$0xf]
        %v3041 = vld [vmem:[%s3014 + $0x68] sm:$0xf]
        %v3042 = vld [vmem:[%s3014 + $0x6c] sm:$0xf]
        %v3043 = vld [vmem:[%s3014 + $0x70] sm:$0xf]
        %v3044 = vld [vmem:[%s3014 + $0x74] sm:$0xf]
        %v3045 = vld [vmem:[%s3014 + $0x78] sm:$0xf]
        %v3046 = vld [vmem:[%s3014 + $0x7c] sm:$0xf]
        %v3079 = vunpack.c.l.b16 %v3015
        %v3080 = vunpack.c.l.b16 %v3016
        %v3081 = vunpack.c.l.b16 %v3017
        %v3082 = vunpack.c.l.b16 %v3018
        %v3083 = vunpack.c.l.b16 %v3019
        %v3084 = vunpack.c.l.b16 %v3020
        %v3085 = vunpack.c.l.b16 %v3021
        %v3086 = vunpack.c.l.b16 %v3022
        %v3087 = vunpack.c.l.b16 %v3023
        %v3088 = vunpack.c.l.b16 %v3024
        %v3089 = vunpack.c.l.b16 %v3025
        %v3090 = vunpack.c.l.b16 %v3026
        %v3091 = vunpack.c.l.b16 %v3027
        %v3092 = vunpack.c.l.b16 %v3028
        %v3093 = vunpack.c.l.b16 %v3029
        %v3094 = vunpack.c.l.b16 %v3030
        %v3095 = vunpack.c.l.b16 %v3031
        %v3096 = vunpack.c.l.b16 %v3032
        %v3097 = vunpack.c.l.b16 %v3033
        %v3098 = vunpack.c.l.b16 %v3034
        %v3099 = vunpack.c.l.b16 %v3035
        %v3100 = vunpack.c.l.b16 %v3036
        %v3101 = vunpack.c.l.b16 %v3037
        %v3102 = vunpack.c.l.b16 %v3038
        %v3103 = vunpack.c.l.b16 %v3039
        %v3104 = vunpack.c.l.b16 %v3040
        %v3105 = vunpack.c.l.b16 %v3041
        %v3106 = vunpack.c.l.b16 %v3042
        %v3107 = vunpack.c.l.b16 %v3043
        %v3108 = vunpack.c.l.b16 %v3044
        %v3109 = vunpack.c.l.b16 %v3045
        %v3110 = vunpack.c.l.b16 %v3046
        %v3111 = vpack.c.b16 %v3080, %v3079
        %v3112 = vpack.c.b16 %v3082, %v3081
        %v3113 = vpack.c.b16 %v3084, %v3083
        %v3114 = vpack.c.b16 %v3086, %v3085
        %v3115 = vpack.c.b16 %v3088, %v3087
        %v3116 = vpack.c.b16 %v3090, %v3089
        %v3117 = vpack.c.b16 %v3092, %v3091
        %v3118 = vpack.c.b16 %v3094, %v3093
        %v3119 = vpack.c.b16 %v3096, %v3095
        %v3120 = vpack.c.b16 %v3098, %v3097
        %v3121 = vpack.c.b16 %v3100, %v3099
        %v3122 = vpack.c.b16 %v3102, %v3101
        %v3123 = vpack.c.b16 %v3104, %v3103
        %v3124 = vpack.c.b16 %v3106, %v3105
        %v3125 = vpack.c.b16 %v3108, %v3107
        %v3126 = vpack.c.b16 %v3110, %v3109
        %3143 = vmatpush.bf16.msra.mxu0 %v3118
        %3144 = vmatpush.bf16.msra.mxu0 %v3117
        %3145 = vmatpush.bf16.msra.mxu0 %v3116
        %3146 = vmatpush.bf16.msra.mxu0 %v3115
        %3147 = vmatpush.bf16.msra.mxu0 %v3114
        %3148 = vmatpush.bf16.msra.mxu0 %v3113
        %3149 = vmatpush.bf16.msra.mxu0 %v3112
        %3150 = vmatpush.bf16.msra.mxu0 %v3111
        %3151 = vmatmul.bf16.gmra.mxu0 %v3000
        %v3152 = vpop.f32.mrf.mxu0
        %v3153 = vadd.f32 0.0, %v3152
        %v3154 = vpop.f32.mrf.mxu0
        %3155 = vdwg.mxu0
        %3156 = vmatpush.bf16.msra.mxu0 %v3126
        %3157 = vmatpush.bf16.msra.mxu0 %v3125
        %3158 = vmatpush.bf16.msra.mxu0 %v3124
        %3159 = vmatpush.bf16.msra.mxu0 %v3123
        %3160 = vmatpush.bf16.msra.mxu0 %v3122
        %3161 = vmatpush.bf16.msra.mxu0 %v3121
        %3162 = vmatpush.bf16.msra.mxu0 %v3120
        %3163 = vmatpush.bf16.msra.mxu0 %v3119
        %3164 = vmatmul.bf16.gmra.mxu0 %v3012
        %v3165 = vpop.f32.mrf.mxu0
        %v3166 = vadd.f32 %v3153, %v3165
        %v3167 = vpop.f32.mrf.mxu0
        %3168 = vdwg.mxu0
        %v3169 = vadd.f32 %v2985, %v3166
        %v3171 = vunpack.c.l.b16 %v1143
        %v3172 = vpack.c.b16 %v3171, %v3171
        %v3173 = vunpack.c.l.b16 %v3172
        %v3174 = vrot.slane %v2641, 7
        %v3175 = vsel %vm1163, %v3174, %v2629
        %v3176 = vrot.slane %v3005, 6
        %v3177 = vsel %vm1166, %v3176, %v3175
        %v3178 = vrot.slane %v3173, 5
        %v3179 = vsel %vm1169, %v3178, %v3177
        %v3180 = vpack.c.b16 %v3179, %v3179
        %v3183 = vunpack.c.l.b16 %v1144
        %v3184 = vpack.c.b16 %v3183, %v3183
        %v3185 = vunpack.c.l.b16 %v3184
        %v3186 = vrot.slane %v2809, 7
        %v3187 = vsel %vm1163, %v3186, %v2641
        %v3188 = vrot.slane %v3173, 6
        %v3189 = vsel %vm1166, %v3188, %v3187
        %v3190 = vrot.slane %v3185, 5
        %v3191 = vsel %vm1169, %v3190, %v3189
        %v3192 = vpack.c.b16 %v3191, %v3191
        %s3194 = scalar_lea.vmem [#allocation7], 1408
        %v3195 = vld [vmem:[%s3194] sm:$0xf]
        %v3196 = vld [vmem:[%s3194 + $0x4] sm:$0xf]
        %v3197 = vld [vmem:[%s3194 + $0x8] sm:$0xf]
        %v3198 = vld [vmem:[%s3194 + $0xc] sm:$0xf]
        %v3199 = vld [vmem:[%s3194 + $0x10] sm:$0xf]
        %v3200 = vld [vmem:[%s3194 + $0x14] sm:$0xf]
        %v3201 = vld [vmem:[%s3194 + $0x18] sm:$0xf]
        %v3202 = vld [vmem:[%s3194 + $0x1c] sm:$0xf]
        %v3203 = vld [vmem:[%s3194 + $0x20] sm:$0xf]
        %v3204 = vld [vmem:[%s3194 + $0x24] sm:$0xf]
        %v3205 = vld [vmem:[%s3194 + $0x28] sm:$0xf]
        %v3206 = vld [vmem:[%s3194 + $0x2c] sm:$0xf]
        %v3207 = vld [vmem:[%s3194 + $0x30] sm:$0xf]
        %v3208 = vld [vmem:[%s3194 + $0x34] sm:$0xf]
        %v3209 = vld [vmem:[%s3194 + $0x38] sm:$0xf]
        %v3210 = vld [vmem:[%s3194 + $0x3c] sm:$0xf]
        %v3211 = vld [vmem:[%s3194 + $0x40] sm:$0xf]
        %v3212 = vld [vmem:[%s3194 + $0x44] sm:$0xf]
        %v3213 = vld [vmem:[%s3194 + $0x48] sm:$0xf]
        %v3214 = vld [vmem:[%s3194 + $0x4c] sm:$0xf]
        %v3215 = vld [vmem:[%s3194 + $0x50] sm:$0xf]
        %v3216 = vld [vmem:[%s3194 + $0x54] sm:$0xf]
        %v3217 = vld [vmem:[%s3194 + $0x58] sm:$0xf]
        %v3218 = vld [vmem:[%s3194 + $0x5c] sm:$0xf]
        %v3219 = vld [vmem:[%s3194 + $0x60] sm:$0xf]
        %v3220 = vld [vmem:[%s3194 + $0x64] sm:$0xf]
        %v3221 = vld [vmem:[%s3194 + $0x68] sm:$0xf]
        %v3222 = vld [vmem:[%s3194 + $0x6c] sm:$0xf]
        %v3223 = vld [vmem:[%s3194 + $0x70] sm:$0xf]
        %v3224 = vld [vmem:[%s3194 + $0x74] sm:$0xf]
        %v3225 = vld [vmem:[%s3194 + $0x78] sm:$0xf]
        %v3226 = vld [vmem:[%s3194 + $0x7c] sm:$0xf]
        %v3259 = vunpack.c.l.b16 %v3195
        %v3260 = vunpack.c.l.b16 %v3196
        %v3261 = vunpack.c.l.b16 %v3197
        %v3262 = vunpack.c.l.b16 %v3198
        %v3263 = vunpack.c.l.b16 %v3199
        %v3264 = vunpack.c.l.b16 %v3200
        %v3265 = vunpack.c.l.b16 %v3201
        %v3266 = vunpack.c.l.b16 %v3202
        %v3267 = vunpack.c.l.b16 %v3203
        %v3268 = vunpack.c.l.b16 %v3204
        %v3269 = vunpack.c.l.b16 %v3205
        %v3270 = vunpack.c.l.b16 %v3206
        %v3271 = vunpack.c.l.b16 %v3207
        %v3272 = vunpack.c.l.b16 %v3208
        %v3273 = vunpack.c.l.b16 %v3209
        %v3274 = vunpack.c.l.b16 %v3210
        %v3275 = vunpack.c.l.b16 %v3211
        %v3276 = vunpack.c.l.b16 %v3212
        %v3277 = vunpack.c.l.b16 %v3213
        %v3278 = vunpack.c.l.b16 %v3214
        %v3279 = vunpack.c.l.b16 %v3215
        %v3280 = vunpack.c.l.b16 %v3216
        %v3281 = vunpack.c.l.b16 %v3217
        %v3282 = vunpack.c.l.b16 %v3218
        %v3283 = vunpack.c.l.b16 %v3219
        %v3284 = vunpack.c.l.b16 %v3220
        %v3285 = vunpack.c.l.b16 %v3221
        %v3286 = vunpack.c.l.b16 %v3222
        %v3287 = vunpack.c.l.b16 %v3223
        %v3288 = vunpack.c.l.b16 %v3224
        %v3289 = vunpack.c.l.b16 %v3225
        %v3290 = vunpack.c.l.b16 %v3226
        %v3291 = vpack.c.b16 %v3260, %v3259
        %v3292 = vpack.c.b16 %v3262, %v3261
        %v3293 = vpack.c.b16 %v3264, %v3263
        %v3294 = vpack.c.b16 %v3266, %v3265
        %v3295 = vpack.c.b16 %v3268, %v3267
        %v3296 = vpack.c.b16 %v3270, %v3269
        %v3297 = vpack.c.b16 %v3272, %v3271
        %v3298 = vpack.c.b16 %v3274, %v3273
        %v3299 = vpack.c.b16 %v3276, %v3275
        %v3300 = vpack.c.b16 %v3278, %v3277
        %v3301 = vpack.c.b16 %v3280, %v3279
        %v3302 = vpack.c.b16 %v3282, %v3281
        %v3303 = vpack.c.b16 %v3284, %v3283
        %v3304 = vpack.c.b16 %v3286, %v3285
        %v3305 = vpack.c.b16 %v3288, %v3287
        %v3306 = vpack.c.b16 %v3290, %v3289
        %3323 = vmatpush.bf16.msra.mxu0 %v3298
        %3324 = vmatpush.bf16.msra.mxu0 %v3297
        %3325 = vmatpush.bf16.msra.mxu0 %v3296
        %3326 = vmatpush.bf16.msra.mxu0 %v3295
        %3327 = vmatpush.bf16.msra.mxu0 %v3294
        %3328 = vmatpush.bf16.msra.mxu0 %v3293
        %3329 = vmatpush.bf16.msra.mxu0 %v3292
        %3330 = vmatpush.bf16.msra.mxu0 %v3291
        %3331 = vmatmul.bf16.gmra.mxu0 %v3180
        %v3332 = vpop.f32.mrf.mxu0
        %v3333 = vadd.f32 0.0, %v3332
        %v3334 = vpop.f32.mrf.mxu0
        %3335 = vdwg.mxu0
        %3336 = vmatpush.bf16.msra.mxu0 %v3306
        %3337 = vmatpush.bf16.msra.mxu0 %v3305
        %3338 = vmatpush.bf16.msra.mxu0 %v3304
        %3339 = vmatpush.bf16.msra.mxu0 %v3303
        %3340 = vmatpush.bf16.msra.mxu0 %v3302
        %3341 = vmatpush.bf16.msra.mxu0 %v3301
        %3342 = vmatpush.bf16.msra.mxu0 %v3300
        %3343 = vmatpush.bf16.msra.mxu0 %v3299
        %3344 = vmatmul.bf16.gmra.mxu0 %v3192
        %v3345 = vpop.f32.mrf.mxu0
        %v3346 = vadd.f32 %v3333, %v3345
        %v3347 = vpop.f32.mrf.mxu0
        %3348 = vdwg.mxu0
        %v3349 = vadd.f32 %v3169, %v3346
        %s3350 = scalar_lea.vmem [#allocation7], 1536
        %v3351 = vld [vmem:[%s3350] sm:$0xf]
        %v3352 = vld [vmem:[%s3350 + $0x4] sm:$0xf]
        %v3353 = vld [vmem:[%s3350 + $0x8] sm:$0xf]
        %v3354 = vld [vmem:[%s3350 + $0xc] sm:$0xf]
        %v3355 = vld [vmem:[%s3350 + $0x10] sm:$0xf]
        %v3356 = vld [vmem:[%s3350 + $0x14] sm:$0xf]
        %v3357 = vld [vmem:[%s3350 + $0x18] sm:$0xf]
        %v3358 = vld [vmem:[%s3350 + $0x1c] sm:$0xf]
        %v3359 = vld [vmem:[%s3350 + $0x20] sm:$0xf]
        %v3360 = vld [vmem:[%s3350 + $0x24] sm:$0xf]
        %v3361 = vld [vmem:[%s3350 + $0x28] sm:$0xf]
        %v3362 = vld [vmem:[%s3350 + $0x2c] sm:$0xf]
        %v3363 = vld [vmem:[%s3350 + $0x30] sm:$0xf]
        %v3364 = vld [vmem:[%s3350 + $0x34] sm:$0xf]
        %v3365 = vld [vmem:[%s3350 + $0x38] sm:$0xf]
        %v3366 = vld [vmem:[%s3350 + $0x3c] sm:$0xf]
        %v3368 = vunpack.c.l.b16 %v1145
        %v3369 = vpack.c.b16 %v3368, %v3368
        %v3370 = vunpack.c.l.b16 %v3369
        %v3371 = vrot.slane %v2821, 7
        %v3372 = vsel %vm1163, %v3371, %v2809
        %v3373 = vrot.slane %v3185, 6
        %v3374 = vsel %vm1166, %v3373, %v3372
        %v3375 = vrot.slane %v3370, 5
        %v3376 = vsel %vm1169, %v3375, %v3374
        %v3377 = vpack.c.b16 %v3376, %v3376
        %v3395 = vunpack.c.l.b16 %v3351
        %v3396 = vunpack.c.l.b16 %v3352
        %v3397 = vunpack.c.l.b16 %v3353
        %v3398 = vunpack.c.l.b16 %v3354
        %v3399 = vunpack.c.l.b16 %v3355
        %v3400 = vunpack.c.l.b16 %v3356
        %v3401 = vunpack.c.l.b16 %v3357
        %v3402 = vunpack.c.l.b16 %v3358
        %v3403 = vunpack.c.l.b16 %v3359
        %v3404 = vunpack.c.l.b16 %v3360
        %v3405 = vunpack.c.l.b16 %v3361
        %v3406 = vunpack.c.l.b16 %v3362
        %v3407 = vunpack.c.l.b16 %v3363
        %v3408 = vunpack.c.l.b16 %v3364
        %v3409 = vunpack.c.l.b16 %v3365
        %v3410 = vunpack.c.l.b16 %v3366
        %v3411 = vpack.c.b16 %v3396, %v3395
        %v3412 = vpack.c.b16 %v3398, %v3397
        %v3413 = vpack.c.b16 %v3400, %v3399
        %v3414 = vpack.c.b16 %v3402, %v3401
        %v3415 = vpack.c.b16 %v3404, %v3403
        %v3416 = vpack.c.b16 %v3406, %v3405
        %v3417 = vpack.c.b16 %v3408, %v3407
        %v3418 = vpack.c.b16 %v3410, %v3409
        %3427 = vmatpush.bf16.msra.mxu0 %v3418
        %3428 = vmatpush.bf16.msra.mxu0 %v3417
        %3429 = vmatpush.bf16.msra.mxu0 %v3416
        %3430 = vmatpush.bf16.msra.mxu0 %v3415
        %3431 = vmatpush.bf16.msra.mxu0 %v3414
        %3432 = vmatpush.bf16.msra.mxu0 %v3413
        %3433 = vmatpush.bf16.msra.mxu0 %v3412
        %3434 = vmatpush.bf16.msra.mxu0 %v3411
        %3435 = vmatmul.bf16.gmra.mxu0 %v3377
        %v3436 = vpop.f32.mrf.mxu0
        %v3437 = vadd.f32 0.0, %v3436
        %v3438 = vpop.f32.mrf.mxu0
        %3439 = vdwg.mxu0
        %v3440 = vadd.f32 %v3349, %v3437
        %v3441 = vld [vmem:[%s4] sm:$0x1]
        %v3443 = vrot.slane %v3440, 2
        %v3445 = vmax.f32 %v3440, %v3443
        %v3447 = vrot.slane %v3445, 7
        %v3448 = vrot.slane %v3447, 2
        %v3450 = vmax.f32 %v3445, %v3448
        %v3451 = vadd.f32 %v3450, %v3441
        %vm3452 = vcmp.ge.f32.partialorder %v3451, 0.0
        %v3453 = vmul.f32 %v3451, 0.01
        %v3454 = vsel %vm3452, %v3451, %v3453
        %v3455 = vpack.c.bf16 %v3454, %v3454
        %v3456 = vld [vmem:[#allocation8] sm:$0xf]
        %v3457 = vld [vmem:[#allocation8 + $0x4] sm:$0xf]
        %v3458 = vld [vmem:[#allocation8 + $0x8] sm:$0xf]
        %v3459 = vld [vmem:[#allocation8 + $0xc] sm:$0xf]
        %v3460 = vld [vmem:[#allocation8 + $0x10] sm:$0xf]
        %v3461 = vld [vmem:[#allocation8 + $0x14] sm:$0xf]
        %v3462 = vld [vmem:[#allocation8 + $0x18] sm:$0xf]
        %v3463 = vld [vmem:[#allocation8 + $0x1c] sm:$0xf]
        %v3464 = vld [vmem:[#allocation8 + $0x20] sm:$0xf]
        %v3465 = vld [vmem:[#allocation8 + $0x24] sm:$0xf]
        %v3466 = vld [vmem:[#allocation8 + $0x28] sm:$0xf]
        %v3467 = vld [vmem:[#allocation8 + $0x2c] sm:$0xf]
        %v3468 = vld [vmem:[#allocation8 + $0x30] sm:$0xf]
        %v3469 = vld [vmem:[#allocation8 + $0x34] sm:$0xf]
        %v3470 = vld [vmem:[#allocation8 + $0x38] sm:$0xf]
        %v3471 = vld [vmem:[#allocation8 + $0x3c] sm:$0xf]
        %v3472 = vld [vmem:[%s6] sm:$0x1]
        %v3489 = vunpack.c.l.b16 %v3456
        %v3490 = vunpack.c.l.b16 %v3457
        %v3491 = vunpack.c.l.b16 %v3458
        %v3492 = vunpack.c.l.b16 %v3459
        %v3493 = vunpack.c.l.b16 %v3460
        %v3494 = vunpack.c.l.b16 %v3461
        %v3495 = vunpack.c.l.b16 %v3462
        %v3496 = vunpack.c.l.b16 %v3463
        %v3497 = vunpack.c.l.b16 %v3464
        %v3498 = vunpack.c.l.b16 %v3465
        %v3499 = vunpack.c.l.b16 %v3466
        %v3500 = vunpack.c.l.b16 %v3467
        %v3501 = vunpack.c.l.b16 %v3468
        %v3502 = vunpack.c.l.b16 %v3469
        %v3503 = vunpack.c.l.b16 %v3470
        %v3504 = vunpack.c.l.b16 %v3471
        %v3505 = vpack.c.b16 %v3490, %v3489
        %v3506 = vpack.c.b16 %v3492, %v3491
        %v3507 = vpack.c.b16 %v3494, %v3493
        %v3508 = vpack.c.b16 %v3496, %v3495
        %v3509 = vpack.c.b16 %v3498, %v3497
        %v3510 = vpack.c.b16 %v3500, %v3499
        %v3511 = vpack.c.b16 %v3502, %v3501
        %v3512 = vpack.c.b16 %v3504, %v3503
        %3521 = vmatpush.bf16.msra.mxu0 %v3512
        %3522 = vmatpush.bf16.msra.mxu0 %v3511
        %3523 = vmatpush.bf16.msra.mxu0 %v3510
        %3524 = vmatpush.bf16.msra.mxu0 %v3509
        %3525 = vmatpush.bf16.msra.mxu0 %v3508
        %3526 = vmatpush.bf16.msra.mxu0 %v3507
        %3527 = vmatpush.bf16.msra.mxu0 %v3506
        %3528 = vmatpush.bf16.msra.mxu0 %v3505
        %3529 = vmatmul.bf16.gmra.mxu0 %v3455
        %v3530 = vpop.f32.mrf.mxu0
        %v3531 = vadd.f32 %v3472, %v3530
        %v3532 = vpop.f32.mrf.mxu0
        %3533 = vdwg.mxu0
        %vm3534 = vcmp.ge.f32.partialorder %v3531, 0.0
        %v3535 = vmul.f32 %v3531, 0.01
        %v3536 = vsel %vm3534, %v3531, %v3535
        %v3537 = vpack.c.bf16 %v3536, %v3536
        %v3538 = vld [vmem:[#allocation10] sm:$0xf]
        %v3539 = vld [vmem:[#allocation10 + $0x4] sm:$0xf]
        %v3540 = vld [vmem:[#allocation10 + $0x8] sm:$0xf]
        %v3541 = vld [vmem:[#allocation10 + $0xc] sm:$0xf]
        %v3542 = vld [vmem:[#allocation10 + $0x10] sm:$0xf]
        %v3543 = vld [vmem:[#allocation10 + $0x14] sm:$0xf]
        %v3544 = vld [vmem:[#allocation10 + $0x18] sm:$0xf]
        %v3545 = vld [vmem:[#allocation10 + $0x1c] sm:$0xf]
        %v3546 = vld [vmem:[#allocation10 + $0x20] sm:$0xf]
        %v3547 = vld [vmem:[#allocation10 + $0x24] sm:$0xf]
        %v3548 = vld [vmem:[#allocation10 + $0x28] sm:$0xf]
        %v3549 = vld [vmem:[#allocation10 + $0x2c] sm:$0xf]
        %v3550 = vld [vmem:[#allocation10 + $0x30] sm:$0xf]
        %v3551 = vld [vmem:[#allocation10 + $0x34] sm:$0xf]
        %v3552 = vld [vmem:[#allocation10 + $0x38] sm:$0xf]
        %v3553 = vld [vmem:[#allocation10 + $0x3c] sm:$0xf]
        %v3554 = vld [vmem:[%s8] sm:$0x1]
        %v3571 = vunpack.c.l.b16 %v3538
        %v3572 = vunpack.c.l.b16 %v3539
        %v3573 = vunpack.c.l.b16 %v3540
        %v3574 = vunpack.c.l.b16 %v3541
        %v3575 = vunpack.c.l.b16 %v3542
        %v3576 = vunpack.c.l.b16 %v3543
        %v3577 = vunpack.c.l.b16 %v3544
        %v3578 = vunpack.c.l.b16 %v3545
        %v3579 = vunpack.c.l.b16 %v3546
        %v3580 = vunpack.c.l.b16 %v3547
        %v3581 = vunpack.c.l.b16 %v3548
        %v3582 = vunpack.c.l.b16 %v3549
        %v3583 = vunpack.c.l.b16 %v3550
        %v3584 = vunpack.c.l.b16 %v3551
        %v3585 = vunpack.c.l.b16 %v3552
        %v3586 = vunpack.c.l.b16 %v3553
        %v3587 = vpack.c.b16 %v3572, %v3571
        %v3588 = vpack.c.b16 %v3574, %v3573
        %v3589 = vpack.c.b16 %v3576, %v3575
        %v3590 = vpack.c.b16 %v3578, %v3577
        %v3591 = vpack.c.b16 %v3580, %v3579
        %v3592 = vpack.c.b16 %v3582, %v3581
        %v3593 = vpack.c.b16 %v3584, %v3583
        %v3594 = vpack.c.b16 %v3586, %v3585
        %3603 = vmatpush.bf16.msra.mxu0 %v3594
        %3604 = vmatpush.bf16.msra.mxu0 %v3593
        %3605 = vmatpush.bf16.msra.mxu0 %v3592
        %3606 = vmatpush.bf16.msra.mxu0 %v3591
        %3607 = vmatpush.bf16.msra.mxu0 %v3590
        %3608 = vmatpush.bf16.msra.mxu0 %v3589
        %3609 = vmatpush.bf16.msra.mxu0 %v3588
        %3610 = vmatpush.bf16.msra.mxu0 %v3587
        %3611 = vmatmul.bf16.gmra.mxu0 %v3537
        %v3612 = vpop.f32.mrf.mxu0
        %v3613 = vadd.f32 %v3554, %v3612
        %v3614 = vpop.f32.mrf.mxu0
        %3615 = vdwg.mxu0
        %3616 = vst [vmem:[%s417] sm:$0x1] %v3613
        %s3617 = sand.u32 %s230, 1
        %s3618 = scalar_lea.sflag [#allocation4], %s3617
        %s3619 = sand.u32 %s230, 1
        %s3620 = scalar_lea.vmem [#allocation11], %s3619
        // Predicated region
        $region77: #{tpu_custom_call.1} parent=55 // pred_check
          %p3621 = pneg %p240
        $region78: #{tpu_custom_call.1} parent=55 // pred_check_branch
          %3623 = sbr.rel (%p3621) target = $region80
        $region79: #{tpu_custom_call.1} parent=55 // pred_region
          %3625 = vsyncadd %s3618, 0
          %s3626 = scalar_lea.hbm %s9, %s28
          %s3628 = sshll.u32 %s3620, 4
          %s3629 = int_to_ptr.vmem [resolvable:$true] %s3628
          %s3630 = sshll.u32 %s3626, 4
          %s3631 = int_to_ptr.hbm [resolvable:$true] %s3630
          %3633 = dma.vmem_to_hbm [thread:$0]  %s3629, 16, %s3631, %s3618
        $region80: #{tpu_custom_call.1} parent=55 // pred_fallthru
          _
      $region56: #{tpu_custom_call.1} parent=5 // pred_fallthru
        _
      %p3634 = scmp.le.s32.totalorder 2, %s23
      // Predicated region
      $region81: #{tpu_custom_call.1} parent=5 // pred_check
        %p3635 = pneg %p3634
      $region82: #{tpu_custom_call.1} parent=5 // pred_check_branch
        %3637 = sbr.rel (%p3635) target = $region84
      $region83: #{tpu_custom_call.1} parent=5 // pred_region
        %s3638 = ssub.s32 %s23, 2
        // Predicated region
        $region85: #{tpu_custom_call.1} parent=83 // pred_check
          %p3639 = pneg %p246
        $region86: #{tpu_custom_call.1} parent=83 // pred_check_branch
          %3641 = sbr.rel (%p3639) target = $region88
        $region87: #{tpu_custom_call.1} parent=83 // pred_region
          %s3642 = sand.u32 %s231, 1
          %s3643 = scalar_lea.sflag [#allocation4], %s3642
          %s3644 = sand.u32 %s231, 1
          %s3645 = scalar_lea.vmem [#allocation11], %s3644
          %3647 = dma.done %s3643, 16
        $region88: #{tpu_custom_call.1} parent=83 // pred_fallthru
          _
      $region84: #{tpu_custom_call.1} parent=5 // pred_fallthru
        _
    $region6: #{tpu_custom_call.1} parent=1 // loop_footer
      %s27 = sadd.s32 1, %s23
    $region7: #{tpu_custom_call.1} parent=1 // loop_footer_branch
      %22 = sbr.rel target = $region3
    $region8: #{tpu_custom_call.1} parent=1 // loop_exit
      _
    %3648 = vsyncpa [#allocation3], 1
    %s3649 = scalar_lea.sflag [#allocation3], 1
    %3650 = vsyncpa %s3649, 1
    %3651 = vsyncpa [#allocation6], 1
    %3652 = vsyncpa [#allocation9], 1
    %3653 = vsyncpa [#allocation4], 1
    %s3654 = scalar_lea.sflag [#allocation4], 1
    %3655 = vsyncpa %s3654, 1

</llo_original>
